<compile_context>
chip_gen: v7x
topology: tpu7x:2x2x1
jax: 0.10.0
libtpu: 0.0.40
codegen_flags: <defaults>
</compile_context>

<pallas_src>
import math
import functools

import numpy as np
import jax
import jax.numpy as jnp
from jax import lax
from jax.experimental import pallas as pl
from jax.experimental.pallas import tpu as pltpu


NEG_INF = -1e30  # large-negative additive mask value (avoids NaN from fully-masked rows)


# ------------------------------ generation-aware budgets ------------------------------

def _round_up(n, m):
    return ((n + m - 1) // m) * m


def _tpu_budgets():
    """VMEM budget + max lane tile per TPU generation (v7x has only 64 MiB VMEM/TC)."""
    vmem_cap = 64 * 1024 * 1024  # conservative default == v7x
    try:
        vmem_cap = int(pltpu.get_tpu_info().vmem_capacity_bytes)
    except Exception:
        pass
    if vmem_cap <= 64 * 1024 * 1024:
        # v7x: leave headroom below the 64 MiB physical VMEM, cap lane tiles at 1024.
        return {"vmem_limit": 48 * 1024 * 1024, "max_tile": 1024}
    # v5e / v6e: 128 MiB physical VMEM -> larger tiles amortize per-step overhead.
    return {"vmem_limit": 100 * 1024 * 1024, "max_tile": 2048}


# ----------------------------------- Pallas kernels -----------------------------------

def _vertice_map_kernel(vin_ref, w_ref, o_ref, acc_ref):
    """x0 = vin @ vm_w, reduction over (padded) V3 as grid axis 0 ("arbitrary")."""
    @pl.when(pl.program_id(0) == 0)
    def _():
        acc_ref[...] = jnp.zeros_like(acc_ref)

    acc_ref[...] += jnp.dot(vin_ref[...], w_ref[...],
                            preferred_element_type=jnp.float32)

    @pl.when(pl.program_id(0) == pl.num_programs(0) - 1)
    def _():
        o_ref[...] = acc_ref[...]


def _fused_decoder_kernel(
    # front-end
    one_hot_ref, obj_w_ref,
    audio_ref, af_w_ref, af_b_ref,
    x0_ref, vm_b_ref, pe_ref,
    # self-attention (stacked QKV)
    sa_wqkv_ref, sa_bqkv_ref, sa_wo_ref, sa_bo_ref,
    # cross-attention (stacked KV)
    ca_wq_ref, ca_bq_ref, ca_wkv_ref, ca_bkv_ref, ca_wo_ref, ca_bo_ref,
    # feed-forward
    ff_w1_ref, ff_b1_ref, ff_w2_ref, ff_b2_ref,
    # layer norms
    ln1_g_ref, ln1_b_ref, ln2_g_ref, ln2_b_ref, ln3_g_ref, ln3_b_ref,
    # output
    o_ref,
    *, n_head, period, slopes, eps):
    f32 = jnp.float32
    bf16 = jnp.bfloat16

    T = x0_ref.shape[0]
    S = audio_ref.shape[0]
    D = x0_ref.shape[1]
    H = n_head
    dh = D // H
    scale = 1.0 / math.sqrt(dh)

    def mm(a, w):
        # bf16 MXU matmul with f32 accumulation
        return jnp.dot(a.astype(bf16), w.astype(bf16), preferred_element_type=f32)

    def layer_norm(x, g_ref, b_ref):
        mu = jnp.mean(x, axis=-1, keepdims=True)
        var = jnp.mean(jnp.square(x - mu), axis=-1, keepdims=True)
        return (x - mu) * lax.rsqrt(var + eps) * g_ref[...] + b_ref[...]

    def softmax(s):
        m = jnp.max(s, axis=-1, keepdims=True)
        e = jnp.exp(s - m)
        # denominator divide -> EUP (approx reciprocal); only a VPU multiply remains
        return e * pl.reciprocal(jnp.sum(e, axis=-1, keepdims=True), approx=True)

    def mha(q, k, v, wo, bo_ref, bias_fn):
        # q is pre-scaled by 1/sqrt(dh).  One K transpose per attention (not per head),
        # and the head concat is replaced by per-head accumulation into the output proj
        # (avoids non-128-aligned lane relayouts from concatenating dh-wide heads).
        kt = k.astype(bf16).T                                         # (D, Tk)
        vb = v.astype(bf16)
        out = jnp.zeros((q.shape[0], D), f32)
        for h in range(H):
            sl = slice(h * dh, (h + 1) * dh)
            s = jnp.dot(q[:, sl].astype(bf16), kt[sl, :],
                        preferred_element_type=f32)
            pr = softmax(s + bias_fn(h))
            head = jnp.dot(pr.astype(bf16), vb[:, sl], preferred_element_type=f32)
            out = out + jnp.dot(head.astype(bf16), wo[sl, :],
                                preferred_element_type=f32)
        return out + bo_ref[...]

    # ---- front-end: style embedding, audio_feature_map, vm bias + style + periodic PE
    style = mm(one_hot_ref[...], obj_w_ref[...])                      # (1, D)
    mem = mm(audio_ref[...], af_w_ref[...]) + af_b_ref[...]           # (S, D)
    x = x0_ref[...] + vm_b_ref[...] + style + pe_ref[...]             # (T, D)

    # ---- attention masks generated in-kernel from iotas (no HBM mask tensors)
    ti = lax.broadcasted_iota(jnp.int32, (T, T), 0)
    tj = lax.broadcasted_iota(jnp.int32, (T, T), 1)
    # causal additive mask hoisted out of the head loop
    causal_add = jnp.where(tj <= ti, 0.0, NEG_INF).astype(f32)
    # alibi[i, j] = -floor((i - j) / period); +0.5 keeps the f32 division away from
    # floor boundaries so the result is exact for all i, j < max_seq_len (~600).
    diff = (ti - tj).astype(f32)
    alibi = -jnp.floor((diff + 0.5) * (1.0 / float(period)))

    ci = lax.broadcasted_iota(jnp.int32, (T, S), 0)
    cj = lax.broadcasted_iota(jnp.int32, (T, S), 1)
    cross_add = jnp.where(ci == cj, 0.0, NEG_INF).astype(f32)         # vocaset enc_dec_mask

    # ---- self-attention (stacked QKV matmul; q pre-scaled once)
    qkv = mm(x, sa_wqkv_ref[...]) + sa_bqkv_ref[...]                  # (T, 3D)
    q = qkv[:, 0:D] * scale
    sa = mha(q, qkv[:, D:2 * D], qkv[:, 2 * D:3 * D],
             sa_wo_ref[...], sa_bo_ref,
             lambda h: float(slopes[h]) * alibi + causal_add)
    x = layer_norm(x + sa, ln1_g_ref, ln1_b_ref)

    # ---- cross-attention against the mapped audio features (stacked KV matmul)
    qc = (mm(x, ca_wq_ref[...]) + ca_bq_ref[...]) * scale             # (T, D)
    kv = mm(mem, ca_wkv_ref[...]) + ca_bkv_ref[...]                   # (S, 2D)
    ca = mha(qc, kv[:, 0:D], kv[:, D:2 * D],
             ca_wo_ref[...], ca_bo_ref,
             lambda h: cross_add)
    x = layer_norm(x + ca, ln2_g_ref, ln2_b_ref)

    # ---- feed-forward (ReLU, dim_feedforward = 2*D)
    hdn = jnp.maximum(mm(x, ff_w1_ref[...]) + ff_b1_ref[...], 0.0)
    ff = mm(hdn, ff_w2_ref[...]) + ff_b2_ref[...]
    x = layer_norm(x + ff, ln3_g_ref, ln3_b_ref)

    # emit bf16 so kernel 2 does not re-cast it per grid step
    o_ref[...] = x.astype(o_ref.dtype)


def _vertice_map_r_sse_kernel(x_ref, w_ref, b_ref, tmpl_ref, vert_ref, o_ref):
    # y = x @ vr_w + vr_b + template ; output = per-column partial sum of squared error.
    # The (T, V3) prediction is never written to HBM; padded columns are exact zeros in
    # vr_w/vr_b/template/vertice so they contribute 0 to the SSE.
    y = jnp.dot(x_ref[...], w_ref[...], preferred_element_type=jnp.float32)
    y = y + b_ref[...] + tmpl_ref[...]
    d = y - vert_ref[...]
    o_ref[...] = jnp.sum(d * d, axis=0, keepdims=True)


# --------------------------- parameter / buffer setup (glue) ---------------------------

def get_alibi_slopes(n):
    def p2(n):
        start = 2 ** (-2 ** -(math.log2(n) - 3))
        return [start * start ** i for i in range(n)]
    if math.log2(n).is_integer():
        return p2(n)
    c = 2 ** math.floor(math.log2(n))
    return p2(c) + get_alibi_slopes(2 * c)[0::2][: n - c]


def build_ppe_np(d_model, period, max_seq_len=600):
    pe = np.zeros((period, d_model), dtype=np.float32)
    position = np.arange(0, period, dtype=np.float32)[:, None]
    div_term = np.exp(np.arange(0, d_model, 2, dtype=np.float32)
                      * (-math.log(10000.0) / d_model))
    pe[:, 0::2] = np.sin(position * div_term)
    pe[:, 1::2] = np.cos(position * div_term)
    pe = pe[None]
    repeat_num = max_seq_len // period + 1
    return np.tile(pe, (1, repeat_num, 1))  # (1, (L//p+1)*p, d_model)


def init_params(key, *, D, H, V3, n_subj, period, audio_dim):
    ks = jax.random.split(key, 16)

    def w(k, i, o):
        return jax.random.normal(k, (i, o), jnp.float32) * 0.02

    z = lambda n: jnp.zeros((n,), jnp.float32)
    p = {"d_model": D, "n_head": H, "period": period}
    p["obj_w"] = w(ks[0], n_subj, D)                       # obj_vector (no bias)
    p["af_w"], p["af_b"] = w(ks[1], audio_dim, D), z(D)    # audio_feature_map
    p["vm_w"], p["vm_b"] = w(ks[2], V3, D), z(D)           # vertice_map
    # self-attention (q/k/v projections split out of PyTorch's in_proj_weight)
    p["sa_wq"], p["sa_bq"] = w(ks[3], D, D), z(D)
    p["sa_wk"], p["sa_bk"] = w(ks[4], D, D), z(D)
    p["sa_wv"], p["sa_bv"] = w(ks[5], D, D), z(D)
    p["sa_wo"], p["sa_bo"] = w(ks[6], D, D), z(D)
    # cross-attention
    p["ca_wq"], p["ca_bq"] = w(ks[7], D, D), z(D)
    p["ca_wk"], p["ca_bk"] = w(ks[8], D, D), z(D)
    p["ca_wv"], p["ca_bv"] = w(ks[9], D, D), z(D)
    p["ca_wo"], p["ca_bo"] = w(ks[10], D, D), z(D)
    # feed-forward (dim_feedforward = 2*D, ReLU)
    p["ff_w1"], p["ff_b1"] = w(ks[11], D, 2 * D), z(2 * D)
    p["ff_w2"], p["ff_b2"] = w(ks[12], 2 * D, D), z(D)
    # layer norms
    p["ln1_g"], p["ln1_b"] = jnp.ones((D,), jnp.float32), z(D)
    p["ln2_g"], p["ln2_b"] = jnp.ones((D,), jnp.float32), z(D)
    p["ln3_g"], p["ln3_b"] = jnp.ones((D,), jnp.float32), z(D)
    # vertice_map_r: nn.init.constant_(weight, 0); constant_(bias, 0)
    p["vr_w"], p["vr_b"] = jnp.zeros((D, V3), jnp.float32), z(V3)
    # buffers
    p["pe"] = jnp.asarray(build_ppe_np(D, period))
    return p


def prepare_params(p, *, max_tile):
    """One-time weight packing hoisted out of the per-call path: bf16 casts, stacked
    QKV/KV weights, and zero-padding of the V3 dimension to a lane-tile multiple."""
    f32, bf16 = jnp.float32, jnp.bfloat16
    D = p["d_model"]
    V3 = p["vr_w"].shape[1]
    row = lambda a: jnp.asarray(a, f32).reshape(1, -1)

    # V3 is NOT a multiple of 128 in real vocaset (3*5023); pad up to a tile multiple.
    tn = min(max_tile, _round_up(V3, 128))
    V3p = _round_up(V3, tn)
    padc = lambda a: jnp.pad(a, ((0, 0), (0, V3p - V3)))   # pad columns (last dim)
    padr = lambda a: jnp.pad(a, ((0, V3p - V3), (0, 0)))   # pad rows (first dim)

    prep = {
        "obj_w": p["obj_w"].astype(bf16),
        "af_w": p["af_w"].astype(bf16), "af_b": row(p["af_b"]),
        "vm_w": padr(p["vm_w"]).astype(bf16),               # (V3p, D), padded rows = 0
        "vm_b": row(p["vm_b"]),
        "pe": p["pe"][0].astype(f32),                        # (L, D)
        "sa_wqkv": jnp.concatenate([p["sa_wq"], p["sa_wk"], p["sa_wv"]],
                                   axis=1).astype(bf16),
        "sa_bqkv": row(jnp.concatenate([p["sa_bq"], p["sa_bk"], p["sa_bv"]])),
        "sa_wo": p["sa_wo"].astype(bf16), "sa_bo": row(p["sa_bo"]),
        "ca_wq": p["ca_wq"].astype(bf16), "ca_bq": row(p["ca_bq"]),
        "ca_wkv": jnp.concatenate([p["ca_wk"], p["ca_wv"]], axis=1).astype(bf16),
        "ca_bkv": row(jnp.concatenate([p["ca_bk"], p["ca_bv"]])),
        "ca_wo": p["ca_wo"].astype(bf16), "ca_bo": row(p["ca_bo"]),
        "ff_w1": p["ff_w1"].astype(bf16), "ff_b1": row(p["ff_b1"]),
        "ff_w2": p["ff_w2"].astype(bf16), "ff_b2": row(p["ff_b2"]),
        "ln1_g": row(p["ln1_g"]), "ln1_b": row(p["ln1_b"]),
        "ln2_g": row(p["ln2_g"]), "ln2_b": row(p["ln2_b"]),
        "ln3_g": row(p["ln3_g"]), "ln3_b": row(p["ln3_b"]),
        "vr_w": padc(p["vr_w"]).astype(bf16),                # (D, V3p), padded cols = 0
        "vr_b": padc(row(p["vr_b"])),                        # (1, V3p)
    }
    cfg = {"D": D, "H": p["n_head"], "period": p["period"],
           "V3": V3, "V3p": V3p, "tn": tn,
           "slopes": tuple(float(s) for s in get_alibi_slopes(p["n_head"]))}
    return prep, cfg


# --------------------------------------- forward ---------------------------------------

def _forward_impl(prep, audio_feats, template, vertice, one_hot, *, cfg, budgets):
    """Teacher-forcing forward; returns scalar loss = mean MSE (negative_penalty == 0)."""
    f32, bf16 = jnp.float32, jnp.bfloat16
    B, T, V3 = vertice.shape
    assert B == 1, "biased_mask shape (n_head,T,T) implies batch==1, as in the original"
    assert V3 == cfg["V3"]
    S = audio_feats.shape[1]
    assert T <= S, "vocaset enc_dec_mask needs a memory frame per target frame (T <= S)"
    D, H, period = cfg["D"], cfg["H"], cfg["period"]
    V3p, tn = cfg["V3p"], cfg["tn"]
    vmem_limit = budgets["vmem_limit"]

    template_u = template[:, None, :]                                           # (B,1,V3)
    # teacher-forcing decoder input (cheap concat/subtract; no matmul -> plain XLA)
    v_in = jnp.concatenate([template_u, vertice[:, :-1]], axis=1) - template_u  # (B,T,V3)
    v_in = jnp.pad(v_in[0], ((0, 0), (0, V3p - V3))).astype(bf16)               # (T,V3p)
    vert_gt = jnp.pad(vertice[0], ((0, 0), (0, V3p - V3))).astype(f32)          # (T,V3p)
    tmpl_p = jnp.pad(jnp.asarray(template, f32), ((0, 0), (0, V3p - V3)))       # (1,V3p)

    # ---- Kernel 0: vertice_map matmul, V3 tiled + pipelined as a reduction axis ----
    n_k_tiles = V3p // tn
    x0 = pl.pallas_call(
        _vertice_map_kernel,
        out_shape=jax.ShapeDtypeStruct((T, D), f32),
        grid=(n_k_tiles,),
        in_specs=[pl.BlockSpec((T, tn), lambda k: (0, k)),      # vin tile (bf16)
                  pl.BlockSpec((tn, D), lambda k: (k, 0))],     # vm_w tile (bf16)
        out_specs=pl.BlockSpec((T, D), lambda k: (0, 0)),
        scratch_shapes=[pltpu.VMEM((T, D), f32)],
        compiler_params=pltpu.CompilerParams(
            dimension_semantics=("arbitrary",),
            vmem_limit_bytes=vmem_limit),
    )(v_in, prep["vm_w"])

    # ---- Kernel 1: fused front-end + full TransformerDecoderLayer (VMEM resident) ----
    inputs = [
        jnp.asarray(one_hot, f32),                 # (1, n_subj)
        prep["obj_w"],
        audio_feats[0].astype(bf16),               # (S, 768) wav2vec last_hidden_state
        prep["af_w"], prep["af_b"],
        x0,                                        # (T, D) hoisted vertice_map result
        prep["vm_b"],
        prep["pe"][:T, :],                         # (T, D)
        prep["sa_wqkv"], prep["sa_bqkv"], prep["sa_wo"], prep["sa_bo"],
        prep["ca_wq"], prep["ca_bq"], prep["ca_wkv"], prep["ca_bkv"],
        prep["ca_wo"], prep["ca_bo"],
        prep["ff_w1"], prep["ff_b1"], prep["ff_w2"], prep["ff_b2"],
        prep["ln1_g"], prep["ln1_b"],
        prep["ln2_g"], prep["ln2_b"],
        prep["ln3_g"], prep["ln3_b"],
    ]
    in_specs = [pl.BlockSpec(a.shape, lambda i, nd=a.ndim: (0,) * nd) for a in inputs]

    x_dec = pl.pallas_call(
        functools.partial(_fused_decoder_kernel, n_head=H, period=period,
                          slopes=cfg["slopes"], eps=1e-5),
        out_shape=jax.ShapeDtypeStruct((T, D), bf16),
        grid=(1,),
        in_specs=in_specs,
        out_specs=pl.BlockSpec((T, D), lambda i: (0, 0)),
        compiler_params=pltpu.CompilerParams(
            dimension_semantics=("arbitrary",),
            vmem_limit_bytes=vmem_limit),
    )(*inputs)

    # ---- Kernel 2: vertice_map_r + template residual + MSE, lane-tiled over padded V3 ----
    n_tiles = V3p // tn
    col_sse = pl.pallas_call(
        _vertice_map_r_sse_kernel,
        out_shape=jax.ShapeDtypeStruct((1, V3p), f32),
        grid=(n_tiles,),
        in_specs=[
            pl.BlockSpec((T, D), lambda i: (0, 0)),      # decoder output (bf16, resident)
            pl.BlockSpec((D, tn), lambda i: (0, i)),     # vr_w tile
            pl.BlockSpec((1, tn), lambda i: (0, i)),     # vr_b tile
            pl.BlockSpec((1, tn), lambda i: (0, i)),     # template tile
            pl.BlockSpec((T, tn), lambda i: (0, i)),     # ground-truth vertice tile (f32)
        ],
        out_specs=pl.BlockSpec((1, tn), lambda i: (0, i)),
        compiler_params=pltpu.CompilerParams(
            dimension_semantics=("parallel",),
            vmem_limit_bytes=vmem_limit),
    )(x_dec, prep["vr_w"], prep["vr_b"], tmpl_p, vert_gt)

    # criterion = element-wise MSE, then mean; negative_penalty = 0 (base_models is None)
    loss = jnp.sum(col_sse) / float(B * T * V3)
    return loss


def make_faceformer_forward(params):
    """Returns a jitted forward(audio_feats, template, vertice, one_hot) -> scalar loss,
    with all one-time weight packing done here (not per call)."""
    budgets = _tpu_budgets()
    prep, cfg = prepare_params(params, max_tile=budgets["max_tile"])
    fwd = jax.jit(functools.partial(_forward_impl, cfg=cfg, budgets=budgets))

    def forward(audio_feats, template, vertice, one_hot):
        return fwd(prep, audio_feats, template, vertice, one_hot)

    return forward


# ----------------------------------------- main -----------------------------------------

if __name__ == "__main__":
    B, T, S = 1, 8, 8
    D, H, V3 = 32, 4, 384
    n_subj, period, audio_dim = 3, 4, 768

    key = jax.random.PRNGKey(0)
    k_aud, k_tmpl, k_vert, k_par = jax.random.split(key, 4)

    params = init_params(k_par, D=D, H=H, V3=V3, n_subj=n_subj, period=period,
                         audio_dim=audio_dim)

    # wav2vec2 last_hidden_state stand-in (see TODO above)
    audio_feats = jax.random.normal(k_aud, (B, S, audio_dim), jnp.float32)
    template = jax.random.normal(k_tmpl, (B, V3), jnp.float32) * 0.1
    vertice = jax.random.normal(k_vert, (B, T, V3), jnp.float32) * 0.1
    one_hot = jnp.zeros((B, n_subj), jnp.float32).at[:, 0].set(1.0)

    forward = make_faceformer_forward(params)
    loss = forward(audio_feats, template, vertice, one_hot)
    loss = jax.block_until_ready(loss)
    assert np.isfinite(float(loss)), f"loss is not finite: {loss}"
    print("KERNEL_OK")
</pallas_src>

<mosaic_0001>
module attributes {stable_mosaic.version = 11 : i64} {
  func.func @_vertice_map_kernel(%arg0: i32, %arg1: memref<8x384xbf16, #tpu.memory_space<vmem>>, %arg2: memref<384x32xbf16, #tpu.memory_space<vmem>>, %arg3: memref<8x32xf32, #tpu.memory_space<vmem>>, %arg4: memref<8x32xf32, #tpu.memory_space<vmem>>) attributes {dimension_semantics = [#tpu.dimension_semantics<arbitrary>], iteration_bounds = array<i64: 1>, scalar_prefetch = 0 : i64, scratch_operands = 1 : i64, tpu.core_type = #tpu.core_type<tc>, window_params = [{transform_indices = @transform_0, window_bounds = array<i64: 8, 384>}, {transform_indices = @transform_1, window_bounds = array<i64: 384, 32>}, {pipeline_mode = #tpu.pipeline_mode<synchronous>, transform_indices = @transform_2, window_bounds = array<i64: 8, 32>}]} {
    %c0_i32 = arith.constant 0 : i32
    %0 = arith.cmpi eq, %arg0, %c0_i32 : i32
    %1 = arith.extui %0 : i1 to i32
    %c0_i32_0 = arith.constant 0 : i32
    %2 = arith.cmpi ne, %1, %c0_i32_0 : i32
    scf.if %2 {
      %cst_10 = arith.constant 0.000000e+00 : f32
      %12 = vector.broadcast %cst_10 : f32 to vector<8x32xf32>
      %c0_11 = arith.constant 0 : index
      %c0_12 = arith.constant 0 : index
      %13 = vector.load %arg4[%c0_11, %c0_12] : memref<8x32xf32, #tpu.memory_space<vmem>>, vector<8x32xf32>
      tpu.vector_store %arg4[%c0_11, %c0_12], %12 {strides = array<i32>} : memref<8x32xf32, #tpu.memory_space<vmem>>, vector<8x32xf32>,
    } else {
    }
    %c0 = arith.constant 0 : index
    %c0_1 = arith.constant 0 : index
    %3 = vector.load %arg4[%c0, %c0_1] : memref<8x32xf32, #tpu.memory_space<vmem>>, vector<8x32xf32>
    %c0_2 = arith.constant 0 : index
    %c0_3 = arith.constant 0 : index
    %4 = vector.load %arg1[%c0_2, %c0_3] : memref<8x384xbf16, #tpu.memory_space<vmem>>, vector<8x384xbf16>
    %c0_4 = arith.constant 0 : index
    %c0_5 = arith.constant 0 : index
    %5 = vector.load %arg2[%c0_4, %c0_5] : memref<384x32xbf16, #tpu.memory_space<vmem>>, vector<384x32xbf16>
    %cst = arith.constant dense<0.000000e+00> : vector<8x32xf32>
    %6 = tpu.matmul %4, %5, %cst {dimension_numbers = #tpu.dot_dimension_numbers<[1], [0], [0], [1], [0, 0, 1, 1], [], []>} : vector<8x384xbf16>, vector<384x32xbf16>, vector<8x32xf32> -> vector<8x32xf32>
    %7 = arith.addf %3, %6 : vector<8x32xf32>
    %c0_6 = arith.constant 0 : index
    %c0_7 = arith.constant 0 : index
    %8 = vector.load %arg4[%c0_6, %c0_7] : memref<8x32xf32, #tpu.memory_space<vmem>>, vector<8x32xf32>
    tpu.vector_store %arg4[%c0_6, %c0_7], %7 {strides = array<i32>} : memref<8x32xf32, #tpu.memory_space<vmem>>, vector<8x32xf32>,
    %c0_i32_8 = arith.constant 0 : i32
    %9 = arith.cmpi eq, %arg0, %c0_i32_8 : i32
    %10 = arith.extui %9 : i1 to i32
    %c0_i32_9 = arith.constant 0 : i32
    %11 = arith.cmpi ne, %10, %c0_i32_9 : i32
    scf.if %11 {
      %c0_10 = arith.constant 0 : index
      %c0_11 = arith.constant 0 : index
      %12 = vector.load %arg4[%c0_10, %c0_11] : memref<8x32xf32, #tpu.memory_space<vmem>>, vector<8x32xf32>
      %c0_12 = arith.constant 0 : index
      %c0_13 = arith.constant 0 : index
      %13 = vector.load %arg3[%c0_12, %c0_13] : memref<8x32xf32, #tpu.memory_space<vmem>>, vector<8x32xf32>
      tpu.vector_store %arg3[%c0_12, %c0_13], %12 {strides = array<i32>} : memref<8x32xf32, #tpu.memory_space<vmem>>, vector<8x32xf32>,
    } else {
    }
    return
  }
  func.func @transform_0(%arg0: i32) -> (i32, i32) {
    %c0_i32 = arith.constant 0 : i32
    %c0_i32_0 = arith.constant 0 : i32
    return %c0_i32, %arg0 : i32, i32
  }
  func.func @transform_1(%arg0: i32) -> (i32, i32) {
    %c0_i32 = arith.constant 0 : i32
    %c0_i32_0 = arith.constant 0 : i32
    return %arg0, %c0_i32 : i32, i32
  }
  func.func @transform_2(%arg0: i32) -> (i32, i32) {
    %c0_i32 = arith.constant 0 : i32
    %c0_i32_0 = arith.constant 0 : i32
    %c0_i32_1 = arith.constant 0 : i32
    return %c0_i32, %c0_i32_0 : i32, i32
  }
}

module attributes {stable_mosaic.version = 11 : i64} {
  func.func @_vertice_map_r_sse_kernel(%arg0: i32, %arg1: memref<8x32xbf16, #tpu.memory_space<vmem>>, %arg2: memref<32x384xbf16, #tpu.memory_space<vmem>>, %arg3: memref<1x384xf32, #tpu.memory_space<vmem>>, %arg4: memref<1x384xf32, #tpu.memory_space<vmem>>, %arg5: memref<8x384xf32, #tpu.memory_space<vmem>>, %arg6: memref<1x384xf32, #tpu.memory_space<vmem>>) attributes {dimension_semantics = [#tpu.dimension_semantics<parallel>], iteration_bounds = array<i64: 1>, scalar_prefetch = 0 : i64, scratch_operands = 0 : i64, tpu.core_type = #tpu.core_type<tc>, window_params = [{pipeline_mode = #tpu.pipeline_mode<synchronous>, transform_indices = @transform_0, window_bounds = array<i64: 8, 32>}, {transform_indices = @transform_1, window_bounds = array<i64: 32, 384>}, {transform_indices = @transform_2, window_bounds = array<i64: 1, 384>}, {transform_indices = @transform_3, window_bounds = array<i64: 1, 384>}, {transform_indices = @transform_4, window_bounds = array<i64: 8, 384>}, {transform_indices = @transform_5, window_bounds = array<i64: 1, 384>}]} {
    %c0 = arith.constant 0 : index
    %c0_0 = arith.constant 0 : index
    %0 = vector.load %arg1[%c0, %c0_0] : memref<8x32xbf16, #tpu.memory_space<vmem>>, vector<8x32xbf16>
    %c0_1 = arith.constant 0 : index
    %c0_2 = arith.constant 0 : index
    %1 = vector.load %arg2[%c0_1, %c0_2] : memref<32x384xbf16, #tpu.memory_space<vmem>>, vector<32x384xbf16>
    %cst = arith.constant dense<0.000000e+00> : vector<8x384xf32>
    %2 = tpu.matmul %0, %1, %cst {dimension_numbers = #tpu.dot_dimension_numbers<[1], [0], [0], [1], [0, 0, 1, 1], [], []>} : vector<8x32xbf16>, vector<32x384xbf16>, vector<8x384xf32> -> vector<8x384xf32>
    %c0_3 = arith.constant 0 : index
    %c0_4 = arith.constant 0 : index
    %3 = vector.load %arg3[%c0_3, %c0_4] : memref<1x384xf32, #tpu.memory_space<vmem>>, vector<1x384xf32>
    %4 = vector.broadcast %3 : vector<1x384xf32> to vector<8x384xf32>
    %5 = arith.addf %2, %4 : vector<8x384xf32>
    %c0_5 = arith.constant 0 : index
    %c0_6 = arith.constant 0 : index
    %6 = vector.load %arg4[%c0_5, %c0_6] : memref<1x384xf32, #tpu.memory_space<vmem>>, vector<1x384xf32>
    %7 = vector.broadcast %6 : vector<1x384xf32> to vector<8x384xf32>
    %8 = arith.addf %5, %7 : vector<8x384xf32>
    %c0_7 = arith.constant 0 : index
    %c0_8 = arith.constant 0 : index
    %9 = vector.load %arg5[%c0_7, %c0_8] : memref<8x384xf32, #tpu.memory_space<vmem>>, vector<8x384xf32>
    %10 = arith.subf %8, %9 : vector<8x384xf32>
    %11 = arith.mulf %10, %10 : vector<8x384xf32>
    %cst_9 = arith.constant dense<0.000000e+00> : vector<384xf32>
    %12 = vector.multi_reduction <add>, %11, %cst_9 [0] : vector<8x384xf32> to vector<384xf32>
    %13 = vector.shape_cast %12 : vector<384xf32> to vector<1x384xf32>
    %c0_10 = arith.constant 0 : index
    %c0_11 = arith.constant 0 : index
    %14 = vector.load %arg6[%c0_10, %c0_11] : memref<1x384xf32, #tpu.memory_space<vmem>>, vector<1x384xf32>
    tpu.vector_store %arg6[%c0_10, %c0_11], %13 {strides = array<i32>} : memref<1x384xf32, #tpu.memory_space<vmem>>, vector<1x384xf32>,
    return
  }
  func.func @transform_0(%arg0: i32) -> (i32, i32) {
    %c0_i32 = arith.constant 0 : i32
    %c0_i32_0 = arith.constant 0 : i32
    %c0_i32_1 = arith.constant 0 : i32
    return %c0_i32, %c0_i32_0 : i32, i32
  }
  func.func @transform_1(%arg0: i32) -> (i32, i32) {
    %c0_i32 = arith.constant 0 : i32
    %c0_i32_0 = arith.constant 0 : i32
    return %c0_i32, %arg0 : i32, i32
  }
  func.func @transform_2(%arg0: i32) -> (i32, i32) {
    %c0_i32 = arith.constant 0 : i32
    %c0_i32_0 = arith.constant 0 : i32
    return %c0_i32, %arg0 : i32, i32
  }
  func.func @transform_3(%arg0: i32) -> (i32, i32) {
    %c0_i32 = arith.constant 0 : i32
    %c0_i32_0 = arith.constant 0 : i32
    return %c0_i32, %arg0 : i32, i32
  }
  func.func @transform_4(%arg0: i32) -> (i32, i32) {
    %c0_i32 = arith.constant 0 : i32
    %c0_i32_0 = arith.constant 0 : i32
    return %c0_i32, %arg0 : i32, i32
  }
  func.func @transform_5(%arg0: i32) -> (i32, i32) {
    %c0_i32 = arith.constant 0 : i32
    %c0_i32_0 = arith.constant 0 : i32
    return %c0_i32, %arg0 : i32, i32
  }
}

module attributes {stable_mosaic.version = 11 : i64} {
  func.func @_fused_decoder_kernel(%arg0: i32, %arg1: memref<1x3xf32, #tpu.memory_space<vmem>>, %arg2: memref<3x32xbf16, #tpu.memory_space<vmem>>, %arg3: memref<8x768xbf16, #tpu.memory_space<vmem>>, %arg4: memref<768x32xbf16, #tpu.memory_space<vmem>>, %arg5: memref<1x32xf32, #tpu.memory_space<vmem>>, %arg6: memref<8x32xf32, #tpu.memory_space<vmem>>, %arg7: memref<1x32xf32, #tpu.memory_space<vmem>>, %arg8: memref<8x32xf32, #tpu.memory_space<vmem>>, %arg9: memref<32x96xbf16, #tpu.memory_space<vmem>>, %arg10: memref<1x96xf32, #tpu.memory_space<vmem>>, %arg11: memref<32x32xbf16, #tpu.memory_space<vmem>>, %arg12: memref<1x32xf32, #tpu.memory_space<vmem>>, %arg13: memref<32x32xbf16, #tpu.memory_space<vmem>>, %arg14: memref<1x32xf32, #tpu.memory_space<vmem>>, %arg15: memref<32x64xbf16, #tpu.memory_space<vmem>>, %arg16: memref<1x64xf32, #tpu.memory_space<vmem>>, %arg17: memref<32x32xbf16, #tpu.memory_space<vmem>>, %arg18: memref<1x32xf32, #tpu.memory_space<vmem>>, %arg19: memref<32x64xbf16, #tpu.memory_space<vmem>>, %arg20: memref<1x64xf32, #tpu.memory_space<vmem>>, %arg21: memref<64x32xbf16, #tpu.memory_space<vmem>>, %arg22: memref<1x32xf32, #tpu.memory_space<vmem>>, %arg23: memref<1x32xf32, #tpu.memory_space<vmem>>, %arg24: memref<1x32xf32, #tpu.memory_space<vmem>>, %arg25: memref<1x32xf32, #tpu.memory_space<vmem>>, %arg26: memref<1x32xf32, #tpu.memory_space<vmem>>, %arg27: memref<1x32xf32, #tpu.memory_space<vmem>>, %arg28: memref<1x32xf32, #tpu.memory_space<vmem>>, %arg29: memref<8x32xbf16, #tpu.memory_space<vmem>>) attributes {dimension_semantics = [#tpu.dimension_semantics<arbitrary>], iteration_bounds = array<i64: 1>, scalar_prefetch = 0 : i64, scratch_operands = 0 : i64, tpu.core_type = #tpu.core_type<tc>, window_params = [{pipeline_mode = #tpu.pipeline_mode<synchronous>, transform_indices = @transform_0, window_bounds = array<i64: 1, 3>}, {pipeline_mode = #tpu.pipeline_mode<synchronous>, transform_indices = @transform_1, window_bounds = array<i64: 3, 32>}, {pipeline_mode = #tpu.pipeline_mode<synchronous>, transform_indices = @transform_2, window_bounds = array<i64: 8, 768>}, {pipeline_mode = #tpu.pipeline_mode<synchronous>, transform_indices = @transform_3, window_bounds = array<i64: 768, 32>}, {pipeline_mode = #tpu.pipeline_mode<synchronous>, transform_indices = @transform_4, window_bounds = array<i64: 1, 32>}, {pipeline_mode = #tpu.pipeline_mode<synchronous>, transform_indices = @transform_5, window_bounds = array<i64: 8, 32>}, {pipeline_mode = #tpu.pipeline_mode<synchronous>, transform_indices = @transform_6, window_bounds = array<i64: 1, 32>}, {pipeline_mode = #tpu.pipeline_mode<synchronous>, transform_indices = @transform_7, window_bounds = array<i64: 8, 32>}, {pipeline_mode = #tpu.pipeline_mode<synchronous>, transform_indices = @transform_8, window_bounds = array<i64: 32, 96>}, {pipeline_mode = #tpu.pipeline_mode<synchronous>, transform_indices = @transform_9, window_bounds = array<i64: 1, 96>}, {pipeline_mode = #tpu.pipeline_mode<synchronous>, transform_indices = @transform_10, window_bounds = array<i64: 32, 32>}, {pipeline_mode = #tpu.pipeline_mode<synchronous>, transform_indices = @transform_11, window_bounds = array<i64: 1, 32>}, {pipeline_mode = #tpu.pipeline_mode<synchronous>, transform_indices = @transform_12, window_bounds = array<i64: 32, 32>}, {pipeline_mode = #tpu.pipeline_mode<synchronous>, transform_indices = @transform_13, window_bounds = array<i64: 1, 32>}, {pipeline_mode = #tpu.pipeline_mode<synchronous>, transform_indices = @transform_14, window_bounds = array<i64: 32, 64>}, {pipeline_mode = #tpu.pipeline_mode<synchronous>, transform_indices = @transform_15, window_bounds = array<i64: 1, 64>}, {pipeline_mode = #tpu.pipeline_mode<synchronous>, transform_indices = @transform_16, window_bounds = array<i64: 32, 32>}, {pipeline_mode = #tpu.pipeline_mode<synchronous>, transform_indices = @transform_17, window_bounds = array<i64: 1, 32>}, {pipeline_mode = #tpu.pipeline_mode<synchronous>, transform_indices = @transform_18, window_bounds = array<i64: 32, 64>}, {pipeline_mode = #tpu.pipeline_mode<synchronous>, transform_indices = @transform_19, window_bounds = array<i64: 1, 64>}, {pipeline_mode = #tpu.pipeline_mode<synchronous>, transform_indices = @transform_20, window_bounds = array<i64: 64, 32>}, {pipeline_mode = #tpu.pipeline_mode<synchronous>, transform_indices = @transform_21, window_bounds = array<i64: 1, 32>}, {pipeline_mode = #tpu.pipeline_mode<synchronous>, transform_indices = @transform_22, window_bounds = array<i64: 1, 32>}, {pipeline_mode = #tpu.pipeline_mode<synchronous>, transform_indices = @transform_23, window_bounds = array<i64: 1, 32>}, {pipeline_mode = #tpu.pipeline_mode<synchronous>, transform_indices = @transform_24, window_bounds = array<i64: 1, 32>}, {pipeline_mode = #tpu.pipeline_mode<synchronous>, transform_indices = @transform_25, window_bounds = array<i64: 1, 32>}, {pipeline_mode = #tpu.pipeline_mode<synchronous>, transform_indices = @transform_26, window_bounds = array<i64: 1, 32>}, {pipeline_mode = #tpu.pipeline_mode<synchronous>, transform_indices = @transform_27, window_bounds = array<i64: 1, 32>}, {pipeline_mode = #tpu.pipeline_mode<synchronous>, transform_indices = @transform_28, window_bounds = array<i64: 8, 32>}]} {
    %c0 = arith.constant 0 : index
    %c0_0 = arith.constant 0 : index
    %0 = vector.load %arg1[%c0, %c0_0] : memref<1x3xf32, #tpu.memory_space<vmem>>, vector<1x3xf32>
    %c0_1 = arith.constant 0 : index
    %c0_2 = arith.constant 0 : index
    %1 = vector.load %arg2[%c0_1, %c0_2] : memref<3x32xbf16, #tpu.memory_space<vmem>>, vector<3x32xbf16>
    %2 = arith.truncf %0 : vector<1x3xf32> to vector<1x3xbf16>
    %cst = arith.constant dense<0.000000e+00> : vector<1x32xf32>
    %3 = tpu.matmul %2, %1, %cst {dimension_numbers = #tpu.dot_dimension_numbers<[1], [0], [0], [1], [0, 0, 1, 1], [], []>} : vector<1x3xbf16>, vector<3x32xbf16>, vector<1x32xf32> -> vector<1x32xf32>
    %c0_3 = arith.constant 0 : index
    %c0_4 = arith.constant 0 : index
    %4 = vector.load %arg3[%c0_3, %c0_4] : memref<8x768xbf16, #tpu.memory_space<vmem>>, vector<8x768xbf16>
    %c0_5 = arith.constant 0 : index
    %c0_6 = arith.constant 0 : index
    %5 = vector.load %arg4[%c0_5, %c0_6] : memref<768x32xbf16, #tpu.memory_space<vmem>>, vector<768x32xbf16>
    %cst_7 = arith.constant dense<0.000000e+00> : vector<8x32xf32>
    %6 = tpu.matmul %4, %5, %cst_7 {dimension_numbers = #tpu.dot_dimension_numbers<[1], [0], [0], [1], [0, 0, 1, 1], [], []>} : vector<8x768xbf16>, vector<768x32xbf16>, vector<8x32xf32> -> vector<8x32xf32>
    %c0_8 = arith.constant 0 : index
    %c0_9 = arith.constant 0 : index
    %7 = vector.load %arg5[%c0_8, %c0_9] : memref<1x32xf32, #tpu.memory_space<vmem>>, vector<1x32xf32>
    %8 = vector.broadcast %7 : vector<1x32xf32> to vector<8x32xf32>
    %9 = arith.addf %6, %8 : vector<8x32xf32>
    %c0_10 = arith.constant 0 : index
    %c0_11 = arith.constant 0 : index
    %10 = vector.load %arg6[%c0_10, %c0_11] : memref<8x32xf32, #tpu.memory_space<vmem>>, vector<8x32xf32>
    %c0_12 = arith.constant 0 : index
    %c0_13 = arith.constant 0 : index
    %11 = vector.load %arg7[%c0_12, %c0_13] : memref<1x32xf32, #tpu.memory_space<vmem>>, vector<1x32xf32>
    %12 = vector.broadcast %11 : vector<1x32xf32> to vector<8x32xf32>
    %13 = arith.addf %10, %12 : vector<8x32xf32>
    %14 = vector.broadcast %3 : vector<1x32xf32> to vector<8x32xf32>
    %15 = arith.addf %13, %14 : vector<8x32xf32>
    %c0_14 = arith.constant 0 : index
    %c0_15 = arith.constant 0 : index
    %16 = vector.load %arg8[%c0_14, %c0_15] : memref<8x32xf32, #tpu.memory_space<vmem>>, vector<8x32xf32>
    %17 = arith.addf %15, %16 : vector<8x32xf32>
    %18 = tpu.iota {dimensions = array<i32: 0>} : vector<8x8xi32>
    %19 = tpu.iota {dimensions = array<i32: 1>} : vector<8x8xi32>
    %20 = arith.cmpi sle, %19, %18 : vector<8x8xi32>
    %cst_16 = arith.constant 0.000000e+00 : f32
    %cst_17 = arith.constant -1.000000e+30 : f32
    %21 = vector.broadcast %cst_16 : f32 to vector<8x8xf32>
    %22 = vector.broadcast %cst_17 : f32 to vector<8x8xf32>
    %23 = arith.select %20, %21, %22 : vector<8x8xi1>, vector<8x8xf32>
    %24 = arith.subi %18, %19 : vector<8x8xi32>
    %25 = arith.sitofp %24 : vector<8x8xi32> to vector<8x8xf32>
    %cst_18 = arith.constant 5.000000e-01 : f32
    %26 = vector.broadcast %cst_18 : f32 to vector<8x8xf32>
    %27 = arith.addf %25, %26 : vector<8x8xf32>
    %cst_19 = arith.constant 2.500000e-01 : f32
    %28 = vector.broadcast %cst_19 : f32 to vector<8x8xf32>
    %29 = arith.mulf %27, %28 : vector<8x8xf32>
    %30 = math.floor %29 : vector<8x8xf32>
    %cst_20 = arith.constant 0.000000e+00 : f32
    %31 = vector.broadcast %cst_20 : f32 to vector<8x8xf32>
    %32 = arith.subf %31, %30 : vector<8x8xf32>
    %33 = tpu.iota {dimensions = array<i32: 0>} : vector<8x8xi32>
    %34 = tpu.iota {dimensions = array<i32: 1>} : vector<8x8xi32>
    %35 = arith.cmpi eq, %33, %34 : vector<8x8xi32>
    %cst_21 = arith.constant 0.000000e+00 : f32
    %cst_22 = arith.constant -1.000000e+30 : f32
    %36 = vector.broadcast %cst_21 : f32 to vector<8x8xf32>
    %37 = vector.broadcast %cst_22 : f32 to vector<8x8xf32>
    %38 = arith.select %35, %36, %37 : vector<8x8xi1>, vector<8x8xf32>
    %c0_23 = arith.constant 0 : index
    %c0_24 = arith.constant 0 : index
    %39 = vector.load %arg9[%c0_23, %c0_24] : memref<32x96xbf16, #tpu.memory_space<vmem>>, vector<32x96xbf16>
    %40 = arith.truncf %17 : vector<8x32xf32> to vector<8x32xbf16>
    %cst_25 = arith.constant dense<0.000000e+00> : vector<8x96xf32>
    %41 = tpu.matmul %40, %39, %cst_25 {dimension_numbers = #tpu.dot_dimension_numbers<[1], [0], [0], [1], [0, 0, 1, 1], [], []>} : vector<8x32xbf16>, vector<32x96xbf16>, vector<8x96xf32> -> vector<8x96xf32>
    %c0_26 = arith.constant 0 : index
    %c0_27 = arith.constant 0 : index
    %42 = vector.load %arg10[%c0_26, %c0_27] : memref<1x96xf32, #tpu.memory_space<vmem>>, vector<1x96xf32>
    %43 = vector.broadcast %42 : vector<1x96xf32> to vector<8x96xf32>
    %44 = arith.addf %41, %43 : vector<8x96xf32>
    %45 = vector.extract_strided_slice %44 {offsets = [0, 0], sizes = [8, 32], strides = [1, 1]} : vector<8x96xf32> to vector<8x32xf32>
    %cst_28 = arith.constant 0.353553385 : f32
    %46 = vector.broadcast %cst_28 : f32 to vector<8x32xf32>
    %47 = arith.mulf %45, %46 : vector<8x32xf32>
    %48 = vector.extract_strided_slice %44 {offsets = [0, 32], sizes = [8, 32], strides = [1, 1]} : vector<8x96xf32> to vector<8x32xf32>
    %49 = vector.extract_strided_slice %44 {offsets = [0, 64], sizes = [8, 32], strides = [1, 1]} : vector<8x96xf32> to vector<8x32xf32>
    %c0_29 = arith.constant 0 : index
    %c0_30 = arith.constant 0 : index
    %50 = vector.load %arg11[%c0_29, %c0_30] : memref<32x32xbf16, #tpu.memory_space<vmem>>, vector<32x32xbf16>
    %51 = arith.truncf %48 : vector<8x32xf32> to vector<8x32xbf16>
    %52 = tpu.transpose %51, [1, 0] : vector<8x32xbf16> -> vector<32x8xbf16>
    %53 = arith.truncf %49 : vector<8x32xf32> to vector<8x32xbf16>
    %cst_31 = arith.constant 0.000000e+00 : f32
    %54 = vector.broadcast %cst_31 : f32 to vector<8x32xf32>
    %55 = vector.extract_strided_slice %47 {offsets = [0, 0], sizes = [8, 8], strides = [1, 1]} : vector<8x32xf32> to vector<8x8xf32>
    %56 = arith.truncf %55 : vector<8x8xf32> to vector<8x8xbf16>
    %57 = vector.extract_strided_slice %52 {offsets = [0, 0], sizes = [8, 8], strides = [1, 1]} : vector<32x8xbf16> to vector<8x8xbf16>
    %cst_32 = arith.constant dense<0.000000e+00> : vector<8x8xf32>
    %58 = tpu.matmul %56, %57, %cst_32 {dimension_numbers = #tpu.dot_dimension_numbers<[1], [0], [0], [1], [0, 0, 1, 1], [], []>} : vector<8x8xbf16>, vector<8x8xbf16>, vector<8x8xf32> -> vector<8x8xf32>
    %cst_33 = arith.constant 2.500000e-01 : f32
    %59 = vector.broadcast %cst_33 : f32 to vector<8x8xf32>
    %60 = arith.mulf %59, %32 : vector<8x8xf32>
    %61 = arith.addf %60, %23 : vector<8x8xf32>
    %62 = arith.addf %58, %61 : vector<8x8xf32>
    %cst_34 = arith.constant dense<0xFF800000> : vector<8xf32>
    %63 = vector.multi_reduction <maximumf>, %62, %cst_34 [1] : vector<8x8xf32> to vector<8xf32>
    %64 = vector.shape_cast %63 : vector<8xf32> to vector<8x1xf32>
    %65 = vector.broadcast %64 : vector<8x1xf32> to vector<8x8xf32>
    %66 = arith.subf %62, %65 : vector<8x8xf32>
    %67 = math.exp %66 : vector<8x8xf32>
    %cst_35 = arith.constant dense<0.000000e+00> : vector<8xf32>
    %68 = vector.multi_reduction <add>, %67, %cst_35 [1] : vector<8x8xf32> to vector<8xf32>
    %69 = vector.shape_cast %68 : vector<8xf32> to vector<8x1xf32>
    %70 = tpu.reciprocal %69 {approx = true} : vector<8x1xf32> -> vector<8x1xf32>
    %71 = vector.broadcast %70 : vector<8x1xf32> to vector<8x8xf32>
    %72 = arith.mulf %67, %71 : vector<8x8xf32>
    %73 = arith.truncf %72 : vector<8x8xf32> to vector<8x8xbf16>
    %74 = vector.extract_strided_slice %53 {offsets = [0, 0], sizes = [8, 8], strides = [1, 1]} : vector<8x32xbf16> to vector<8x8xbf16>
    %cst_36 = arith.constant dense<0.000000e+00> : vector<8x8xf32>
    %75 = tpu.matmul %73, %74, %cst_36 {dimension_numbers = #tpu.dot_dimension_numbers<[1], [0], [0], [1], [0, 0, 1, 1], [], []>} : vector<8x8xbf16>, vector<8x8xbf16>, vector<8x8xf32> -> vector<8x8xf32>
    %76 = arith.truncf %75 : vector<8x8xf32> to vector<8x8xbf16>
    %77 = vector.extract_strided_slice %50 {offsets = [0, 0], sizes = [8, 32], strides = [1, 1]} : vector<32x32xbf16> to vector<8x32xbf16>
    %cst_37 = arith.constant dense<0.000000e+00> : vector<8x32xf32>
    %78 = tpu.matmul %76, %77, %cst_37 {dimension_numbers = #tpu.dot_dimension_numbers<[1], [0], [0], [1], [0, 0, 1, 1], [], []>} : vector<8x8xbf16>, vector<8x32xbf16>, vector<8x32xf32> -> vector<8x32xf32>
    %79 = arith.addf %54, %78 : vector<8x32xf32>
    %80 = vector.extract_strided_slice %47 {offsets = [0, 8], sizes = [8, 8], strides = [1, 1]} : vector<8x32xf32> to vector<8x8xf32>
    %81 = arith.truncf %80 : vector<8x8xf32> to vector<8x8xbf16>
    %82 = vector.extract_strided_slice %52 {offsets = [8, 0], sizes = [8, 8], strides = [1, 1]} : vector<32x8xbf16> to vector<8x8xbf16>
    %cst_38 = arith.constant dense<0.000000e+00> : vector<8x8xf32>
    %83 = tpu.matmul %81, %82, %cst_38 {dimension_numbers = #tpu.dot_dimension_numbers<[1], [0], [0], [1], [0, 0, 1, 1], [], []>} : vector<8x8xbf16>, vector<8x8xbf16>, vector<8x8xf32> -> vector<8x8xf32>
    %cst_39 = arith.constant 6.250000e-02 : f32
    %84 = vector.broadcast %cst_39 : f32 to vector<8x8xf32>
    %85 = arith.mulf %84, %32 : vector<8x8xf32>
    %86 = arith.addf %85, %23 : vector<8x8xf32>
    %87 = arith.addf %83, %86 : vector<8x8xf32>
    %cst_40 = arith.constant dense<0xFF800000> : vector<8xf32>
    %88 = vector.multi_reduction <maximumf>, %87, %cst_40 [1] : vector<8x8xf32> to vector<8xf32>
    %89 = vector.shape_cast %88 : vector<8xf32> to vector<8x1xf32>
    %90 = vector.broadcast %89 : vector<8x1xf32> to vector<8x8xf32>
    %91 = arith.subf %87, %90 : vector<8x8xf32>
    %92 = math.exp %91 : vector<8x8xf32>
    %cst_41 = arith.constant dense<0.000000e+00> : vector<8xf32>
    %93 = vector.multi_reduction <add>, %92, %cst_41 [1] : vector<8x8xf32> to vector<8xf32>
    %94 = vector.shape_cast %93 : vector<8xf32> to vector<8x1xf32>
    %95 = tpu.reciprocal %94 {approx = true} : vector<8x1xf32> -> vector<8x1xf32>
    %96 = vector.broadcast %95 : vector<8x1xf32> to vector<8x8xf32>
    %97 = arith.mulf %92, %96 : vector<8x8xf32>
    %98 = arith.truncf %97 : vector<8x8xf32> to vector<8x8xbf16>
    %99 = vector.extract_strided_slice %53 {offsets = [0, 8], sizes = [8, 8], strides = [1, 1]} : vector<8x32xbf16> to vector<8x8xbf16>
    %cst_42 = arith.constant dense<0.000000e+00> : vector<8x8xf32>
    %100 = tpu.matmul %98, %99, %cst_42 {dimension_numbers = #tpu.dot_dimension_numbers<[1], [0], [0], [1], [0, 0, 1, 1], [], []>} : vector<8x8xbf16>, vector<8x8xbf16>, vector<8x8xf32> -> vector<8x8xf32>
    %101 = arith.truncf %100 : vector<8x8xf32> to vector<8x8xbf16>
    %102 = vector.extract_strided_slice %50 {offsets = [8, 0], sizes = [8, 32], strides = [1, 1]} : vector<32x32xbf16> to vector<8x32xbf16>
    %cst_43 = arith.constant dense<0.000000e+00> : vector<8x32xf32>
    %103 = tpu.matmul %101, %102, %cst_43 {dimension_numbers = #tpu.dot_dimension_numbers<[1], [0], [0], [1], [0, 0, 1, 1], [], []>} : vector<8x8xbf16>, vector<8x32xbf16>, vector<8x32xf32> -> vector<8x32xf32>
    %104 = arith.addf %79, %103 : vector<8x32xf32>
    %105 = vector.extract_strided_slice %47 {offsets = [0, 16], sizes = [8, 8], strides = [1, 1]} : vector<8x32xf32> to vector<8x8xf32>
    %106 = arith.truncf %105 : vector<8x8xf32> to vector<8x8xbf16>
    %107 = vector.extract_strided_slice %52 {offsets = [16, 0], sizes = [8, 8], strides = [1, 1]} : vector<32x8xbf16> to vector<8x8xbf16>
    %cst_44 = arith.constant dense<0.000000e+00> : vector<8x8xf32>
    %108 = tpu.matmul %106, %107, %cst_44 {dimension_numbers = #tpu.dot_dimension_numbers<[1], [0], [0], [1], [0, 0, 1, 1], [], []>} : vector<8x8xbf16>, vector<8x8xbf16>, vector<8x8xf32> -> vector<8x8xf32>
    %cst_45 = arith.constant 1.562500e-02 : f32
    %109 = vector.broadcast %cst_45 : f32 to vector<8x8xf32>
    %110 = arith.mulf %109, %32 : vector<8x8xf32>
    %111 = arith.addf %110, %23 : vector<8x8xf32>
    %112 = arith.addf %108, %111 : vector<8x8xf32>
    %cst_46 = arith.constant dense<0xFF800000> : vector<8xf32>
    %113 = vector.multi_reduction <maximumf>, %112, %cst_46 [1] : vector<8x8xf32> to vector<8xf32>
    %114 = vector.shape_cast %113 : vector<8xf32> to vector<8x1xf32>
    %115 = vector.broadcast %114 : vector<8x1xf32> to vector<8x8xf32>
    %116 = arith.subf %112, %115 : vector<8x8xf32>
    %117 = math.exp %116 : vector<8x8xf32>
    %cst_47 = arith.constant dense<0.000000e+00> : vector<8xf32>
    %118 = vector.multi_reduction <add>, %117, %cst_47 [1] : vector<8x8xf32> to vector<8xf32>
    %119 = vector.shape_cast %118 : vector<8xf32> to vector<8x1xf32>
    %120 = tpu.reciprocal %119 {approx = true} : vector<8x1xf32> -> vector<8x1xf32>
    %121 = vector.broadcast %120 : vector<8x1xf32> to vector<8x8xf32>
    %122 = arith.mulf %117, %121 : vector<8x8xf32>
    %123 = arith.truncf %122 : vector<8x8xf32> to vector<8x8xbf16>
    %124 = vector.extract_strided_slice %53 {offsets = [0, 16], sizes = [8, 8], strides = [1, 1]} : vector<8x32xbf16> to vector<8x8xbf16>
    %cst_48 = arith.constant dense<0.000000e+00> : vector<8x8xf32>
    %125 = tpu.matmul %123, %124, %cst_48 {dimension_numbers = #tpu.dot_dimension_numbers<[1], [0], [0], [1], [0, 0, 1, 1], [], []>} : vector<8x8xbf16>, vector<8x8xbf16>, vector<8x8xf32> -> vector<8x8xf32>
    %126 = arith.truncf %125 : vector<8x8xf32> to vector<8x8xbf16>
    %127 = vector.extract_strided_slice %50 {offsets = [16, 0], sizes = [8, 32], strides = [1, 1]} : vector<32x32xbf16> to vector<8x32xbf16>
    %cst_49 = arith.constant dense<0.000000e+00> : vector<8x32xf32>
    %128 = tpu.matmul %126, %127, %cst_49 {dimension_numbers = #tpu.dot_dimension_numbers<[1], [0], [0], [1], [0, 0, 1, 1], [], []>} : vector<8x8xbf16>, vector<8x32xbf16>, vector<8x32xf32> -> vector<8x32xf32>
    %129 = arith.addf %104, %128 : vector<8x32xf32>
    %130 = vector.extract_strided_slice %47 {offsets = [0, 24], sizes = [8, 8], strides = [1, 1]} : vector<8x32xf32> to vector<8x8xf32>
    %131 = arith.truncf %130 : vector<8x8xf32> to vector<8x8xbf16>
    %132 = vector.extract_strided_slice %52 {offsets = [24, 0], sizes = [8, 8], strides = [1, 1]} : vector<32x8xbf16> to vector<8x8xbf16>
    %cst_50 = arith.constant dense<0.000000e+00> : vector<8x8xf32>
    %133 = tpu.matmul %131, %132, %cst_50 {dimension_numbers = #tpu.dot_dimension_numbers<[1], [0], [0], [1], [0, 0, 1, 1], [], []>} : vector<8x8xbf16>, vector<8x8xbf16>, vector<8x8xf32> -> vector<8x8xf32>
    %cst_51 = arith.constant 3.906250e-03 : f32
    %134 = vector.broadcast %cst_51 : f32 to vector<8x8xf32>
    %135 = arith.mulf %134, %32 : vector<8x8xf32>
    %136 = arith.addf %135, %23 : vector<8x8xf32>
    %137 = arith.addf %133, %136 : vector<8x8xf32>
    %cst_52 = arith.constant dense<0xFF800000> : vector<8xf32>
    %138 = vector.multi_reduction <maximumf>, %137, %cst_52 [1] : vector<8x8xf32> to vector<8xf32>
    %139 = vector.shape_cast %138 : vector<8xf32> to vector<8x1xf32>
    %140 = vector.broadcast %139 : vector<8x1xf32> to vector<8x8xf32>
    %141 = arith.subf %137, %140 : vector<8x8xf32>
    %142 = math.exp %141 : vector<8x8xf32>
    %cst_53 = arith.constant dense<0.000000e+00> : vector<8xf32>
    %143 = vector.multi_reduction <add>, %142, %cst_53 [1] : vector<8x8xf32> to vector<8xf32>
    %144 = vector.shape_cast %143 : vector<8xf32> to vector<8x1xf32>
    %145 = tpu.reciprocal %144 {approx = true} : vector<8x1xf32> -> vector<8x1xf32>
    %146 = vector.broadcast %145 : vector<8x1xf32> to vector<8x8xf32>
    %147 = arith.mulf %142, %146 : vector<8x8xf32>
    %148 = arith.truncf %147 : vector<8x8xf32> to vector<8x8xbf16>
    %149 = vector.extract_strided_slice %53 {offsets = [0, 24], sizes = [8, 8], strides = [1, 1]} : vector<8x32xbf16> to vector<8x8xbf16>
    %cst_54 = arith.constant dense<0.000000e+00> : vector<8x8xf32>
    %150 = tpu.matmul %148, %149, %cst_54 {dimension_numbers = #tpu.dot_dimension_numbers<[1], [0], [0], [1], [0, 0, 1, 1], [], []>} : vector<8x8xbf16>, vector<8x8xbf16>, vector<8x8xf32> -> vector<8x8xf32>
    %151 = arith.truncf %150 : vector<8x8xf32> to vector<8x8xbf16>
    %152 = vector.extract_strided_slice %50 {offsets = [24, 0], sizes = [8, 32], strides = [1, 1]} : vector<32x32xbf16> to vector<8x32xbf16>
    %cst_55 = arith.constant dense<0.000000e+00> : vector<8x32xf32>
    %153 = tpu.matmul %151, %152, %cst_55 {dimension_numbers = #tpu.dot_dimension_numbers<[1], [0], [0], [1], [0, 0, 1, 1], [], []>} : vector<8x8xbf16>, vector<8x32xbf16>, vector<8x32xf32> -> vector<8x32xf32>
    %154 = arith.addf %129, %153 : vector<8x32xf32>
    %c0_56 = arith.constant 0 : index
    %c0_57 = arith.constant 0 : index
    %155 = vector.load %arg12[%c0_56, %c0_57] : memref<1x32xf32, #tpu.memory_space<vmem>>, vector<1x32xf32>
    %156 = vector.broadcast %155 : vector<1x32xf32> to vector<8x32xf32>
    %157 = arith.addf %154, %156 : vector<8x32xf32>
    %158 = arith.addf %17, %157 : vector<8x32xf32>
    %cst_58 = arith.constant dense<0.000000e+00> : vector<8xf32>
    %159 = vector.multi_reduction <add>, %158, %cst_58 [1] : vector<8x32xf32> to vector<8xf32>
    %160 = vector.shape_cast %159 : vector<8xf32> to vector<8x1xf32>
    %cst_59 = arith.constant 3.200000e+01 : f32
    %161 = vector.broadcast %cst_59 : f32 to vector<8x1xf32>
    %162 = arith.divf %160, %161 : vector<8x1xf32>
    %163 = vector.broadcast %162 : vector<8x1xf32> to vector<8x32xf32>
    %164 = arith.subf %158, %163 : vector<8x32xf32>
    %165 = arith.mulf %164, %164 : vector<8x32xf32>
    %cst_60 = arith.constant dense<0.000000e+00> : vector<8xf32>
    %166 = vector.multi_reduction <add>, %165, %cst_60 [1] : vector<8x32xf32> to vector<8xf32>
    %167 = vector.shape_cast %166 : vector<8xf32> to vector<8x1xf32>
    %cst_61 = arith.constant 3.200000e+01 : f32
    %168 = vector.broadcast %cst_61 : f32 to vector<8x1xf32>
    %169 = arith.divf %167, %168 : vector<8x1xf32>
    %170 = vector.broadcast %162 : vector<8x1xf32> to vector<8x32xf32>
    %171 = arith.subf %158, %170 : vector<8x32xf32>
    %cst_62 = arith.constant 9.99999974E-6 : f32
    %172 = vector.broadcast %cst_62 : f32 to vector<8x1xf32>
    %173 = arith.addf %169, %172 : vector<8x1xf32>
    %174 = math.rsqrt %173 : vector<8x1xf32>
    %175 = vector.broadcast %174 : vector<8x1xf32> to vector<8x32xf32>
    %176 = arith.mulf %171, %175 : vector<8x32xf32>
    %c0_63 = arith.constant 0 : index
    %c0_64 = arith.constant 0 : index
    %177 = vector.load %arg23[%c0_63, %c0_64] : memref<1x32xf32, #tpu.memory_space<vmem>>, vector<1x32xf32>
    %178 = vector.broadcast %177 : vector<1x32xf32> to vector<8x32xf32>
    %179 = arith.mulf %176, %178 : vector<8x32xf32>
    %c0_65 = arith.constant 0 : index
    %c0_66 = arith.constant 0 : index
    %180 = vector.load %arg24[%c0_65, %c0_66] : memref<1x32xf32, #tpu.memory_space<vmem>>, vector<1x32xf32>
    %181 = vector.broadcast %180 : vector<1x32xf32> to vector<8x32xf32>
    %182 = arith.addf %179, %181 : vector<8x32xf32>
    %c0_67 = arith.constant 0 : index
    %c0_68 = arith.constant 0 : index
    %183 = vector.load %arg13[%c0_67, %c0_68] : memref<32x32xbf16, #tpu.memory_space<vmem>>, vector<32x32xbf16>
    %184 = arith.truncf %182 : vector<8x32xf32> to vector<8x32xbf16>
    %cst_69 = arith.constant dense<0.000000e+00> : vector<8x32xf32>
    %185 = tpu.matmul %184, %183, %cst_69 {dimension_numbers = #tpu.dot_dimension_numbers<[1], [0], [0], [1], [0, 0, 1, 1], [], []>} : vector<8x32xbf16>, vector<32x32xbf16>, vector<8x32xf32> -> vector<8x32xf32>
    %c0_70 = arith.constant 0 : index
    %c0_71 = arith.constant 0 : index
    %186 = vector.load %arg14[%c0_70, %c0_71] : memref<1x32xf32, #tpu.memory_space<vmem>>, vector<1x32xf32>
    %187 = vector.broadcast %186 : vector<1x32xf32> to vector<8x32xf32>
    %188 = arith.addf %185, %187 : vector<8x32xf32>
    %cst_72 = arith.constant 0.353553385 : f32
    %189 = vector.broadcast %cst_72 : f32 to vector<8x32xf32>
    %190 = arith.mulf %188, %189 : vector<8x32xf32>
    %c0_73 = arith.constant 0 : index
    %c0_74 = arith.constant 0 : index
    %191 = vector.load %arg15[%c0_73, %c0_74] : memref<32x64xbf16, #tpu.memory_space<vmem>>, vector<32x64xbf16>
    %192 = arith.truncf %9 : vector<8x32xf32> to vector<8x32xbf16>
    %cst_75 = arith.constant dense<0.000000e+00> : vector<8x64xf32>
    %193 = tpu.matmul %192, %191, %cst_75 {dimension_numbers = #tpu.dot_dimension_numbers<[1], [0], [0], [1], [0, 0, 1, 1], [], []>} : vector<8x32xbf16>, vector<32x64xbf16>, vector<8x64xf32> -> vector<8x64xf32>
    %c0_76 = arith.constant 0 : index
    %c0_77 = arith.constant 0 : index
    %194 = vector.load %arg16[%c0_76, %c0_77] : memref<1x64xf32, #tpu.memory_space<vmem>>, vector<1x64xf32>
    %195 = vector.broadcast %194 : vector<1x64xf32> to vector<8x64xf32>
    %196 = arith.addf %193, %195 : vector<8x64xf32>
    %197 = vector.extract_strided_slice %196 {offsets = [0, 0], sizes = [8, 32], strides = [1, 1]} : vector<8x64xf32> to vector<8x32xf32>
    %198 = vector.extract_strided_slice %196 {offsets = [0, 32], sizes = [8, 32], strides = [1, 1]} : vector<8x64xf32> to vector<8x32xf32>
    %c0_78 = arith.constant 0 : index
    %c0_79 = arith.constant 0 : index
    %199 = vector.load %arg17[%c0_78, %c0_79] : memref<32x32xbf16, #tpu.memory_space<vmem>>, vector<32x32xbf16>
    %200 = arith.truncf %197 : vector<8x32xf32> to vector<8x32xbf16>
    %201 = tpu.transpose %200, [1, 0] : vector<8x32xbf16> -> vector<32x8xbf16>
    %202 = arith.truncf %198 : vector<8x32xf32> to vector<8x32xbf16>
    %cst_80 = arith.constant 0.000000e+00 : f32
    %203 = vector.broadcast %cst_80 : f32 to vector<8x32xf32>
    %204 = vector.extract_strided_slice %190 {offsets = [0, 0], sizes = [8, 8], strides = [1, 1]} : vector<8x32xf32> to vector<8x8xf32>
    %205 = arith.truncf %204 : vector<8x8xf32> to vector<8x8xbf16>
    %206 = vector.extract_strided_slice %201 {offsets = [0, 0], sizes = [8, 8], strides = [1, 1]} : vector<32x8xbf16> to vector<8x8xbf16>
    %cst_81 = arith.constant dense<0.000000e+00> : vector<8x8xf32>
    %207 = tpu.matmul %205, %206, %cst_81 {dimension_numbers = #tpu.dot_dimension_numbers<[1], [0], [0], [1], [0, 0, 1, 1], [], []>} : vector<8x8xbf16>, vector<8x8xbf16>, vector<8x8xf32> -> vector<8x8xf32>
    %208 = arith.addf %207, %38 : vector<8x8xf32>
    %cst_82 = arith.constant dense<0xFF800000> : vector<8xf32>
    %209 = vector.multi_reduction <maximumf>, %208, %cst_82 [1] : vector<8x8xf32> to vector<8xf32>
    %210 = vector.shape_cast %209 : vector<8xf32> to vector<8x1xf32>
    %211 = vector.broadcast %210 : vector<8x1xf32> to vector<8x8xf32>
    %212 = arith.subf %208, %211 : vector<8x8xf32>
    %213 = math.exp %212 : vector<8x8xf32>
    %cst_83 = arith.constant dense<0.000000e+00> : vector<8xf32>
    %214 = vector.multi_reduction <add>, %213, %cst_83 [1] : vector<8x8xf32> to vector<8xf32>
    %215 = vector.shape_cast %214 : vector<8xf32> to vector<8x1xf32>
    %216 = tpu.reciprocal %215 {approx = true} : vector<8x1xf32> -> vector<8x1xf32>
    %217 = vector.broadcast %216 : vector<8x1xf32> to vector<8x8xf32>
    %218 = arith.mulf %213, %217 : vector<8x8xf32>
    %219 = arith.truncf %218 : vector<8x8xf32> to vector<8x8xbf16>
    %220 = vector.extract_strided_slice %202 {offsets = [0, 0], sizes = [8, 8], strides = [1, 1]} : vector<8x32xbf16> to vector<8x8xbf16>
    %cst_84 = arith.constant dense<0.000000e+00> : vector<8x8xf32>
    %221 = tpu.matmul %219, %220, %cst_84 {dimension_numbers = #tpu.dot_dimension_numbers<[1], [0], [0], [1], [0, 0, 1, 1], [], []>} : vector<8x8xbf16>, vector<8x8xbf16>, vector<8x8xf32> -> vector<8x8xf32>
    %222 = arith.truncf %221 : vector<8x8xf32> to vector<8x8xbf16>
    %223 = vector.extract_strided_slice %199 {offsets = [0, 0], sizes = [8, 32], strides = [1, 1]} : vector<32x32xbf16> to vector<8x32xbf16>
    %cst_85 = arith.constant dense<0.000000e+00> : vector<8x32xf32>
    %224 = tpu.matmul %222, %223, %cst_85 {dimension_numbers = #tpu.dot_dimension_numbers<[1], [0], [0], [1], [0, 0, 1, 1], [], []>} : vector<8x8xbf16>, vector<8x32xbf16>, vector<8x32xf32> -> vector<8x32xf32>
    %225 = arith.addf %203, %224 : vector<8x32xf32>
    %226 = vector.extract_strided_slice %190 {offsets = [0, 8], sizes = [8, 8], strides = [1, 1]} : vector<8x32xf32> to vector<8x8xf32>
    %227 = arith.truncf %226 : vector<8x8xf32> to vector<8x8xbf16>
    %228 = vector.extract_strided_slice %201 {offsets = [8, 0], sizes = [8, 8], strides = [1, 1]} : vector<32x8xbf16> to vector<8x8xbf16>
    %cst_86 = arith.constant dense<0.000000e+00> : vector<8x8xf32>
    %229 = tpu.matmul %227, %228, %cst_86 {dimension_numbers = #tpu.dot_dimension_numbers<[1], [0], [0], [1], [0, 0, 1, 1], [], []>} : vector<8x8xbf16>, vector<8x8xbf16>, vector<8x8xf32> -> vector<8x8xf32>
    %230 = arith.addf %229, %38 : vector<8x8xf32>
    %cst_87 = arith.constant dense<0xFF800000> : vector<8xf32>
    %231 = vector.multi_reduction <maximumf>, %230, %cst_87 [1] : vector<8x8xf32> to vector<8xf32>
    %232 = vector.shape_cast %231 : vector<8xf32> to vector<8x1xf32>
    %233 = vector.broadcast %232 : vector<8x1xf32> to vector<8x8xf32>
    %234 = arith.subf %230, %233 : vector<8x8xf32>
    %235 = math.exp %234 : vector<8x8xf32>
    %cst_88 = arith.constant dense<0.000000e+00> : vector<8xf32>
    %236 = vector.multi_reduction <add>, %235, %cst_88 [1] : vector<8x8xf32> to vector<8xf32>
    %237 = vector.shape_cast %236 : vector<8xf32> to vector<8x1xf32>
    %238 = tpu.reciprocal %237 {approx = true} : vector<8x1xf32> -> vector<8x1xf32>
    %239 = vector.broadcast %238 : vector<8x1xf32> to vector<8x8xf32>
    %240 = arith.mulf %235, %239 : vector<8x8xf32>
    %241 = arith.truncf %240 : vector<8x8xf32> to vector<8x8xbf16>
    %242 = vector.extract_strided_slice %202 {offsets = [0, 8], sizes = [8, 8], strides = [1, 1]} : vector<8x32xbf16> to vector<8x8xbf16>
    %cst_89 = arith.constant dense<0.000000e+00> : vector<8x8xf32>
    %243 = tpu.matmul %241, %242, %cst_89 {dimension_numbers = #tpu.dot_dimension_numbers<[1], [0], [0], [1], [0, 0, 1, 1], [], []>} : vector<8x8xbf16>, vector<8x8xbf16>, vector<8x8xf32> -> vector<8x8xf32>
    %244 = arith.truncf %243 : vector<8x8xf32> to vector<8x8xbf16>
    %245 = vector.extract_strided_slice %199 {offsets = [8, 0], sizes = [8, 32], strides = [1, 1]} : vector<32x32xbf16> to vector<8x32xbf16>
    %cst_90 = arith.constant dense<0.000000e+00> : vector<8x32xf32>
    %246 = tpu.matmul %244, %245, %cst_90 {dimension_numbers = #tpu.dot_dimension_numbers<[1], [0], [0], [1], [0, 0, 1, 1], [], []>} : vector<8x8xbf16>, vector<8x32xbf16>, vector<8x32xf32> -> vector<8x32xf32>
    %247 = arith.addf %225, %246 : vector<8x32xf32>
    %248 = vector.extract_strided_slice %190 {offsets = [0, 16], sizes = [8, 8], strides = [1, 1]} : vector<8x32xf32> to vector<8x8xf32>
    %249 = arith.truncf %248 : vector<8x8xf32> to vector<8x8xbf16>
    %250 = vector.extract_strided_slice %201 {offsets = [16, 0], sizes = [8, 8], strides = [1, 1]} : vector<32x8xbf16> to vector<8x8xbf16>
    %cst_91 = arith.constant dense<0.000000e+00> : vector<8x8xf32>
    %251 = tpu.matmul %249, %250, %cst_91 {dimension_numbers = #tpu.dot_dimension_numbers<[1], [0], [0], [1], [0, 0, 1, 1], [], []>} : vector<8x8xbf16>, vector<8x8xbf16>, vector<8x8xf32> -> vector<8x8xf32>
    %252 = arith.addf %251, %38 : vector<8x8xf32>
    %cst_92 = arith.constant dense<0xFF800000> : vector<8xf32>
    %253 = vector.multi_reduction <maximumf>, %252, %cst_92 [1] : vector<8x8xf32> to vector<8xf32>
    %254 = vector.shape_cast %253 : vector<8xf32> to vector<8x1xf32>
    %255 = vector.broadcast %254 : vector<8x1xf32> to vector<8x8xf32>
    %256 = arith.subf %252, %255 : vector<8x8xf32>
    %257 = math.exp %256 : vector<8x8xf32>
    %cst_93 = arith.constant dense<0.000000e+00> : vector<8xf32>
    %258 = vector.multi_reduction <add>, %257, %cst_93 [1] : vector<8x8xf32> to vector<8xf32>
    %259 = vector.shape_cast %258 : vector<8xf32> to vector<8x1xf32>
    %260 = tpu.reciprocal %259 {approx = true} : vector<8x1xf32> -> vector<8x1xf32>
    %261 = vector.broadcast %260 : vector<8x1xf32> to vector<8x8xf32>
    %262 = arith.mulf %257, %261 : vector<8x8xf32>
    %263 = arith.truncf %262 : vector<8x8xf32> to vector<8x8xbf16>
    %264 = vector.extract_strided_slice %202 {offsets = [0, 16], sizes = [8, 8], strides = [1, 1]} : vector<8x32xbf16> to vector<8x8xbf16>
    %cst_94 = arith.constant dense<0.000000e+00> : vector<8x8xf32>
    %265 = tpu.matmul %263, %264, %cst_94 {dimension_numbers = #tpu.dot_dimension_numbers<[1], [0], [0], [1], [0, 0, 1, 1], [], []>} : vector<8x8xbf16>, vector<8x8xbf16>, vector<8x8xf32> -> vector<8x8xf32>
    %266 = arith.truncf %265 : vector<8x8xf32> to vector<8x8xbf16>
    %267 = vector.extract_strided_slice %199 {offsets = [16, 0], sizes = [8, 32], strides = [1, 1]} : vector<32x32xbf16> to vector<8x32xbf16>
    %cst_95 = arith.constant dense<0.000000e+00> : vector<8x32xf32>
    %268 = tpu.matmul %266, %267, %cst_95 {dimension_numbers = #tpu.dot_dimension_numbers<[1], [0], [0], [1], [0, 0, 1, 1], [], []>} : vector<8x8xbf16>, vector<8x32xbf16>, vector<8x32xf32> -> vector<8x32xf32>
    %269 = arith.addf %247, %268 : vector<8x32xf32>
    %270 = vector.extract_strided_slice %190 {offsets = [0, 24], sizes = [8, 8], strides = [1, 1]} : vector<8x32xf32> to vector<8x8xf32>
    %271 = arith.truncf %270 : vector<8x8xf32> to vector<8x8xbf16>
    %272 = vector.extract_strided_slice %201 {offsets = [24, 0], sizes = [8, 8], strides = [1, 1]} : vector<32x8xbf16> to vector<8x8xbf16>
    %cst_96 = arith.constant dense<0.000000e+00> : vector<8x8xf32>
    %273 = tpu.matmul %271, %272, %cst_96 {dimension_numbers = #tpu.dot_dimension_numbers<[1], [0], [0], [1], [0, 0, 1, 1], [], []>} : vector<8x8xbf16>, vector<8x8xbf16>, vector<8x8xf32> -> vector<8x8xf32>
    %274 = arith.addf %273, %38 : vector<8x8xf32>
    %cst_97 = arith.constant dense<0xFF800000> : vector<8xf32>
    %275 = vector.multi_reduction <maximumf>, %274, %cst_97 [1] : vector<8x8xf32> to vector<8xf32>
    %276 = vector.shape_cast %275 : vector<8xf32> to vector<8x1xf32>
    %277 = vector.broadcast %276 : vector<8x1xf32> to vector<8x8xf32>
    %278 = arith.subf %274, %277 : vector<8x8xf32>
    %279 = math.exp %278 : vector<8x8xf32>
    %cst_98 = arith.constant dense<0.000000e+00> : vector<8xf32>
    %280 = vector.multi_reduction <add>, %279, %cst_98 [1] : vector<8x8xf32> to vector<8xf32>
    %281 = vector.shape_cast %280 : vector<8xf32> to vector<8x1xf32>
    %282 = tpu.reciprocal %281 {approx = true} : vector<8x1xf32> -> vector<8x1xf32>
    %283 = vector.broadcast %282 : vector<8x1xf32> to vector<8x8xf32>
    %284 = arith.mulf %279, %283 : vector<8x8xf32>
    %285 = arith.truncf %284 : vector<8x8xf32> to vector<8x8xbf16>
    %286 = vector.extract_strided_slice %202 {offsets = [0, 24], sizes = [8, 8], strides = [1, 1]} : vector<8x32xbf16> to vector<8x8xbf16>
    %cst_99 = arith.constant dense<0.000000e+00> : vector<8x8xf32>
    %287 = tpu.matmul %285, %286, %cst_99 {dimension_numbers = #tpu.dot_dimension_numbers<[1], [0], [0], [1], [0, 0, 1, 1], [], []>} : vector<8x8xbf16>, vector<8x8xbf16>, vector<8x8xf32> -> vector<8x8xf32>
    %288 = arith.truncf %287 : vector<8x8xf32> to vector<8x8xbf16>
    %289 = vector.extract_strided_slice %199 {offsets = [24, 0], sizes = [8, 32], strides = [1, 1]} : vector<32x32xbf16> to vector<8x32xbf16>
    %cst_100 = arith.constant dense<0.000000e+00> : vector<8x32xf32>
    %290 = tpu.matmul %288, %289, %cst_100 {dimension_numbers = #tpu.dot_dimension_numbers<[1], [0], [0], [1], [0, 0, 1, 1], [], []>} : vector<8x8xbf16>, vector<8x32xbf16>, vector<8x32xf32> -> vector<8x32xf32>
    %291 = arith.addf %269, %290 : vector<8x32xf32>
    %c0_101 = arith.constant 0 : index
    %c0_102 = arith.constant 0 : index
    %292 = vector.load %arg18[%c0_101, %c0_102] : memref<1x32xf32, #tpu.memory_space<vmem>>, vector<1x32xf32>
    %293 = vector.broadcast %292 : vector<1x32xf32> to vector<8x32xf32>
    %294 = arith.addf %291, %293 : vector<8x32xf32>
    %295 = arith.addf %182, %294 : vector<8x32xf32>
    %cst_103 = arith.constant dense<0.000000e+00> : vector<8xf32>
    %296 = vector.multi_reduction <add>, %295, %cst_103 [1] : vector<8x32xf32> to vector<8xf32>
    %297 = vector.shape_cast %296 : vector<8xf32> to vector<8x1xf32>
    %cst_104 = arith.constant 3.200000e+01 : f32
    %298 = vector.broadcast %cst_104 : f32 to vector<8x1xf32>
    %299 = arith.divf %297, %298 : vector<8x1xf32>
    %300 = vector.broadcast %299 : vector<8x1xf32> to vector<8x32xf32>
    %301 = arith.subf %295, %300 : vector<8x32xf32>
    %302 = arith.mulf %301, %301 : vector<8x32xf32>
    %cst_105 = arith.constant dense<0.000000e+00> : vector<8xf32>
    %303 = vector.multi_reduction <add>, %302, %cst_105 [1] : vector<8x32xf32> to vector<8xf32>
    %304 = vector.shape_cast %303 : vector<8xf32> to vector<8x1xf32>
    %cst_106 = arith.constant 3.200000e+01 : f32
    %305 = vector.broadcast %cst_106 : f32 to vector<8x1xf32>
    %306 = arith.divf %304, %305 : vector<8x1xf32>
    %307 = vector.broadcast %299 : vector<8x1xf32> to vector<8x32xf32>
    %308 = arith.subf %295, %307 : vector<8x32xf32>
    %cst_107 = arith.constant 9.99999974E-6 : f32
    %309 = vector.broadcast %cst_107 : f32 to vector<8x1xf32>
    %310 = arith.addf %306, %309 : vector<8x1xf32>
    %311 = math.rsqrt %310 : vector<8x1xf32>
    %312 = vector.broadcast %311 : vector<8x1xf32> to vector<8x32xf32>
    %313 = arith.mulf %308, %312 : vector<8x32xf32>
    %c0_108 = arith.constant 0 : index
    %c0_109 = arith.constant 0 : index
    %314 = vector.load %arg25[%c0_108, %c0_109] : memref<1x32xf32, #tpu.memory_space<vmem>>, vector<1x32xf32>
    %315 = vector.broadcast %314 : vector<1x32xf32> to vector<8x32xf32>
    %316 = arith.mulf %313, %315 : vector<8x32xf32>
    %c0_110 = arith.constant 0 : index
    %c0_111 = arith.constant 0 : index
    %317 = vector.load %arg26[%c0_110, %c0_111] : memref<1x32xf32, #tpu.memory_space<vmem>>, vector<1x32xf32>
    %318 = vector.broadcast %317 : vector<1x32xf32> to vector<8x32xf32>
    %319 = arith.addf %316, %318 : vector<8x32xf32>
    %c0_112 = arith.constant 0 : index
    %c0_113 = arith.constant 0 : index
    %320 = vector.load %arg19[%c0_112, %c0_113] : memref<32x64xbf16, #tpu.memory_space<vmem>>, vector<32x64xbf16>
    %321 = arith.truncf %319 : vector<8x32xf32> to vector<8x32xbf16>
    %cst_114 = arith.constant dense<0.000000e+00> : vector<8x64xf32>
    %322 = tpu.matmul %321, %320, %cst_114 {dimension_numbers = #tpu.dot_dimension_numbers<[1], [0], [0], [1], [0, 0, 1, 1], [], []>} : vector<8x32xbf16>, vector<32x64xbf16>, vector<8x64xf32> -> vector<8x64xf32>
    %c0_115 = arith.constant 0 : index
    %c0_116 = arith.constant 0 : index
    %323 = vector.load %arg20[%c0_115, %c0_116] : memref<1x64xf32, #tpu.memory_space<vmem>>, vector<1x64xf32>
    %324 = vector.broadcast %323 : vector<1x64xf32> to vector<8x64xf32>
    %325 = arith.addf %322, %324 : vector<8x64xf32>
    %cst_117 = arith.constant 0.000000e+00 : f32
    %326 = vector.broadcast %cst_117 : f32 to vector<8x64xf32>
    %327 = arith.maximumf %325, %326 : vector<8x64xf32>
    %c0_118 = arith.constant 0 : index
    %c0_119 = arith.constant 0 : index
    %328 = vector.load %arg21[%c0_118, %c0_119] : memref<64x32xbf16, #tpu.memory_space<vmem>>, vector<64x32xbf16>
    %329 = arith.truncf %327 : vector<8x64xf32> to vector<8x64xbf16>
    %cst_120 = arith.constant dense<0.000000e+00> : vector<8x32xf32>
    %330 = tpu.matmul %329, %328, %cst_120 {dimension_numbers = #tpu.dot_dimension_numbers<[1], [0], [0], [1], [0, 0, 1, 1], [], []>} : vector<8x64xbf16>, vector<64x32xbf16>, vector<8x32xf32> -> vector<8x32xf32>
    %c0_121 = arith.constant 0 : index
    %c0_122 = arith.constant 0 : index
    %331 = vector.load %arg22[%c0_121, %c0_122] : memref<1x32xf32, #tpu.memory_space<vmem>>, vector<1x32xf32>
    %332 = vector.broadcast %331 : vector<1x32xf32> to vector<8x32xf32>
    %333 = arith.addf %330, %332 : vector<8x32xf32>
    %334 = arith.addf %319, %333 : vector<8x32xf32>
    %cst_123 = arith.constant dense<0.000000e+00> : vector<8xf32>
    %335 = vector.multi_reduction <add>, %334, %cst_123 [1] : vector<8x32xf32> to vector<8xf32>
    %336 = vector.shape_cast %335 : vector<8xf32> to vector<8x1xf32>
    %cst_124 = arith.constant 3.200000e+01 : f32
    %337 = vector.broadcast %cst_124 : f32 to vector<8x1xf32>
    %338 = arith.divf %336, %337 : vector<8x1xf32>
    %339 = vector.broadcast %338 : vector<8x1xf32> to vector<8x32xf32>
    %340 = arith.subf %334, %339 : vector<8x32xf32>
    %341 = arith.mulf %340, %340 : vector<8x32xf32>
    %cst_125 = arith.constant dense<0.000000e+00> : vector<8xf32>
    %342 = vector.multi_reduction <add>, %341, %cst_125 [1] : vector<8x32xf32> to vector<8xf32>
    %343 = vector.shape_cast %342 : vector<8xf32> to vector<8x1xf32>
    %cst_126 = arith.constant 3.200000e+01 : f32
    %344 = vector.broadcast %cst_126 : f32 to vector<8x1xf32>
    %345 = arith.divf %343, %344 : vector<8x1xf32>
    %346 = vector.broadcast %338 : vector<8x1xf32> to vector<8x32xf32>
    %347 = arith.subf %334, %346 : vector<8x32xf32>
    %cst_127 = arith.constant 9.99999974E-6 : f32
    %348 = vector.broadcast %cst_127 : f32 to vector<8x1xf32>
    %349 = arith.addf %345, %348 : vector<8x1xf32>
    %350 = math.rsqrt %349 : vector<8x1xf32>
    %351 = vector.broadcast %350 : vector<8x1xf32> to vector<8x32xf32>
    %352 = arith.mulf %347, %351 : vector<8x32xf32>
    %c0_128 = arith.constant 0 : index
    %c0_129 = arith.constant 0 : index
    %353 = vector.load %arg27[%c0_128, %c0_129] : memref<1x32xf32, #tpu.memory_space<vmem>>, vector<1x32xf32>
    %354 = vector.broadcast %353 : vector<1x32xf32> to vector<8x32xf32>
    %355 = arith.mulf %352, %354 : vector<8x32xf32>
    %c0_130 = arith.constant 0 : index
    %c0_131 = arith.constant 0 : index
    %356 = vector.load %arg28[%c0_130, %c0_131] : memref<1x32xf32, #tpu.memory_space<vmem>>, vector<1x32xf32>
    %357 = vector.broadcast %356 : vector<1x32xf32> to vector<8x32xf32>
    %358 = arith.addf %355, %357 : vector<8x32xf32>
    %359 = arith.truncf %358 : vector<8x32xf32> to vector<8x32xbf16>
    %c0_132 = arith.constant 0 : index
    %c0_133 = arith.constant 0 : index
    %360 = vector.load %arg29[%c0_132, %c0_133] : memref<8x32xbf16, #tpu.memory_space<vmem>>, vector<8x32xbf16>
    tpu.vector_store %arg29[%c0_132, %c0_133], %359 {strides = array<i32>} : memref<8x32xbf16, #tpu.memory_space<vmem>>, vector<8x32xbf16>,
    return
  }
  func.func @transform_0(%arg0: i32) -> (i32, i32) {
    %c0_i32 = arith.constant 0 : i32
    %c0_i32_0 = arith.constant 0 : i32
    %c0_i32_1 = arith.constant 0 : i32
    return %c0_i32, %c0_i32_0 : i32, i32
  }
  func.func @transform_1(%arg0: i32) -> (i32, i32) {
    %c0_i32 = arith.constant 0 : i32
    %c0_i32_0 = arith.constant 0 : i32
    %c0_i32_1 = arith.constant 0 : i32
    return %c0_i32, %c0_i32_0 : i32, i32
  }
  func.func @transform_2(%arg0: i32) -> (i32, i32) {
    %c0_i32 = arith.constant 0 : i32
    %c0_i32_0 = arith.constant 0 : i32
    %c0_i32_1 = arith.constant 0 : i32
    return %c0_i32, %c0_i32_0 : i32, i32
  }
  func.func @transform_3(%arg0: i32) -> (i32, i32) {
    %c0_i32 = arith.constant 0 : i32
    %c0_i32_0 = arith.constant 0 : i32
    %c0_i32_1 = arith.constant 0 : i32
    return %c0_i32, %c0_i32_0 : i32, i32
  }
  func.func @transform_4(%arg0: i32) -> (i32, i32) {
    %c0_i32 = arith.constant 0 : i32
    %c0_i32_0 = arith.constant 0 : i32
    %c0_i32_1 = arith.constant 0 : i32
    return %c0_i32, %c0_i32_0 : i32, i32
  }
  func.func @transform_5(%arg0: i32) -> (i32, i32) {
    %c0_i32 = arith.constant 0 : i32
    %c0_i32_0 = arith.constant 0 : i32
    %c0_i32_1 = arith.constant 0 : i32
    return %c0_i32, %c0_i32_0 : i32, i32
  }
  func.func @transform_6(%arg0: i32) -> (i32, i32) {
    %c0_i32 = arith.constant 0 : i32
    %c0_i32_0 = arith.constant 0 : i32
    %c0_i32_1 = arith.constant 0 : i32
    return %c0_i32, %c0_i32_0 : i32, i32
  }
  func.func @transform_7(%arg0: i32) -> (i32, i32) {
    %c0_i32 = arith.constant 0 : i32
    %c0_i32_0 = arith.constant 0 : i32
    %c0_i32_1 = arith.constant 0 : i32
    return %c0_i32, %c0_i32_0 : i32, i32
  }
  func.func @transform_8(%arg0: i32) -> (i32, i32) {
    %c0_i32 = arith.constant 0 : i32
    %c0_i32_0 = arith.constant 0 : i32
    %c0_i32_1 = arith.constant 0 : i32
    return %c0_i32, %c0_i32_0 : i32, i32
  }
  func.func @transform_9(%arg0: i32) -> (i32, i32) {
    %c0_i32 = arith.constant 0 : i32
    %c0_i32_0 = arith.constant 0 : i32
    %c0_i32_1 = arith.constant 0 : i32
    return %c0_i32, %c0_i32_0 : i32, i32
  }
  func.func @transform_10(%arg0: i32) -> (i32, i32) {
    %c0_i32 = arith.constant 0 : i32
    %c0_i32_0 = arith.constant 0 : i32
    %c0_i32_1 = arith.constant 0 : i32
    return %c0_i32, %c0_i32_0 : i32, i32
  }
  func.func @transform_11(%arg0: i32) -> (i32, i32) {
    %c0_i32 = arith.constant 0 : i32
    %c0_i32_0 = arith.constant 0 : i32
    %c0_i32_1 = arith.constant 0 : i32
    return %c0_i32, %c0_i32_0 : i32, i32
  }
  func.func @transform_12(%arg0: i32) -> (i32, i32) {
    %c0_i32 = arith.constant 0 : i32
    %c0_i32_0 = arith.constant 0 : i32
    %c0_i32_1 = arith.constant 0 : i32
    return %c0_i32, %c0_i32_0 : i32, i32
  }
  func.func @transform_13(%arg0: i32) -> (i32, i32) {
    %c0_i32 = arith.constant 0 : i32
    %c0_i32_0 = arith.constant 0 : i32
    %c0_i32_1 = arith.constant 0 : i32
    return %c0_i32, %c0_i32_0 : i32, i32
  }
  func.func @transform_14(%arg0: i32) -> (i32, i32) {
    %c0_i32 = arith.constant 0 : i32
    %c0_i32_0 = arith.constant 0 : i32
    %c0_i32_1 = arith.constant 0 : i32
    return %c0_i32, %c0_i32_0 : i32, i32
  }
  func.func @transform_15(%arg0: i32) -> (i32, i32) {
    %c0_i32 = arith.constant 0 : i32
    %c0_i32_0 = arith.constant 0 : i32
    %c0_i32_1 = arith.constant 0 : i32
    return %c0_i32, %c0_i32_0 : i32, i32
  }
  func.func @transform_16(%arg0: i32) -> (i32, i32) {
    %c0_i32 = arith.constant 0 : i32
    %c0_i32_0 = arith.constant 0 : i32
    %c0_i32_1 = arith.constant 0 : i32
    return %c0_i32, %c0_i32_0 : i32, i32
  }
  func.func @transform_17(%arg0: i32) -> (i32, i32) {
    %c0_i32 = arith.constant 0 : i32
    %c0_i32_0 = arith.constant 0 : i32
    %c0_i32_1 = arith.constant 0 : i32
    return %c0_i32, %c0_i32_0 : i32, i32
  }
  func.func @transform_18(%arg0: i32) -> (i32, i32) {
    %c0_i32 = arith.constant 0 : i32
    %c0_i32_0 = arith.constant 0 : i32
    %c0_i32_1 = arith.constant 0 : i32
    return %c0_i32, %c0_i32_0 : i32, i32
  }
  func.func @transform_19(%arg0: i32) -> (i32, i32) {
    %c0_i32 = arith.constant 0 : i32
    %c0_i32_0 = arith.constant 0 : i32
    %c0_i32_1 = arith.constant 0 : i32
    return %c0_i32, %c0_i32_0 : i32, i32
  }
  func.func @transform_20(%arg0: i32) -> (i32, i32) {
    %c0_i32 = arith.constant 0 : i32
    %c0_i32_0 = arith.constant 0 : i32
    %c0_i32_1 = arith.constant 0 : i32
    return %c0_i32, %c0_i32_0 : i32, i32
  }
  func.func @transform_21(%arg0: i32) -> (i32, i32) {
    %c0_i32 = arith.constant 0 : i32
    %c0_i32_0 = arith.constant 0 : i32
    %c0_i32_1 = arith.constant 0 : i32
    return %c0_i32, %c0_i32_0 : i32, i32
  }
  func.func @transform_22(%arg0: i32) -> (i32, i32) {
    %c0_i32 = arith.constant 0 : i32
    %c0_i32_0 = arith.constant 0 : i32
    %c0_i32_1 = arith.constant 0 : i32
    return %c0_i32, %c0_i32_0 : i32, i32
  }
  func.func @transform_23(%arg0: i32) -> (i32, i32) {
    %c0_i32 = arith.constant 0 : i32
    %c0_i32_0 = arith.constant 0 : i32
    %c0_i32_1 = arith.constant 0 : i32
    return %c0_i32, %c0_i32_0 : i32, i32
  }
  func.func @transform_24(%arg0: i32) -> (i32, i32) {
    %c0_i32 = arith.constant 0 : i32
    %c0_i32_0 = arith.constant 0 : i32
    %c0_i32_1 = arith.constant 0 : i32
    return %c0_i32, %c0_i32_0 : i32, i32
  }
  func.func @transform_25(%arg0: i32) -> (i32, i32) {
    %c0_i32 = arith.constant 0 : i32
    %c0_i32_0 = arith.constant 0 : i32
    %c0_i32_1 = arith.constant 0 : i32
    return %c0_i32, %c0_i32_0 : i32, i32
  }
  func.func @transform_26(%arg0: i32) -> (i32, i32) {
    %c0_i32 = arith.constant 0 : i32
    %c0_i32_0 = arith.constant 0 : i32
    %c0_i32_1 = arith.constant 0 : i32
    return %c0_i32, %c0_i32_0 : i32, i32
  }
  func.func @transform_27(%arg0: i32) -> (i32, i32) {
    %c0_i32 = arith.constant 0 : i32
    %c0_i32_0 = arith.constant 0 : i32
    %c0_i32_1 = arith.constant 0 : i32
    return %c0_i32, %c0_i32_0 : i32, i32
  }
  func.func @transform_28(%arg0: i32) -> (i32, i32) {
    %c0_i32 = arith.constant 0 : i32
    %c0_i32_0 = arith.constant 0 : i32
    %c0_i32_1 = arith.constant 0 : i32
    return %c0_i32, %c0_i32_0 : i32, i32
  }
}

</mosaic_0001>

<llo_original>
// kernel: _forward_impl.5
$region0: #{_forward_impl.5}
  #allocation0 [shape = 'u32[]', space=smem, size = 0x4, offset = 0x4, fixed_abs, tag = 'smem constant byte address 0x4 - core index']
  #allocation1 [shape = 'u32[144,128]{1,0:T(1,128)}', space=vmem, size = 0x12000, scoped, tag = 'internal scratch']
  %s0 = inlined_call_operand.vmem [shape: bf16[8,32], index: 0, kind: input, shape index: {}]
  %s1 = inlined_call_operand.vmem [shape: bf16[32,384], index: 1, kind: input, shape index: {}]
  %s2 = inlined_call_operand.vmem [shape: f32[1,384], index: 2, kind: input, shape index: {}]
  %s3 = inlined_call_operand.vmem [shape: f32[1,384], index: 3, kind: input, shape index: {}]
  %s4 = inlined_call_operand.vmem [shape: f32[8,384], index: 4, kind: input, shape index: {}]
  %s5 = inlined_call_operand.vmem [shape: f32[1,384], index: 5, kind: output, shape index: {}]
  %s6 = sld [smem:[#allocation0]]
  $region30: #{_forward_impl.5} parent=0
    _
  %s8 = ssub.s32 1, %s6
  %s9 = scalar_select 0, %s8, %s6
  // Predicated region
  $region2: #{_forward_impl.5} parent=0 // pred_check
    _
  $region3: #{_forward_impl.5} parent=0 // pred_check_branch
    %11 = sbr.rel (0) target = $region5
  $region4: #{_forward_impl.5} parent=0 // pred_region
    _
  $region5: #{_forward_impl.5} parent=0 // pred_fallthru
    _
  // Predicated region
  $region6: #{_forward_impl.5} parent=0 // pred_check
    _
  $region7: #{_forward_impl.5} parent=0 // pred_check_branch
    %13 = sbr.rel (0) target = $region9
  $region8: #{_forward_impl.5} parent=0 // pred_region
    _
  $region9: #{_forward_impl.5} parent=0 // pred_fallthru
    _
  // Predicated region
  $region10: #{_forward_impl.5} parent=0 // pred_check
    _
  $region11: #{_forward_impl.5} parent=0 // pred_check_branch
    %15 = sbr.rel (0) target = $region13
  $region12: #{_forward_impl.5} parent=0 // pred_region
    _
  $region13: #{_forward_impl.5} parent=0 // pred_fallthru
    _
  // Predicated region
  $region14: #{_forward_impl.5} parent=0 // pred_check
    _
  $region15: #{_forward_impl.5} parent=0 // pred_check_branch
    %17 = sbr.rel (0) target = $region17
  $region16: #{_forward_impl.5} parent=0 // pred_region
    _
  $region17: #{_forward_impl.5} parent=0 // pred_fallthru
    _
  // Predicated region
  $region18: #{_forward_impl.5} parent=0 // pred_check
    _
  $region19: #{_forward_impl.5} parent=0 // pred_check_branch
    %19 = sbr.rel (0) target = $region21
  $region20: #{_forward_impl.5} parent=0 // pred_region
    _
  $region21: #{_forward_impl.5} parent=0 // pred_fallthru
    _
  %v21 = vld [vmem:[%s0] sm:$0xf]
  %v22 = vld [vmem:[%s1] sm:$0xff]
  %v23 = vld [vmem:[%s1 + $0x8] sm:$0xf]
  %v24 = vld [vmem:[%s1 + $0xc] sm:$0xff]
  %v25 = vld [vmem:[%s1 + $0x14] sm:$0xf]
  %v26 = vld [vmem:[%s1 + $0x18] sm:$0xff]
  %v27 = vld [vmem:[%s1 + $0x20] sm:$0xf]
  %v28 = vld [vmem:[%s1 + $0x24] sm:$0xff]
  %v29 = vld [vmem:[%s1 + $0x2c] sm:$0xf]
  %v30 = vld [vmem:[%s2] sm:$0x7]
  %v32 = vlaneseq
  %v33 = vshrl.u32 %v32, 7
  %v34 = vsub.s32 0, %v33
  %v35 = vrot.slane %v30, %v34
  %v36 = vlaneseq
  %v37 = vshrl.u32 %v36, 7
  %v38 = vsub.s32 1, %v37
  %v39 = vrot.slane %v30, %v38
  %v40 = vlaneseq
  %v41 = vshrl.u32 %v40, 7
  %v42 = vsub.s32 2, %v41
  %v43 = vrot.slane %v30, %v42
  %v55 = vunpack.c.l.b16 %v22
  %v56 = vunpack.c.h.b16 %v22
  %v57 = vunpack.c.l.b16 %v23
  %v58 = vunpack.c.l.b16 %v24
  %v59 = vunpack.c.h.b16 %v24
  %v60 = vunpack.c.l.b16 %v25
  %v61 = vunpack.c.l.b16 %v26
  %v62 = vunpack.c.h.b16 %v26
  %v63 = vunpack.c.l.b16 %v27
  %v64 = vunpack.c.l.b16 %v28
  %v65 = vunpack.c.h.b16 %v28
  %v66 = vunpack.c.l.b16 %v29
  %v67 = vpack.c.b16 %v58, %v55
  %v68 = vpack.c.b16 %v59, %v56
  %v69 = vpack.c.b16 %v60, %v57
  %v70 = vpack.c.b16 %v64, %v61
  %v71 = vpack.c.b16 %v65, %v62
  %v72 = vpack.c.b16 %v66, %v63
  %vm79 = vcmask 261120
  %v81 = vsel %vm79, %v21, 0
  %83 = vmatprep.subr.bf16.mxu0 %v68
  %84 = vmatpush1.bf16.msra.mxu0 %v67
  %85 = vmatprep.subr.bf16.mxu0 %v71
  %86 = vmatpush1.bf16.msra.mxu0 %v70
  %87 = vmatprep.subr.bf16.mxu0 0
  %88 = vmatpush1.bf16.msra.mxu0 0
  %89 = vmatprep.subr.bf16.mxu0 0
  %90 = vmatpush1.bf16.msra.mxu0 0
  %91 = vmatprep.subr.bf16.mxu0 0
  %92 = vmatpush1.bf16.msra.mxu0 0
  %93 = vmatprep.subr.bf16.mxu0 0
  %94 = vmatpush1.bf16.msra.mxu0 0
  %95 = vmatprep.subr.bf16.mxu0 0
  %96 = vmatpush1.bf16.msra.mxu0 0
  %97 = vmatprep.subr.bf16.mxu0 0
  %98 = vmatpush1.bf16.msra.mxu0 0
  %99 = vmatprep.subr.bf16.mxu0 0
  %100 = vmatpush1.bf16.msra.mxu0 0
  %101 = vmatprep.subr.bf16.mxu0 0
  %102 = vmatpush1.bf16.msra.mxu0 0
  %103 = vmatprep.subr.bf16.mxu0 0
  %104 = vmatpush1.bf16.msra.mxu0 0
  %105 = vmatprep.subr.bf16.mxu0 0
  %106 = vmatpush1.bf16.msra.mxu0 0
  %107 = vmatprep.subr.bf16.mxu0 0
  %108 = vmatpush1.bf16.msra.mxu0 0
  %109 = vmatprep.subr.bf16.mxu0 0
  %110 = vmatpush1.bf16.msra.mxu0 0
  %111 = vmatprep.subr.bf16.mxu0 0
  %112 = vmatpush1.bf16.msra.mxu0 0
  %113 = vmatprep.subr.bf16.mxu0 0
  %114 = vmatpush1.bf16.msra.mxu0 0
  %115 = vmatprep.mubr.bf16.mxu0 0
  %116 = vmatmul.mubr.bf16.gmra.mrb[0].mxu0 %v81
  %v117 = vpop.f32.mrb[0].mxu0
  %v118 = vadd.f32 %v35, %v117
  %v119 = vpop.f32.mrb[0].mxu0
  %v120 = vadd.f32 %v39, %v119
  %v121 = vpop.f32.mrb[0].mxu0
  %v122 = vpop.f32.mrb[0].mxu0
  %123 = vdwg.mxu0
  %124 = vmatprep.subr.bf16.mxu0 0
  %125 = vmatpush1.bf16.msra.mxu0 %v69
  %126 = vmatprep.subr.bf16.mxu0 0
  %127 = vmatpush1.bf16.msra.mxu0 %v72
  %128 = vmatprep.subr.bf16.mxu0 0
  %129 = vmatpush1.bf16.msra.mxu0 0
  %130 = vmatprep.subr.bf16.mxu0 0
  %131 = vmatpush1.bf16.msra.mxu0 0
  %132 = vmatprep.subr.bf16.mxu0 0
  %133 = vmatpush1.bf16.msra.mxu0 0
  %134 = vmatprep.subr.bf16.mxu0 0
  %135 = vmatpush1.bf16.msra.mxu0 0
  %136 = vmatprep.subr.bf16.mxu0 0
  %137 = vmatpush1.bf16.msra.mxu0 0
  %138 = vmatprep.subr.bf16.mxu0 0
  %139 = vmatpush1.bf16.msra.mxu0 0
  %140 = vmatprep.subr.bf16.mxu0 0
  %141 = vmatpush1.bf16.msra.mxu0 0
  %142 = vmatprep.subr.bf16.mxu0 0
  %143 = vmatpush1.bf16.msra.mxu0 0
  %144 = vmatprep.subr.bf16.mxu0 0
  %145 = vmatpush1.bf16.msra.mxu0 0
  %146 = vmatprep.subr.bf16.mxu0 0
  %147 = vmatpush1.bf16.msra.mxu0 0
  %148 = vmatprep.subr.bf16.mxu0 0
  %149 = vmatpush1.bf16.msra.mxu0 0
  %150 = vmatprep.subr.bf16.mxu0 0
  %151 = vmatpush1.bf16.msra.mxu0 0
  %152 = vmatprep.subr.bf16.mxu0 0
  %153 = vmatpush1.bf16.msra.mxu0 0
  %154 = vmatprep.subr.bf16.mxu0 0
  %155 = vmatpush1.bf16.msra.mxu0 0
  %156 = vmatprep.mubr.bf16.mxu0 0
  %157 = vmatmul.mubr.bf16.gmra.mrb[0].mxu0 %v81
  %v158 = vpop.f32.mrb[0].mxu0
  %v159 = vadd.f32 %v43, %v158
  %v160 = vpop.f32.mrb[0].mxu0
  %v161 = vpop.f32.mrb[0].mxu0
  %v162 = vpop.f32.mrb[0].mxu0
  %163 = vdwg.mxu0
  %v164 = vld [vmem:[%s3] sm:$0x7]
  %v166 = vlaneseq
  %v167 = vshrl.u32 %v166, 7
  %v168 = vsub.s32 0, %v167
  %v169 = vrot.slane %v164, %v168
  %v170 = vlaneseq
  %v171 = vshrl.u32 %v170, 7
  %v172 = vsub.s32 1, %v171
  %v173 = vrot.slane %v164, %v172
  %v174 = vlaneseq
  %v175 = vshrl.u32 %v174, 7
  %v176 = vsub.s32 2, %v175
  %v177 = vrot.slane %v164, %v176
  %v181 = vadd.f32 %v118, %v169
  %v182 = vadd.f32 %v120, %v173
  %v183 = vadd.f32 %v159, %v177
  %v184 = vld [vmem:[%s4] sm:$0xff]
  %v185 = vld [vmem:[%s4 + $0x8] sm:$0xff]
  %v186 = vld [vmem:[%s4 + $0x10] sm:$0xff]
  %v187 = vsub.f32 %v181, %v184
  %v188 = vsub.f32 %v182, %v185
  %v189 = vsub.f32 %v183, %v186
  %v190 = vmul.f32 %v187, %v187
  %v191 = vmul.f32 %v188, %v188
  %v192 = vmul.f32 %v189, %v189
  %v193 = vrot.slane %v190, 4
  %v194 = vadd.f32 %v190, %v193
  %v195 = vrot.slane %v194, 2
  %v196 = vadd.f32 %v194, %v195
  %v197 = vrot.slane %v196, 1
  %v198 = vadd.f32 %v196, %v197
  %v199 = vrot.slane %v191, 4
  %v200 = vadd.f32 %v191, %v199
  %v201 = vrot.slane %v200, 2
  %v202 = vadd.f32 %v200, %v201
  %v203 = vrot.slane %v202, 1
  %v204 = vadd.f32 %v202, %v203
  %v205 = vrot.slane %v192, 4
  %v206 = vadd.f32 %v192, %v205
  %v207 = vrot.slane %v206, 2
  %v208 = vadd.f32 %v206, %v207
  %v209 = vrot.slane %v208, 1
  %v210 = vadd.f32 %v208, %v209
  %v214 = vcombine.low %v198, %v204
  %v216 = vunpack.c.l.s4 1966171168
  %v217 = vunpack.c.0.s8 %v216
  %v218 = vlaneseq
  %v219 = vshrl.u32 %v218, 7
  %v220 = vsub.s32 %v217, %v219
  %v221 = vrot.slane %v214, %v220
  %v223 = vunpack.c.l.s4 1966171168
  %v224 = vunpack.c.0.s8 %v223
  %v225 = vlaneseq
  %v226 = vshrl.u32 %v225, 7
  %v227 = vsub.s32 %v224, %v226
  %v228 = vrot.slane %v210, %v227
  %v229 = vcombine.low %v221, %v228
  %v231 = vunpack.c.l.s4 1966171168
  %v232 = vunpack.c.0.s8 %v231
  %v233 = vlaneseq
  %v234 = vshrl.u32 %v233, 7
  %v235 = vsub.s32 %v232, %v234
  %v236 = vrot.slane %v229, %v235
  %v238 = vlaneseq
  %vm239 = vcmp.ge.s32.totalorder %v238, 0
  %vm240 = vcmp.lt.s32.totalorder %v238, 384
  %vm241 = vmand %vm239, %vm240
  %242 = vst.msk [vmem:[%s5] sm:$0x7] %vm241, %v236
  // Predicated region
  $region22: #{_forward_impl.5} parent=0 // pred_check
    _
  $region23: #{_forward_impl.5} parent=0 // pred_check_branch
    %244 = sbr.rel (0) target = $region25
  $region24: #{_forward_impl.5} parent=0 // pred_region
    _
  $region25: #{_forward_impl.5} parent=0 // pred_fallthru
    _
  // Predicated region
  $region26: #{_forward_impl.5} parent=0 // pred_check
    _
  $region27: #{_forward_impl.5} parent=0 // pred_check_branch
    %246 = sbr.rel (0) target = $region29
  $region28: #{_forward_impl.5} parent=0 // pred_region
    _
  $region29: #{_forward_impl.5} parent=0 // pred_fallthru
    _

// kernel: _forward_impl.3
$region0: #{_forward_impl.3}
  #allocation0 [shape = 'u32[]', space=smem, size = 0x4, offset = 0x4, fixed_abs, tag = 'smem constant byte address 0x4 - core index']
  #allocation1 [shape = 'u32[144,128]{1,0:T(1,128)}', space=vmem, size = 0x12000, scoped, tag = 'internal scratch']
  #allocation2 [shape = 'f32[8,32]{1,0:T(8,128)}', space=vmem, size = 0x1000, scoped, tag = 'scratch operand']
  %s0 = inlined_call_operand.vmem [shape: bf16[8,384], index: 0, kind: input, shape index: {}]
  %s1 = inlined_call_operand.vmem [shape: bf16[384,32], index: 1, kind: input, shape index: {}]
  %s2 = inlined_call_operand.vmem [shape: f32[8,32], index: 2, kind: output, shape index: {}]
  %s3 = sld [smem:[#allocation0]]
  $region26: #{_forward_impl.3} parent=0
    _
  %s5 = ssub.s32 1, %s3
  %s6 = scalar_select 0, %s5, %s3
  // Predicated region
  $region2: #{_forward_impl.3} parent=0 // pred_check
    _
  $region3: #{_forward_impl.3} parent=0 // pred_check_branch
    %8 = sbr.rel (0) target = $region5
  $region4: #{_forward_impl.3} parent=0 // pred_region
    _
  $region5: #{_forward_impl.3} parent=0 // pred_fallthru
    _
  // Predicated region
  $region6: #{_forward_impl.3} parent=0 // pred_check
    _
  $region7: #{_forward_impl.3} parent=0 // pred_check_branch
    %10 = sbr.rel (0) target = $region9
  $region8: #{_forward_impl.3} parent=0 // pred_region
    _
  $region9: #{_forward_impl.3} parent=0 // pred_fallthru
    _
  %p12 = scmp.eq.s32.totalorder 0, 0
  // Predicated region
  $region10: #{_forward_impl.3} parent=0 // pred_check
    %p13 = pneg %p12
  $region11: #{_forward_impl.3} parent=0 // pred_check_branch
    %15 = sbr.rel (%p13) target = $region13
  $region12: #{_forward_impl.3} parent=0 // pred_region
    %vm16 = vcmask 261120
    %17 = vst.msk [vmem:[#allocation2] sm:$0xff] %vm16, 0.0
  $region13: #{_forward_impl.3} parent=0 // pred_fallthru
    _
  %v18 = vld [vmem:[#allocation2] sm:$0xff]
  %v19 = vld [vmem:[%s0] sm:$0xff]
  %v20 = vld [vmem:[%s0 + $0x8] sm:$0xf]
  %v21 = vld [vmem:[%s1] sm:$0xf]
  %v22 = vld [vmem:[%s1 + $0x4] sm:$0xf]
  %v23 = vld [vmem:[%s1 + $0x8] sm:$0xf]
  %v24 = vld [vmem:[%s1 + $0xc] sm:$0xf]
  %v25 = vld [vmem:[%s1 + $0x10] sm:$0xf]
  %v26 = vld [vmem:[%s1 + $0x14] sm:$0xf]
  %v27 = vld [vmem:[%s1 + $0x18] sm:$0xf]
  %v28 = vld [vmem:[%s1 + $0x1c] sm:$0xf]
  %v29 = vld [vmem:[%s1 + $0x20] sm:$0xf]
  %v30 = vld [vmem:[%s1 + $0x24] sm:$0xf]
  %v31 = vld [vmem:[%s1 + $0x28] sm:$0xf]
  %v32 = vld [vmem:[%s1 + $0x2c] sm:$0xf]
  %v33 = vld [vmem:[%s1 + $0x30] sm:$0xf]
  %v34 = vld [vmem:[%s1 + $0x34] sm:$0xf]
  %v35 = vld [vmem:[%s1 + $0x38] sm:$0xf]
  %v36 = vld [vmem:[%s1 + $0x3c] sm:$0xf]
  %v37 = vld [vmem:[%s1 + $0x40] sm:$0xf]
  %v38 = vld [vmem:[%s1 + $0x44] sm:$0xf]
  %v39 = vld [vmem:[%s1 + $0x48] sm:$0xf]
  %v40 = vld [vmem:[%s1 + $0x4c] sm:$0xf]
  %v41 = vld [vmem:[%s1 + $0x50] sm:$0xf]
  %v42 = vld [vmem:[%s1 + $0x54] sm:$0xf]
  %v43 = vld [vmem:[%s1 + $0x58] sm:$0xf]
  %v44 = vld [vmem:[%s1 + $0x5c] sm:$0xf]
  %v45 = vld [vmem:[%s1 + $0x60] sm:$0xf]
  %v46 = vld [vmem:[%s1 + $0x64] sm:$0xf]
  %v47 = vld [vmem:[%s1 + $0x68] sm:$0xf]
  %v48 = vld [vmem:[%s1 + $0x6c] sm:$0xf]
  %v49 = vld [vmem:[%s1 + $0x70] sm:$0xf]
  %v50 = vld [vmem:[%s1 + $0x74] sm:$0xf]
  %v51 = vld [vmem:[%s1 + $0x78] sm:$0xf]
  %v52 = vld [vmem:[%s1 + $0x7c] sm:$0xf]
  %v53 = vld [vmem:[%s1 + $0x80] sm:$0xf]
  %v54 = vld [vmem:[%s1 + $0x84] sm:$0xf]
  %v55 = vld [vmem:[%s1 + $0x88] sm:$0xf]
  %v56 = vld [vmem:[%s1 + $0x8c] sm:$0xf]
  %v57 = vld [vmem:[%s1 + $0x90] sm:$0xf]
  %v58 = vld [vmem:[%s1 + $0x94] sm:$0xf]
  %v59 = vld [vmem:[%s1 + $0x98] sm:$0xf]
  %v60 = vld [vmem:[%s1 + $0x9c] sm:$0xf]
  %v61 = vld [vmem:[%s1 + $0xa0] sm:$0xf]
  %v62 = vld [vmem:[%s1 + $0xa4] sm:$0xf]
  %v63 = vld [vmem:[%s1 + $0xa8] sm:$0xf]
  %v64 = vld [vmem:[%s1 + $0xac] sm:$0xf]
  %v65 = vld [vmem:[%s1 + $0xb0] sm:$0xf]
  %v66 = vld [vmem:[%s1 + $0xb4] sm:$0xf]
  %v67 = vld [vmem:[%s1 + $0xb8] sm:$0xf]
  %v68 = vld [vmem:[%s1 + $0xbc] sm:$0xf]
  %v71 = vunpack.c.l.b16 %v19
  %v72 = vunpack.c.h.b16 %v19
  %v73 = vunpack.c.l.b16 %v20
  %v74 = vpack.c.b16 %v71, %v71
  %v75 = vpack.c.b16 %v72, %v72
  %v76 = vpack.c.b16 %v73, %v73
  %v128 = vunpack.c.l.b16 %v21
  %v129 = vunpack.c.l.b16 %v22
  %v130 = vunpack.c.l.b16 %v23
  %v131 = vunpack.c.l.b16 %v24
  %v132 = vunpack.c.l.b16 %v25
  %v133 = vunpack.c.l.b16 %v26
  %v134 = vunpack.c.l.b16 %v27
  %v135 = vunpack.c.l.b16 %v28
  %v136 = vunpack.c.l.b16 %v29
  %v137 = vunpack.c.l.b16 %v30
  %v138 = vunpack.c.l.b16 %v31
  %v139 = vunpack.c.l.b16 %v32
  %v140 = vunpack.c.l.b16 %v33
  %v141 = vunpack.c.l.b16 %v34
  %v142 = vunpack.c.l.b16 %v35
  %v143 = vunpack.c.l.b16 %v36
  %v144 = vunpack.c.l.b16 %v37
  %v145 = vunpack.c.l.b16 %v38
  %v146 = vunpack.c.l.b16 %v39
  %v147 = vunpack.c.l.b16 %v40
  %v148 = vunpack.c.l.b16 %v41
  %v149 = vunpack.c.l.b16 %v42
  %v150 = vunpack.c.l.b16 %v43
  %v151 = vunpack.c.l.b16 %v44
  %v152 = vunpack.c.l.b16 %v45
  %v153 = vunpack.c.l.b16 %v46
  %v154 = vunpack.c.l.b16 %v47
  %v155 = vunpack.c.l.b16 %v48
  %v156 = vunpack.c.l.b16 %v49
  %v157 = vunpack.c.l.b16 %v50
  %v158 = vunpack.c.l.b16 %v51
  %v159 = vunpack.c.l.b16 %v52
  %v160 = vunpack.c.l.b16 %v53
  %v161 = vunpack.c.l.b16 %v54
  %v162 = vunpack.c.l.b16 %v55
  %v163 = vunpack.c.l.b16 %v56
  %v164 = vunpack.c.l.b16 %v57
  %v165 = vunpack.c.l.b16 %v58
  %v166 = vunpack.c.l.b16 %v59
  %v167 = vunpack.c.l.b16 %v60
  %v168 = vunpack.c.l.b16 %v61
  %v169 = vunpack.c.l.b16 %v62
  %v170 = vunpack.c.l.b16 %v63
  %v171 = vunpack.c.l.b16 %v64
  %v172 = vunpack.c.l.b16 %v65
  %v173 = vunpack.c.l.b16 %v66
  %v174 = vunpack.c.l.b16 %v67
  %v175 = vunpack.c.l.b16 %v68
  %v176 = vpack.c.b16 %v129, %v128
  %v177 = vpack.c.b16 %v131, %v130
  %v178 = vpack.c.b16 %v133, %v132
  %v179 = vpack.c.b16 %v135, %v134
  %v180 = vpack.c.b16 %v137, %v136
  %v181 = vpack.c.b16 %v139, %v138
  %v182 = vpack.c.b16 %v141, %v140
  %v183 = vpack.c.b16 %v143, %v142
  %v184 = vpack.c.b16 %v145, %v144
  %v185 = vpack.c.b16 %v147, %v146
  %v186 = vpack.c.b16 %v149, %v148
  %v187 = vpack.c.b16 %v151, %v150
  %v188 = vpack.c.b16 %v153, %v152
  %v189 = vpack.c.b16 %v155, %v154
  %v190 = vpack.c.b16 %v157, %v156
  %v191 = vpack.c.b16 %v159, %v158
  %v192 = vpack.c.b16 %v161, %v160
  %v193 = vpack.c.b16 %v163, %v162
  %v194 = vpack.c.b16 %v165, %v164
  %v195 = vpack.c.b16 %v167, %v166
  %v196 = vpack.c.b16 %v169, %v168
  %v197 = vpack.c.b16 %v171, %v170
  %v198 = vpack.c.b16 %v173, %v172
  %v199 = vpack.c.b16 %v175, %v174
  %224 = vmatprep.subr.bf16.mxu0 0
  %225 = vmatpush1.bf16.msra.mxu0 %v176
  %226 = vmatprep.subr.bf16.mxu0 0
  %227 = vmatpush1.bf16.msra.mxu0 %v177
  %228 = vmatprep.subr.bf16.mxu0 0
  %229 = vmatpush1.bf16.msra.mxu0 %v178
  %230 = vmatprep.subr.bf16.mxu0 0
  %231 = vmatpush1.bf16.msra.mxu0 %v179
  %232 = vmatprep.subr.bf16.mxu0 0
  %233 = vmatpush1.bf16.msra.mxu0 %v180
  %234 = vmatprep.subr.bf16.mxu0 0
  %235 = vmatpush1.bf16.msra.mxu0 %v181
  %236 = vmatprep.subr.bf16.mxu0 0
  %237 = vmatpush1.bf16.msra.mxu0 %v182
  %238 = vmatprep.subr.bf16.mxu0 0
  %239 = vmatpush1.bf16.msra.mxu0 %v183
  %240 = vmatprep.subr.bf16.mxu0 0
  %241 = vmatpush1.bf16.msra.mxu0 %v184
  %242 = vmatprep.subr.bf16.mxu0 0
  %243 = vmatpush1.bf16.msra.mxu0 %v185
  %244 = vmatprep.subr.bf16.mxu0 0
  %245 = vmatpush1.bf16.msra.mxu0 %v186
  %246 = vmatprep.subr.bf16.mxu0 0
  %247 = vmatpush1.bf16.msra.mxu0 %v187
  %248 = vmatprep.subr.bf16.mxu0 0
  %249 = vmatpush1.bf16.msra.mxu0 %v188
  %250 = vmatprep.subr.bf16.mxu0 0
  %251 = vmatpush1.bf16.msra.mxu0 %v189
  %252 = vmatprep.subr.bf16.mxu0 0
  %253 = vmatpush1.bf16.msra.mxu0 %v190
  %254 = vmatprep.subr.bf16.mxu0 0
  %255 = vmatpush1.bf16.msra.mxu0 %v191
  %256 = vmatprep.mubr.bf16.mxu0 %v75
  %257 = vmatmul.mubr.bf16.gmra.mrb[0].mxu0 %v74
  %v258 = vpop.f32.mrb[0].mxu0
  %v259 = vadd.f32 0.0, %v258
  %v260 = vpop.f32.mrb[0].mxu0
  %v261 = vpop.f32.mrb[0].mxu0
  %v262 = vpop.f32.mrb[0].mxu0
  %263 = vdwg.mxu0
  %264 = vmatprep.subr.bf16.mxu0 0
  %265 = vmatpush1.bf16.msra.mxu0 %v192
  %266 = vmatprep.subr.bf16.mxu0 0
  %267 = vmatpush1.bf16.msra.mxu0 %v193
  %268 = vmatprep.subr.bf16.mxu0 0
  %269 = vmatpush1.bf16.msra.mxu0 %v194
  %270 = vmatprep.subr.bf16.mxu0 0
  %271 = vmatpush1.bf16.msra.mxu0 %v195
  %272 = vmatprep.subr.bf16.mxu0 0
  %273 = vmatpush1.bf16.msra.mxu0 %v196
  %274 = vmatprep.subr.bf16.mxu0 0
  %275 = vmatpush1.bf16.msra.mxu0 %v197
  %276 = vmatprep.subr.bf16.mxu0 0
  %277 = vmatpush1.bf16.msra.mxu0 %v198
  %278 = vmatprep.subr.bf16.mxu0 0
  %279 = vmatpush1.bf16.msra.mxu0 %v199
  %280 = vmatprep.subr.bf16.mxu0 0
  %281 = vmatpush1.bf16.msra.mxu0 0
  %282 = vmatprep.subr.bf16.mxu0 0
  %283 = vmatpush1.bf16.msra.mxu0 0
  %284 = vmatprep.subr.bf16.mxu0 0
  %285 = vmatpush1.bf16.msra.mxu0 0
  %286 = vmatprep.subr.bf16.mxu0 0
  %287 = vmatpush1.bf16.msra.mxu0 0
  %288 = vmatprep.subr.bf16.mxu0 0
  %289 = vmatpush1.bf16.msra.mxu0 0
  %290 = vmatprep.subr.bf16.mxu0 0
  %291 = vmatpush1.bf16.msra.mxu0 0
  %292 = vmatprep.subr.bf16.mxu0 0
  %293 = vmatpush1.bf16.msra.mxu0 0
  %294 = vmatprep.subr.bf16.mxu0 0
  %295 = vmatpush1.bf16.msra.mxu0 0
  %296 = vmatprep.mubr.bf16.mxu0 0
  %297 = vmatmul.mubr.bf16.gmra.mrb[0].mxu0 %v76
  %v298 = vpop.f32.mrb[0].mxu0
  %v299 = vadd.f32 %v259, %v298
  %v300 = vpop.f32.mrb[0].mxu0
  %v301 = vpop.f32.mrb[0].mxu0
  %v302 = vpop.f32.mrb[0].mxu0
  %303 = vdwg.mxu0
  %v304 = vadd.f32 %v18, %v299
  %vm305 = vcmask 261120
  %306 = vst.msk [vmem:[#allocation2] sm:$0xff] %vm305, %v304
  // Predicated region
  $region14: #{_forward_impl.3} parent=0 // pred_check
    %p307 = pneg %p12
  $region15: #{_forward_impl.3} parent=0 // pred_check_branch
    %309 = sbr.rel (%p307) target = $region17
  $region16: #{_forward_impl.3} parent=0 // pred_region
    %v310 = vld [vmem:[#allocation2] sm:$0xff]
    %311 = vst.msk [vmem:[%s2] sm:$0xff] %vm305, %v310
  $region17: #{_forward_impl.3} parent=0 // pred_fallthru
    _
  // Predicated region
  $region18: #{_forward_impl.3} parent=0 // pred_check
    _
  $region19: #{_forward_impl.3} parent=0 // pred_check_branch
    %313 = sbr.rel (0) target = $region21
  $region20: #{_forward_impl.3} parent=0 // pred_region
    _
  $region21: #{_forward_impl.3} parent=0 // pred_fallthru
    _
  // Predicated region
  $region22: #{_forward_impl.3} parent=0 // pred_check
    _
  $region23: #{_forward_impl.3} parent=0 // pred_check_branch
    %315 = sbr.rel (0) target = $region25
  $region24: #{_forward_impl.3} parent=0 // pred_region
    _
  $region25: #{_forward_impl.3} parent=0 // pred_fallthru
    _

// kernel: _forward_impl.4
$region0: #{_forward_impl.4}
  #allocation0 [shape = 'u32[]', space=smem, size = 0x4, offset = 0x4, fixed_abs, tag = 'smem constant byte address 0x4 - core index']
  #allocation1 [shape = 'u32[144,128]{1,0:T(1,128)}', space=vmem, size = 0x12000, scoped, tag = 'internal scratch']
  %s0 = inlined_call_operand.vmem [shape: f32[1,3], index: 0, kind: input, shape index: {}]
  %s1 = inlined_call_operand.vmem [shape: bf16[3,32], index: 1, kind: input, shape index: {}]
  %s2 = inlined_call_operand.vmem [shape: bf16[8,768], index: 2, kind: input, shape index: {}]
  %s3 = inlined_call_operand.vmem [shape: bf16[768,32], index: 3, kind: input, shape index: {}]
  %s4 = inlined_call_operand.vmem [shape: f32[1,32], index: 4, kind: input, shape index: {}]
  %s5 = inlined_call_operand.vmem [shape: f32[8,32], index: 5, kind: input, shape index: {}]
  %s6 = inlined_call_operand.vmem [shape: f32[1,32], index: 6, kind: input, shape index: {}]
  %s7 = inlined_call_operand.vmem [shape: f32[8,32], index: 7, kind: input, shape index: {}]
  %s8 = inlined_call_operand.vmem [shape: bf16[32,96], index: 8, kind: input, shape index: {}]
  %s9 = inlined_call_operand.vmem [shape: f32[1,96], index: 9, kind: input, shape index: {}]
  %s10 = inlined_call_operand.vmem [shape: bf16[32,32], index: 10, kind: input, shape index: {}]
  %s11 = inlined_call_operand.vmem [shape: f32[1,32], index: 11, kind: input, shape index: {}]
  %s12 = inlined_call_operand.vmem [shape: bf16[32,32], index: 12, kind: input, shape index: {}]
  %s13 = inlined_call_operand.vmem [shape: f32[1,32], index: 13, kind: input, shape index: {}]
  %s14 = inlined_call_operand.vmem [shape: bf16[32,64], index: 14, kind: input, shape index: {}]
  %s15 = inlined_call_operand.vmem [shape: f32[1,64], index: 15, kind: input, shape index: {}]
  %s16 = inlined_call_operand.vmem [shape: bf16[32,32], index: 16, kind: input, shape index: {}]
  %s17 = inlined_call_operand.vmem [shape: f32[1,32], index: 17, kind: input, shape index: {}]
  %s18 = inlined_call_operand.vmem [shape: bf16[32,64], index: 18, kind: input, shape index: {}]
  %s19 = inlined_call_operand.vmem [shape: f32[1,64], index: 19, kind: input, shape index: {}]
  %s20 = inlined_call_operand.vmem [shape: bf16[64,32], index: 20, kind: input, shape index: {}]
  %s21 = inlined_call_operand.vmem [shape: f32[1,32], index: 21, kind: input, shape index: {}]
  %s22 = inlined_call_operand.vmem [shape: f32[1,32], index: 22, kind: input, shape index: {}]
  %s23 = inlined_call_operand.vmem [shape: f32[1,32], index: 23, kind: input, shape index: {}]
  %s24 = inlined_call_operand.vmem [shape: f32[1,32], index: 24, kind: input, shape index: {}]
  %s25 = inlined_call_operand.vmem [shape: f32[1,32], index: 25, kind: input, shape index: {}]
  %s26 = inlined_call_operand.vmem [shape: f32[1,32], index: 26, kind: input, shape index: {}]
  %s27 = inlined_call_operand.vmem [shape: f32[1,32], index: 27, kind: input, shape index: {}]
  %s28 = inlined_call_operand.vmem [shape: bf16[8,32], index: 28, kind: output, shape index: {}]
  %s29 = sld [smem:[#allocation0]]
  $region122: #{_forward_impl.4} parent=0
    _
  %s31 = ssub.s32 1, %s29
  %s32 = scalar_select 0, %s31, %s29
  // Predicated region
  $region2: #{_forward_impl.4} parent=0 // pred_check
    _
  $region3: #{_forward_impl.4} parent=0 // pred_check_branch
    %34 = sbr.rel (0) target = $region5
  $region4: #{_forward_impl.4} parent=0 // pred_region
    _
  $region5: #{_forward_impl.4} parent=0 // pred_fallthru
    _
  // Predicated region
  $region6: #{_forward_impl.4} parent=0 // pred_check
    _
  $region7: #{_forward_impl.4} parent=0 // pred_check_branch
    %36 = sbr.rel (0) target = $region9
  $region8: #{_forward_impl.4} parent=0 // pred_region
    _
  $region9: #{_forward_impl.4} parent=0 // pred_fallthru
    _
  // Predicated region
  $region10: #{_forward_impl.4} parent=0 // pred_check
    _
  $region11: #{_forward_impl.4} parent=0 // pred_check_branch
    %38 = sbr.rel (0) target = $region13
  $region12: #{_forward_impl.4} parent=0 // pred_region
    _
  $region13: #{_forward_impl.4} parent=0 // pred_fallthru
    _
  // Predicated region
  $region14: #{_forward_impl.4} parent=0 // pred_check
    _
  $region15: #{_forward_impl.4} parent=0 // pred_check_branch
    %40 = sbr.rel (0) target = $region17
  $region16: #{_forward_impl.4} parent=0 // pred_region
    _
  $region17: #{_forward_impl.4} parent=0 // pred_fallthru
    _
  // Predicated region
  $region18: #{_forward_impl.4} parent=0 // pred_check
    _
  $region19: #{_forward_impl.4} parent=0 // pred_check_branch
    %42 = sbr.rel (0) target = $region21
  $region20: #{_forward_impl.4} parent=0 // pred_region
    _
  $region21: #{_forward_impl.4} parent=0 // pred_fallthru
    _
  // Predicated region
  $region22: #{_forward_impl.4} parent=0 // pred_check
    _
  $region23: #{_forward_impl.4} parent=0 // pred_check_branch
    %44 = sbr.rel (0) target = $region25
  $region24: #{_forward_impl.4} parent=0 // pred_region
    _
  $region25: #{_forward_impl.4} parent=0 // pred_fallthru
    _
  // Predicated region
  $region26: #{_forward_impl.4} parent=0 // pred_check
    _
  $region27: #{_forward_impl.4} parent=0 // pred_check_branch
    %46 = sbr.rel (0) target = $region29
  $region28: #{_forward_impl.4} parent=0 // pred_region
    _
  $region29: #{_forward_impl.4} parent=0 // pred_fallthru
    _
  // Predicated region
  $region30: #{_forward_impl.4} parent=0 // pred_check
    _
  $region31: #{_forward_impl.4} parent=0 // pred_check_branch
    %48 = sbr.rel (0) target = $region33
  $region32: #{_forward_impl.4} parent=0 // pred_region
    _
  $region33: #{_forward_impl.4} parent=0 // pred_fallthru
    _
  // Predicated region
  $region34: #{_forward_impl.4} parent=0 // pred_check
    _
  $region35: #{_forward_impl.4} parent=0 // pred_check_branch
    %50 = sbr.rel (0) target = $region37
  $region36: #{_forward_impl.4} parent=0 // pred_region
    _
  $region37: #{_forward_impl.4} parent=0 // pred_fallthru
    _
  // Predicated region
  $region38: #{_forward_impl.4} parent=0 // pred_check
    _
  $region39: #{_forward_impl.4} parent=0 // pred_check_branch
    %52 = sbr.rel (0) target = $region41
  $region40: #{_forward_impl.4} parent=0 // pred_region
    _
  $region41: #{_forward_impl.4} parent=0 // pred_fallthru
    _
  // Predicated region
  $region42: #{_forward_impl.4} parent=0 // pred_check
    _
  $region43: #{_forward_impl.4} parent=0 // pred_check_branch
    %54 = sbr.rel (0) target = $region45
  $region44: #{_forward_impl.4} parent=0 // pred_region
    _
  $region45: #{_forward_impl.4} parent=0 // pred_fallthru
    _
  // Predicated region
  $region46: #{_forward_impl.4} parent=0 // pred_check
    _
  $region47: #{_forward_impl.4} parent=0 // pred_check_branch
    %56 = sbr.rel (0) target = $region49
  $region48: #{_forward_impl.4} parent=0 // pred_region
    _
  $region49: #{_forward_impl.4} parent=0 // pred_fallthru
    _
  // Predicated region
  $region50: #{_forward_impl.4} parent=0 // pred_check
    _
  $region51: #{_forward_impl.4} parent=0 // pred_check_branch
    %58 = sbr.rel (0) target = $region53
  $region52: #{_forward_impl.4} parent=0 // pred_region
    _
  $region53: #{_forward_impl.4} parent=0 // pred_fallthru
    _
  // Predicated region
  $region54: #{_forward_impl.4} parent=0 // pred_check
    _
  $region55: #{_forward_impl.4} parent=0 // pred_check_branch
    %60 = sbr.rel (0) target = $region57
  $region56: #{_forward_impl.4} parent=0 // pred_region
    _
  $region57: #{_forward_impl.4} parent=0 // pred_fallthru
    _
  // Predicated region
  $region58: #{_forward_impl.4} parent=0 // pred_check
    _
  $region59: #{_forward_impl.4} parent=0 // pred_check_branch
    %62 = sbr.rel (0) target = $region61
  $region60: #{_forward_impl.4} parent=0 // pred_region
    _
  $region61: #{_forward_impl.4} parent=0 // pred_fallthru
    _
  // Predicated region
  $region62: #{_forward_impl.4} parent=0 // pred_check
    _
  $region63: #{_forward_impl.4} parent=0 // pred_check_branch
    %64 = sbr.rel (0) target = $region65
  $region64: #{_forward_impl.4} parent=0 // pred_region
    _
  $region65: #{_forward_impl.4} parent=0 // pred_fallthru
    _
  // Predicated region
  $region66: #{_forward_impl.4} parent=0 // pred_check
    _
  $region67: #{_forward_impl.4} parent=0 // pred_check_branch
    %66 = sbr.rel (0) target = $region69
  $region68: #{_forward_impl.4} parent=0 // pred_region
    _
  $region69: #{_forward_impl.4} parent=0 // pred_fallthru
    _
  // Predicated region
  $region70: #{_forward_impl.4} parent=0 // pred_check
    _
  $region71: #{_forward_impl.4} parent=0 // pred_check_branch
    %68 = sbr.rel (0) target = $region73
  $region72: #{_forward_impl.4} parent=0 // pred_region
    _
  $region73: #{_forward_impl.4} parent=0 // pred_fallthru
    _
  // Predicated region
  $region74: #{_forward_impl.4} parent=0 // pred_check
    _
  $region75: #{_forward_impl.4} parent=0 // pred_check_branch
    %70 = sbr.rel (0) target = $region77
  $region76: #{_forward_impl.4} parent=0 // pred_region
    _
  $region77: #{_forward_impl.4} parent=0 // pred_fallthru
    _
  // Predicated region
  $region78: #{_forward_impl.4} parent=0 // pred_check
    _
  $region79: #{_forward_impl.4} parent=0 // pred_check_branch
    %72 = sbr.rel (0) target = $region81
  $region80: #{_forward_impl.4} parent=0 // pred_region
    _
  $region81: #{_forward_impl.4} parent=0 // pred_fallthru
    _
  // Predicated region
  $region82: #{_forward_impl.4} parent=0 // pred_check
    _
  $region83: #{_forward_impl.4} parent=0 // pred_check_branch
    %74 = sbr.rel (0) target = $region85
  $region84: #{_forward_impl.4} parent=0 // pred_region
    _
  $region85: #{_forward_impl.4} parent=0 // pred_fallthru
    _
  // Predicated region
  $region86: #{_forward_impl.4} parent=0 // pred_check
    _
  $region87: #{_forward_impl.4} parent=0 // pred_check_branch
    %76 = sbr.rel (0) target = $region89
  $region88: #{_forward_impl.4} parent=0 // pred_region
    _
  $region89: #{_forward_impl.4} parent=0 // pred_fallthru
    _
  // Predicated region
  $region90: #{_forward_impl.4} parent=0 // pred_check
    _
  $region91: #{_forward_impl.4} parent=0 // pred_check_branch
    %78 = sbr.rel (0) target = $region93
  $region92: #{_forward_impl.4} parent=0 // pred_region
    _
  $region93: #{_forward_impl.4} parent=0 // pred_fallthru
    _
  // Predicated region
  $region94: #{_forward_impl.4} parent=0 // pred_check
    _
  $region95: #{_forward_impl.4} parent=0 // pred_check_branch
    %80 = sbr.rel (0) target = $region97
  $region96: #{_forward_impl.4} parent=0 // pred_region
    _
  $region97: #{_forward_impl.4} parent=0 // pred_fallthru
    _
  // Predicated region
  $region98: #{_forward_impl.4} parent=0 // pred_check
    _
  $region99: #{_forward_impl.4} parent=0 // pred_check_branch
    %82 = sbr.rel (0) target = $region101
  $region100: #{_forward_impl.4} parent=0 // pred_region
    _
  $region101: #{_forward_impl.4} parent=0 // pred_fallthru
    _
  // Predicated region
  $region102: #{_forward_impl.4} parent=0 // pred_check
    _
  $region103: #{_forward_impl.4} parent=0 // pred_check_branch
    %84 = sbr.rel (0) target = $region105
  $region104: #{_forward_impl.4} parent=0 // pred_region
    _
  $region105: #{_forward_impl.4} parent=0 // pred_fallthru
    _
  // Predicated region
  $region106: #{_forward_impl.4} parent=0 // pred_check
    _
  $region107: #{_forward_impl.4} parent=0 // pred_check_branch
    %86 = sbr.rel (0) target = $region109
  $region108: #{_forward_impl.4} parent=0 // pred_region
    _
  $region109: #{_forward_impl.4} parent=0 // pred_fallthru
    _
  // Predicated region
  $region110: #{_forward_impl.4} parent=0 // pred_check
    _
  $region111: #{_forward_impl.4} parent=0 // pred_check_branch
    %88 = sbr.rel (0) target = $region113
  $region112: #{_forward_impl.4} parent=0 // pred_region
    _
  $region113: #{_forward_impl.4} parent=0 // pred_fallthru
    _
  %v90 = vld [vmem:[%s0] sm:$0x1]
  %v91 = vld [vmem:[%s1] sm:$0x3]
  %v92 = vpack.c.bf16 %v90, %v90
  %vm93 = vcmask 23552
  %v95 = vsel %vm93, %v92, 0
  %vm97 = vcmask 1040384
  %vm98 = vcmask 1041408
  %v99 = vsel %vm97, 4294967295, 65535
  %v100 = vsel %vm98, %v99, 0
  %v102 = vand.u32 %v91, %v100
  %104 = vmatprep.subr.bf16.mxu0 0
  %105 = vmatpush1.bf16.msra.mxu0 %v102
  %106 = vmatprep.subr.bf16.mxu0 0
  %107 = vmatpush1.bf16.msra.mxu0 0
  %108 = vmatprep.subr.bf16.mxu0 0
  %109 = vmatpush1.bf16.msra.mxu0 0
  %110 = vmatprep.subr.bf16.mxu0 0
  %111 = vmatpush1.bf16.msra.mxu0 0
  %112 = vmatprep.subr.bf16.mxu0 0
  %113 = vmatpush1.bf16.msra.mxu0 0
  %114 = vmatprep.subr.bf16.mxu0 0
  %115 = vmatpush1.bf16.msra.mxu0 0
  %116 = vmatprep.subr.bf16.mxu0 0
  %117 = vmatpush1.bf16.msra.mxu0 0
  %118 = vmatprep.subr.bf16.mxu0 0
  %119 = vmatpush1.bf16.msra.mxu0 0
  %120 = vmatprep.subr.bf16.mxu0 0
  %121 = vmatpush1.bf16.msra.mxu0 0
  %122 = vmatprep.subr.bf16.mxu0 0
  %123 = vmatpush1.bf16.msra.mxu0 0
  %124 = vmatprep.subr.bf16.mxu0 0
  %125 = vmatpush1.bf16.msra.mxu0 0
  %126 = vmatprep.subr.bf16.mxu0 0
  %127 = vmatpush1.bf16.msra.mxu0 0
  %128 = vmatprep.subr.bf16.mxu0 0
  %129 = vmatpush1.bf16.msra.mxu0 0
  %130 = vmatprep.subr.bf16.mxu0 0
  %131 = vmatpush1.bf16.msra.mxu0 0
  %132 = vmatprep.subr.bf16.mxu0 0
  %133 = vmatpush1.bf16.msra.mxu0 0
  %134 = vmatprep.subr.bf16.mxu0 0
  %135 = vmatpush1.bf16.msra.mxu0 0
  %136 = vmatprep.mubr.bf16.mxu0 0
  %137 = vmatmul.mubr.bf16.gmra.mrb[0].mxu0 %v95
  %v138 = vpop.f32.mrb[0].mxu0
  %v139 = vadd.f32 0.0, %v138
  %v140 = vpop.f32.mrb[0].mxu0
  %v141 = vpop.f32.mrb[0].mxu0
  %v142 = vpop.f32.mrb[0].mxu0
  %143 = vdwg.mxu0
  %v144 = vld [vmem:[%s2] sm:$0xff]
  %v145 = vld [vmem:[%s2 + $0x8] sm:$0xff]
  %v146 = vld [vmem:[%s2 + $0x10] sm:$0xff]
  %v147 = vld [vmem:[%s3] sm:$0xf]
  %v148 = vld [vmem:[%s3 + $0x4] sm:$0xf]
  %v149 = vld [vmem:[%s3 + $0x8] sm:$0xf]
  %v150 = vld [vmem:[%s3 + $0xc] sm:$0xf]
  %v151 = vld [vmem:[%s3 + $0x10] sm:$0xf]
  %v152 = vld [vmem:[%s3 + $0x14] sm:$0xf]
  %v153 = vld [vmem:[%s3 + $0x18] sm:$0xf]
  %v154 = vld [vmem:[%s3 + $0x1c] sm:$0xf]
  %v155 = vld [vmem:[%s3 + $0x20] sm:$0xf]
  %v156 = vld [vmem:[%s3 + $0x24] sm:$0xf]
  %v157 = vld [vmem:[%s3 + $0x28] sm:$0xf]
  %v158 = vld [vmem:[%s3 + $0x2c] sm:$0xf]
  %v159 = vld [vmem:[%s3 + $0x30] sm:$0xf]
  %v160 = vld [vmem:[%s3 + $0x34] sm:$0xf]
  %v161 = vld [vmem:[%s3 + $0x38] sm:$0xf]
  %v162 = vld [vmem:[%s3 + $0x3c] sm:$0xf]
  %v163 = vld [vmem:[%s3 + $0x40] sm:$0xf]
  %v164 = vld [vmem:[%s3 + $0x44] sm:$0xf]
  %v165 = vld [vmem:[%s3 + $0x48] sm:$0xf]
  %v166 = vld [vmem:[%s3 + $0x4c] sm:$0xf]
  %v167 = vld [vmem:[%s3 + $0x50] sm:$0xf]
  %v168 = vld [vmem:[%s3 + $0x54] sm:$0xf]
  %v169 = vld [vmem:[%s3 + $0x58] sm:$0xf]
  %v170 = vld [vmem:[%s3 + $0x5c] sm:$0xf]
  %v171 = vld [vmem:[%s3 + $0x60] sm:$0xf]
  %v172 = vld [vmem:[%s3 + $0x64] sm:$0xf]
  %v173 = vld [vmem:[%s3 + $0x68] sm:$0xf]
  %v174 = vld [vmem:[%s3 + $0x6c] sm:$0xf]
  %v175 = vld [vmem:[%s3 + $0x70] sm:$0xf]
  %v176 = vld [vmem:[%s3 + $0x74] sm:$0xf]
  %v177 = vld [vmem:[%s3 + $0x78] sm:$0xf]
  %v178 = vld [vmem:[%s3 + $0x7c] sm:$0xf]
  %v179 = vld [vmem:[%s3 + $0x80] sm:$0xf]
  %v180 = vld [vmem:[%s3 + $0x84] sm:$0xf]
  %v181 = vld [vmem:[%s3 + $0x88] sm:$0xf]
  %v182 = vld [vmem:[%s3 + $0x8c] sm:$0xf]
  %v183 = vld [vmem:[%s3 + $0x90] sm:$0xf]
  %v184 = vld [vmem:[%s3 + $0x94] sm:$0xf]
  %v185 = vld [vmem:[%s3 + $0x98] sm:$0xf]
  %v186 = vld [vmem:[%s3 + $0x9c] sm:$0xf]
  %v187 = vld [vmem:[%s3 + $0xa0] sm:$0xf]
  %v188 = vld [vmem:[%s3 + $0xa4] sm:$0xf]
  %v189 = vld [vmem:[%s3 + $0xa8] sm:$0xf]
  %v190 = vld [vmem:[%s3 + $0xac] sm:$0xf]
  %v191 = vld [vmem:[%s3 + $0xb0] sm:$0xf]
  %v192 = vld [vmem:[%s3 + $0xb4] sm:$0xf]
  %v193 = vld [vmem:[%s3 + $0xb8] sm:$0xf]
  %v194 = vld [vmem:[%s3 + $0xbc] sm:$0xf]
  %v195 = vld [vmem:[%s3 + $0xc0] sm:$0xf]
  %v196 = vld [vmem:[%s3 + $0xc4] sm:$0xf]
  %v197 = vld [vmem:[%s3 + $0xc8] sm:$0xf]
  %v198 = vld [vmem:[%s3 + $0xcc] sm:$0xf]
  %v199 = vld [vmem:[%s3 + $0xd0] sm:$0xf]
  %v200 = vld [vmem:[%s3 + $0xd4] sm:$0xf]
  %v201 = vld [vmem:[%s3 + $0xd8] sm:$0xf]
  %v202 = vld [vmem:[%s3 + $0xdc] sm:$0xf]
  %v203 = vld [vmem:[%s3 + $0xe0] sm:$0xf]
  %v204 = vld [vmem:[%s3 + $0xe4] sm:$0xf]
  %v205 = vld [vmem:[%s3 + $0xe8] sm:$0xf]
  %v206 = vld [vmem:[%s3 + $0xec] sm:$0xf]
  %v207 = vld [vmem:[%s3 + $0xf0] sm:$0xf]
  %v208 = vld [vmem:[%s3 + $0xf4] sm:$0xf]
  %v209 = vld [vmem:[%s3 + $0xf8] sm:$0xf]
  %v210 = vld [vmem:[%s3 + $0xfc] sm:$0xf]
  %v211 = vld [vmem:[%s3 + $0x100] sm:$0xf]
  %v212 = vld [vmem:[%s3 + $0x104] sm:$0xf]
  %v213 = vld [vmem:[%s3 + $0x108] sm:$0xf]
  %v214 = vld [vmem:[%s3 + $0x10c] sm:$0xf]
  %v215 = vld [vmem:[%s3 + $0x110] sm:$0xf]
  %v216 = vld [vmem:[%s3 + $0x114] sm:$0xf]
  %v217 = vld [vmem:[%s3 + $0x118] sm:$0xf]
  %v218 = vld [vmem:[%s3 + $0x11c] sm:$0xf]
  %v219 = vld [vmem:[%s3 + $0x120] sm:$0xf]
  %v220 = vld [vmem:[%s3 + $0x124] sm:$0xf]
  %v221 = vld [vmem:[%s3 + $0x128] sm:$0xf]
  %v222 = vld [vmem:[%s3 + $0x12c] sm:$0xf]
  %v223 = vld [vmem:[%s3 + $0x130] sm:$0xf]
  %v224 = vld [vmem:[%s3 + $0x134] sm:$0xf]
  %v225 = vld [vmem:[%s3 + $0x138] sm:$0xf]
  %v226 = vld [vmem:[%s3 + $0x13c] sm:$0xf]
  %v227 = vld [vmem:[%s3 + $0x140] sm:$0xf]
  %v228 = vld [vmem:[%s3 + $0x144] sm:$0xf]
  %v229 = vld [vmem:[%s3 + $0x148] sm:$0xf]
  %v230 = vld [vmem:[%s3 + $0x14c] sm:$0xf]
  %v231 = vld [vmem:[%s3 + $0x150] sm:$0xf]
  %v232 = vld [vmem:[%s3 + $0x154] sm:$0xf]
  %v233 = vld [vmem:[%s3 + $0x158] sm:$0xf]
  %v234 = vld [vmem:[%s3 + $0x15c] sm:$0xf]
  %v235 = vld [vmem:[%s3 + $0x160] sm:$0xf]
  %v236 = vld [vmem:[%s3 + $0x164] sm:$0xf]
  %v237 = vld [vmem:[%s3 + $0x168] sm:$0xf]
  %v238 = vld [vmem:[%s3 + $0x16c] sm:$0xf]
  %v239 = vld [vmem:[%s3 + $0x170] sm:$0xf]
  %v240 = vld [vmem:[%s3 + $0x174] sm:$0xf]
  %v241 = vld [vmem:[%s3 + $0x178] sm:$0xf]
  %v242 = vld [vmem:[%s3 + $0x17c] sm:$0xf]
  %v243 = vld [vmem:[%s4] sm:$0x1]
  %v245 = vlaneseq
  %v246 = vshrl.u32 %v245, 7
  %v247 = vsub.s32 0, %v246
  %v248 = vrot.slane %v243, %v247
  %v253 = vunpack.c.l.b16 %v144
  %v254 = vunpack.c.h.b16 %v144
  %v255 = vunpack.c.l.b16 %v145
  %v256 = vunpack.c.h.b16 %v145
  %v257 = vunpack.c.l.b16 %v146
  %v258 = vunpack.c.h.b16 %v146
  %v259 = vpack.c.b16 %v253, %v253
  %v260 = vpack.c.b16 %v254, %v254
  %v261 = vpack.c.b16 %v255, %v255
  %v262 = vpack.c.b16 %v256, %v256
  %v263 = vpack.c.b16 %v257, %v257
  %v264 = vpack.c.b16 %v258, %v258
  %v367 = vunpack.c.l.b16 %v147
  %v368 = vunpack.c.l.b16 %v148
  %v369 = vunpack.c.l.b16 %v149
  %v370 = vunpack.c.l.b16 %v150
  %v371 = vunpack.c.l.b16 %v151
  %v372 = vunpack.c.l.b16 %v152
  %v373 = vunpack.c.l.b16 %v153
  %v374 = vunpack.c.l.b16 %v154
  %v375 = vunpack.c.l.b16 %v155
  %v376 = vunpack.c.l.b16 %v156
  %v377 = vunpack.c.l.b16 %v157
  %v378 = vunpack.c.l.b16 %v158
  %v379 = vunpack.c.l.b16 %v159
  %v380 = vunpack.c.l.b16 %v160
  %v381 = vunpack.c.l.b16 %v161
  %v382 = vunpack.c.l.b16 %v162
  %v383 = vunpack.c.l.b16 %v163
  %v384 = vunpack.c.l.b16 %v164
  %v385 = vunpack.c.l.b16 %v165
  %v386 = vunpack.c.l.b16 %v166
  %v387 = vunpack.c.l.b16 %v167
  %v388 = vunpack.c.l.b16 %v168
  %v389 = vunpack.c.l.b16 %v169
  %v390 = vunpack.c.l.b16 %v170
  %v391 = vunpack.c.l.b16 %v171
  %v392 = vunpack.c.l.b16 %v172
  %v393 = vunpack.c.l.b16 %v173
  %v394 = vunpack.c.l.b16 %v174
  %v395 = vunpack.c.l.b16 %v175
  %v396 = vunpack.c.l.b16 %v176
  %v397 = vunpack.c.l.b16 %v177
  %v398 = vunpack.c.l.b16 %v178
  %v399 = vunpack.c.l.b16 %v179
  %v400 = vunpack.c.l.b16 %v180
  %v401 = vunpack.c.l.b16 %v181
  %v402 = vunpack.c.l.b16 %v182
  %v403 = vunpack.c.l.b16 %v183
  %v404 = vunpack.c.l.b16 %v184
  %v405 = vunpack.c.l.b16 %v185
  %v406 = vunpack.c.l.b16 %v186
  %v407 = vunpack.c.l.b16 %v187
  %v408 = vunpack.c.l.b16 %v188
  %v409 = vunpack.c.l.b16 %v189
  %v410 = vunpack.c.l.b16 %v190
  %v411 = vunpack.c.l.b16 %v191
  %v412 = vunpack.c.l.b16 %v192
  %v413 = vunpack.c.l.b16 %v193
  %v414 = vunpack.c.l.b16 %v194
  %v415 = vunpack.c.l.b16 %v195
  %v416 = vunpack.c.l.b16 %v196
  %v417 = vunpack.c.l.b16 %v197
  %v418 = vunpack.c.l.b16 %v198
  %v419 = vunpack.c.l.b16 %v199
  %v420 = vunpack.c.l.b16 %v200
  %v421 = vunpack.c.l.b16 %v201
  %v422 = vunpack.c.l.b16 %v202
  %v423 = vunpack.c.l.b16 %v203
  %v424 = vunpack.c.l.b16 %v204
  %v425 = vunpack.c.l.b16 %v205
  %v426 = vunpack.c.l.b16 %v206
  %v427 = vunpack.c.l.b16 %v207
  %v428 = vunpack.c.l.b16 %v208
  %v429 = vunpack.c.l.b16 %v209
  %v430 = vunpack.c.l.b16 %v210
  %v431 = vunpack.c.l.b16 %v211
  %v432 = vunpack.c.l.b16 %v212
  %v433 = vunpack.c.l.b16 %v213
  %v434 = vunpack.c.l.b16 %v214
  %v435 = vunpack.c.l.b16 %v215
  %v436 = vunpack.c.l.b16 %v216
  %v437 = vunpack.c.l.b16 %v217
  %v438 = vunpack.c.l.b16 %v218
  %v439 = vunpack.c.l.b16 %v219
  %v440 = vunpack.c.l.b16 %v220
  %v441 = vunpack.c.l.b16 %v221
  %v442 = vunpack.c.l.b16 %v222
  %v443 = vunpack.c.l.b16 %v223
  %v444 = vunpack.c.l.b16 %v224
  %v445 = vunpack.c.l.b16 %v225
  %v446 = vunpack.c.l.b16 %v226
  %v447 = vunpack.c.l.b16 %v227
  %v448 = vunpack.c.l.b16 %v228
  %v449 = vunpack.c.l.b16 %v229
  %v450 = vunpack.c.l.b16 %v230
  %v451 = vunpack.c.l.b16 %v231
  %v452 = vunpack.c.l.b16 %v232
  %v453 = vunpack.c.l.b16 %v233
  %v454 = vunpack.c.l.b16 %v234
  %v455 = vunpack.c.l.b16 %v235
  %v456 = vunpack.c.l.b16 %v236
  %v457 = vunpack.c.l.b16 %v237
  %v458 = vunpack.c.l.b16 %v238
  %v459 = vunpack.c.l.b16 %v239
  %v460 = vunpack.c.l.b16 %v240
  %v461 = vunpack.c.l.b16 %v241
  %v462 = vunpack.c.l.b16 %v242
  %v463 = vpack.c.b16 %v368, %v367
  %v464 = vpack.c.b16 %v370, %v369
  %v465 = vpack.c.b16 %v372, %v371
  %v466 = vpack.c.b16 %v374, %v373
  %v467 = vpack.c.b16 %v376, %v375
  %v468 = vpack.c.b16 %v378, %v377
  %v469 = vpack.c.b16 %v380, %v379
  %v470 = vpack.c.b16 %v382, %v381
  %v471 = vpack.c.b16 %v384, %v383
  %v472 = vpack.c.b16 %v386, %v385
  %v473 = vpack.c.b16 %v388, %v387
  %v474 = vpack.c.b16 %v390, %v389
  %v475 = vpack.c.b16 %v392, %v391
  %v476 = vpack.c.b16 %v394, %v393
  %v477 = vpack.c.b16 %v396, %v395
  %v478 = vpack.c.b16 %v398, %v397
  %v479 = vpack.c.b16 %v400, %v399
  %v480 = vpack.c.b16 %v402, %v401
  %v481 = vpack.c.b16 %v404, %v403
  %v482 = vpack.c.b16 %v406, %v405
  %v483 = vpack.c.b16 %v408, %v407
  %v484 = vpack.c.b16 %v410, %v409
  %v485 = vpack.c.b16 %v412, %v411
  %v486 = vpack.c.b16 %v414, %v413
  %v487 = vpack.c.b16 %v416, %v415
  %v488 = vpack.c.b16 %v418, %v417
  %v489 = vpack.c.b16 %v420, %v419
  %v490 = vpack.c.b16 %v422, %v421
  %v491 = vpack.c.b16 %v424, %v423
  %v492 = vpack.c.b16 %v426, %v425
  %v493 = vpack.c.b16 %v428, %v427
  %v494 = vpack.c.b16 %v430, %v429
  %v495 = vpack.c.b16 %v432, %v431
  %v496 = vpack.c.b16 %v434, %v433
  %v497 = vpack.c.b16 %v436, %v435
  %v498 = vpack.c.b16 %v438, %v437
  %v499 = vpack.c.b16 %v440, %v439
  %v500 = vpack.c.b16 %v442, %v441
  %v501 = vpack.c.b16 %v444, %v443
  %v502 = vpack.c.b16 %v446, %v445
  %v503 = vpack.c.b16 %v448, %v447
  %v504 = vpack.c.b16 %v450, %v449
  %v505 = vpack.c.b16 %v452, %v451
  %v506 = vpack.c.b16 %v454, %v453
  %v507 = vpack.c.b16 %v456, %v455
  %v508 = vpack.c.b16 %v458, %v457
  %v509 = vpack.c.b16 %v460, %v459
  %v510 = vpack.c.b16 %v462, %v461
  %559 = vmatprep.subr.bf16.mxu0 0
  %560 = vmatpush1.bf16.msra.mxu0 %v463
  %561 = vmatprep.subr.bf16.mxu0 0
  %562 = vmatpush1.bf16.msra.mxu0 %v464
  %563 = vmatprep.subr.bf16.mxu0 0
  %564 = vmatpush1.bf16.msra.mxu0 %v465
  %565 = vmatprep.subr.bf16.mxu0 0
  %566 = vmatpush1.bf16.msra.mxu0 %v466
  %567 = vmatprep.subr.bf16.mxu0 0
  %568 = vmatpush1.bf16.msra.mxu0 %v467
  %569 = vmatprep.subr.bf16.mxu0 0
  %570 = vmatpush1.bf16.msra.mxu0 %v468
  %571 = vmatprep.subr.bf16.mxu0 0
  %572 = vmatpush1.bf16.msra.mxu0 %v469
  %573 = vmatprep.subr.bf16.mxu0 0
  %574 = vmatpush1.bf16.msra.mxu0 %v470
  %575 = vmatprep.subr.bf16.mxu0 0
  %576 = vmatpush1.bf16.msra.mxu0 %v471
  %577 = vmatprep.subr.bf16.mxu0 0
  %578 = vmatpush1.bf16.msra.mxu0 %v472
  %579 = vmatprep.subr.bf16.mxu0 0
  %580 = vmatpush1.bf16.msra.mxu0 %v473
  %581 = vmatprep.subr.bf16.mxu0 0
  %582 = vmatpush1.bf16.msra.mxu0 %v474
  %583 = vmatprep.subr.bf16.mxu0 0
  %584 = vmatpush1.bf16.msra.mxu0 %v475
  %585 = vmatprep.subr.bf16.mxu0 0
  %586 = vmatpush1.bf16.msra.mxu0 %v476
  %587 = vmatprep.subr.bf16.mxu0 0
  %588 = vmatpush1.bf16.msra.mxu0 %v477
  %589 = vmatprep.subr.bf16.mxu0 0
  %590 = vmatpush1.bf16.msra.mxu0 %v478
  %591 = vmatprep.mubr.bf16.mxu0 %v260
  %592 = vmatmul.mubr.bf16.gmra.mrb[0].mxu0 %v259
  %v593 = vpop.f32.mrb[0].mxu0
  %v594 = vadd.f32 %v248, %v593
  %v595 = vpop.f32.mrb[0].mxu0
  %v596 = vpop.f32.mrb[0].mxu0
  %v597 = vpop.f32.mrb[0].mxu0
  %598 = vdwg.mxu0
  %599 = vmatprep.subr.bf16.mxu0 0
  %600 = vmatpush1.bf16.msra.mxu0 %v479
  %601 = vmatprep.subr.bf16.mxu0 0
  %602 = vmatpush1.bf16.msra.mxu0 %v480
  %603 = vmatprep.subr.bf16.mxu0 0
  %604 = vmatpush1.bf16.msra.mxu0 %v481
  %605 = vmatprep.subr.bf16.mxu0 0
  %606 = vmatpush1.bf16.msra.mxu0 %v482
  %607 = vmatprep.subr.bf16.mxu0 0
  %608 = vmatpush1.bf16.msra.mxu0 %v483
  %609 = vmatprep.subr.bf16.mxu0 0
  %610 = vmatpush1.bf16.msra.mxu0 %v484
  %611 = vmatprep.subr.bf16.mxu0 0
  %612 = vmatpush1.bf16.msra.mxu0 %v485
  %613 = vmatprep.subr.bf16.mxu0 0
  %614 = vmatpush1.bf16.msra.mxu0 %v486
  %615 = vmatprep.subr.bf16.mxu0 0
  %616 = vmatpush1.bf16.msra.mxu0 %v487
  %617 = vmatprep.subr.bf16.mxu0 0
  %618 = vmatpush1.bf16.msra.mxu0 %v488
  %619 = vmatprep.subr.bf16.mxu0 0
  %620 = vmatpush1.bf16.msra.mxu0 %v489
  %621 = vmatprep.subr.bf16.mxu0 0
  %622 = vmatpush1.bf16.msra.mxu0 %v490
  %623 = vmatprep.subr.bf16.mxu0 0
  %624 = vmatpush1.bf16.msra.mxu0 %v491
  %625 = vmatprep.subr.bf16.mxu0 0
  %626 = vmatpush1.bf16.msra.mxu0 %v492
  %627 = vmatprep.subr.bf16.mxu0 0
  %628 = vmatpush1.bf16.msra.mxu0 %v493
  %629 = vmatprep.subr.bf16.mxu0 0
  %630 = vmatpush1.bf16.msra.mxu0 %v494
  %631 = vmatprep.mubr.bf16.mxu0 %v262
  %632 = vmatmul.mubr.bf16.gmra.mrb[0].mxu0 %v261
  %v633 = vpop.f32.mrb[0].mxu0
  %v634 = vadd.f32 %v594, %v633
  %v635 = vpop.f32.mrb[0].mxu0
  %v636 = vpop.f32.mrb[0].mxu0
  %v637 = vpop.f32.mrb[0].mxu0
  %638 = vdwg.mxu0
  %639 = vmatprep.subr.bf16.mxu0 0
  %640 = vmatpush1.bf16.msra.mxu0 %v495
  %641 = vmatprep.subr.bf16.mxu0 0
  %642 = vmatpush1.bf16.msra.mxu0 %v496
  %643 = vmatprep.subr.bf16.mxu0 0
  %644 = vmatpush1.bf16.msra.mxu0 %v497
  %645 = vmatprep.subr.bf16.mxu0 0
  %646 = vmatpush1.bf16.msra.mxu0 %v498
  %647 = vmatprep.subr.bf16.mxu0 0
  %648 = vmatpush1.bf16.msra.mxu0 %v499
  %649 = vmatprep.subr.bf16.mxu0 0
  %650 = vmatpush1.bf16.msra.mxu0 %v500
  %651 = vmatprep.subr.bf16.mxu0 0
  %652 = vmatpush1.bf16.msra.mxu0 %v501
  %653 = vmatprep.subr.bf16.mxu0 0
  %654 = vmatpush1.bf16.msra.mxu0 %v502
  %655 = vmatprep.subr.bf16.mxu0 0
  %656 = vmatpush1.bf16.msra.mxu0 %v503
  %657 = vmatprep.subr.bf16.mxu0 0
  %658 = vmatpush1.bf16.msra.mxu0 %v504
  %659 = vmatprep.subr.bf16.mxu0 0
  %660 = vmatpush1.bf16.msra.mxu0 %v505
  %661 = vmatprep.subr.bf16.mxu0 0
  %662 = vmatpush1.bf16.msra.mxu0 %v506
  %663 = vmatprep.subr.bf16.mxu0 0
  %664 = vmatpush1.bf16.msra.mxu0 %v507
  %665 = vmatprep.subr.bf16.mxu0 0
  %666 = vmatpush1.bf16.msra.mxu0 %v508
  %667 = vmatprep.subr.bf16.mxu0 0
  %668 = vmatpush1.bf16.msra.mxu0 %v509
  %669 = vmatprep.subr.bf16.mxu0 0
  %670 = vmatpush1.bf16.msra.mxu0 %v510
  %671 = vmatprep.mubr.bf16.mxu0 %v264
  %672 = vmatmul.mubr.bf16.gmra.mrb[0].mxu0 %v263
  %v673 = vpop.f32.mrb[0].mxu0
  %v674 = vadd.f32 %v634, %v673
  %v675 = vpop.f32.mrb[0].mxu0
  %v676 = vpop.f32.mrb[0].mxu0
  %v677 = vpop.f32.mrb[0].mxu0
  %678 = vdwg.mxu0
  %v679 = vld [vmem:[%s5] sm:$0xff]
  %v680 = vld [vmem:[%s6] sm:$0x1]
  %v682 = vlaneseq
  %v683 = vshrl.u32 %v682, 7
  %v684 = vsub.s32 0, %v683
  %v685 = vrot.slane %v680, %v684
  %v687 = vadd.f32 %v679, %v685
  %v688 = vlaneseq
  %v689 = vshrl.u32 %v688, 7
  %v690 = vsub.s32 0, %v689
  %v691 = vrot.slane %v139, %v690
  %v692 = vadd.f32 %v687, %v691
  %v693 = vld [vmem:[%s7] sm:$0xff]
  %v694 = vadd.f32 %v692, %v693
  %v695 = vlaneseq
  %v696 = vshrl.u32 %v695, 7
  %v697 = vlaneseq
  %v698 = vand.u32 %v697, 127
  %vm699 = vcmp.le.s32.totalorder %v698, %v696
  %v700 = vsel %vm699, 0.0, -1e+30
  %v701 = vsub.s32 %v696, %v698
  %v702 = vcvt.s32.f32 %v701
  %v703 = vadd.f32 %v702, 0.5
  %v704 = vmul.f32 %v703, 0.25
  %v705 = vfloor.f32 %v704
  %v706 = vsub.f32 0.0, %v705
  %vm707 = vcmp.eq.s32.totalorder %v696, %v698
  %v708 = vsel %vm707, 0.0, -1e+30
  %v709 = vld [vmem:[%s8] sm:$0xf]
  %v710 = vld [vmem:[%s8 + $0x4] sm:$0xf]
  %v711 = vld [vmem:[%s8 + $0x8] sm:$0xf]
  %v712 = vld [vmem:[%s8 + $0xc] sm:$0xf]
  %v713 = vpack.c.bf16 %v694, %v694
  %v714 = vld [vmem:[%s9] sm:$0x1]
  %v716 = vlaneseq
  %v717 = vshrl.u32 %v716, 7
  %v718 = vsub.s32 0, %v717
  %v719 = vrot.slane %v714, %v718
  %v725 = vunpack.c.l.b16 %v709
  %v726 = vunpack.c.l.b16 %v710
  %v727 = vunpack.c.l.b16 %v711
  %v728 = vunpack.c.l.b16 %v712
  %v729 = vpack.c.b16 %v726, %v725
  %v730 = vpack.c.b16 %v728, %v727
  %vm733 = vcmask 261120
  %v735 = vsel %vm733, %v713, 0
  %737 = vmatprep.subr.bf16.mxu0 0
  %738 = vmatpush1.bf16.msra.mxu0 %v729
  %739 = vmatprep.subr.bf16.mxu0 0
  %740 = vmatpush1.bf16.msra.mxu0 %v730
  %741 = vmatprep.subr.bf16.mxu0 0
  %742 = vmatpush1.bf16.msra.mxu0 0
  %743 = vmatprep.subr.bf16.mxu0 0
  %744 = vmatpush1.bf16.msra.mxu0 0
  %745 = vmatprep.subr.bf16.mxu0 0
  %746 = vmatpush1.bf16.msra.mxu0 0
  %747 = vmatprep.subr.bf16.mxu0 0
  %748 = vmatpush1.bf16.msra.mxu0 0
  %749 = vmatprep.subr.bf16.mxu0 0
  %750 = vmatpush1.bf16.msra.mxu0 0
  %751 = vmatprep.subr.bf16.mxu0 0
  %752 = vmatpush1.bf16.msra.mxu0 0
  %753 = vmatprep.subr.bf16.mxu0 0
  %754 = vmatpush1.bf16.msra.mxu0 0
  %755 = vmatprep.subr.bf16.mxu0 0
  %756 = vmatpush1.bf16.msra.mxu0 0
  %757 = vmatprep.subr.bf16.mxu0 0
  %758 = vmatpush1.bf16.msra.mxu0 0
  %759 = vmatprep.subr.bf16.mxu0 0
  %760 = vmatpush1.bf16.msra.mxu0 0
  %761 = vmatprep.subr.bf16.mxu0 0
  %762 = vmatpush1.bf16.msra.mxu0 0
  %763 = vmatprep.subr.bf16.mxu0 0
  %764 = vmatpush1.bf16.msra.mxu0 0
  %765 = vmatprep.subr.bf16.mxu0 0
  %766 = vmatpush1.bf16.msra.mxu0 0
  %767 = vmatprep.subr.bf16.mxu0 0
  %768 = vmatpush1.bf16.msra.mxu0 0
  %769 = vmatprep.mubr.bf16.mxu0 0
  %770 = vmatmul.mubr.bf16.gmra.mrb[0].mxu0 %v735
  %v771 = vpop.f32.mrb[0].mxu0
  %v772 = vadd.f32 %v719, %v771
  %v773 = vpop.f32.mrb[0].mxu0
  %v774 = vpop.f32.mrb[0].mxu0
  %v775 = vpop.f32.mrb[0].mxu0
  %776 = vdwg.mxu0
  %v777 = vmul.f32 %v772, 0.35355338
  %v778 = vld [vmem:[%s10] sm:$0xf]
  %v779 = vld [vmem:[%s10 + $0x4] sm:$0xf]
  %v780 = vld [vmem:[%s10 + $0x8] sm:$0xf]
  %v781 = vld [vmem:[%s10 + $0xc] sm:$0xf]
  %v782 = vpack.c.bf16 %v772, %v772
  %v783 = vpack.c.bf16 %v777, %v777
  %v784 = vmul.f32 %v706, 0.25
  %v785 = vadd.f32 %v784, %v700
  %787 = vrot.lane.b32.xlu0 %v782, 96
  %v788 = vpop.permute.xlu0 %787
  %vm789 = vcmask 64512
  %v791 = vsel %vm789, %v783, 0
  %v794 = vsel %vm789, %v788, 0
  %796 = vmatprep.subr.bf16.mxu0 0
  %797 = vmatpush1.bf16.xpose.msra.mxu0 %v794
  %798 = vmatprep.subr.bf16.mxu0 0
  %799 = vmatpush1.bf16.xpose.msra.mxu0 0
  %800 = vmatprep.subr.bf16.mxu0 0
  %801 = vmatpush1.bf16.xpose.msra.mxu0 0
  %802 = vmatprep.subr.bf16.mxu0 0
  %803 = vmatpush1.bf16.xpose.msra.mxu0 0
  %804 = vmatprep.subr.bf16.mxu0 0
  %805 = vmatpush1.bf16.xpose.msra.mxu0 0
  %806 = vmatprep.subr.bf16.mxu0 0
  %807 = vmatpush1.bf16.xpose.msra.mxu0 0
  %808 = vmatprep.subr.bf16.mxu0 0
  %809 = vmatpush1.bf16.xpose.msra.mxu0 0
  %810 = vmatprep.subr.bf16.mxu0 0
  %811 = vmatpush1.bf16.xpose.msra.mxu0 0
  %812 = vmatprep.subr.bf16.mxu0 0
  %813 = vmatpush1.bf16.xpose.msra.mxu0 0
  %814 = vmatprep.subr.bf16.mxu0 0
  %815 = vmatpush1.bf16.xpose.msra.mxu0 0
  %816 = vmatprep.subr.bf16.mxu0 0
  %817 = vmatpush1.bf16.xpose.msra.mxu0 0
  %818 = vmatprep.subr.bf16.mxu0 0
  %819 = vmatpush1.bf16.xpose.msra.mxu0 0
  %820 = vmatprep.subr.bf16.mxu0 0
  %821 = vmatpush1.bf16.xpose.msra.mxu0 0
  %822 = vmatprep.subr.bf16.mxu0 0
  %823 = vmatpush1.bf16.xpose.msra.mxu0 0
  %824 = vmatprep.subr.bf16.mxu0 0
  %825 = vmatpush1.bf16.xpose.msra.mxu0 0
  %826 = vmatprep.subr.bf16.mxu0 0
  %827 = vmatpush1.bf16.xpose.msra.mxu0 0
  %828 = vmatprep.mubr.bf16.mxu0 0
  %829 = vmatmul.mubr.bf16.gmra.mrb[0].mxu0 %v791
  %v830 = vpop.f32.mrb[0].mxu0
  %v831 = vadd.f32 %v785, %v830
  %v832 = vpop.f32.mrb[0].mxu0
  %v833 = vpop.f32.mrb[0].mxu0
  %v834 = vpop.f32.mrb[0].mxu0
  %835 = vdwg.mxu0
  %v836 = vsel %vm789, %v831, -inf
  %837 = vmax.xlane.f32.xlu0 %v836
  %v838 = vpop.xlane.xlu0 %837
  %v839 = vsub.f32 %v831, %v838
  %v840 = vmul.f32 %v839, 1.442695
  %v841 = vpow.pop %v840
  %v842 = vsel %vm789, %v841, 0.0
  %843 = vadd.xlane.f32.xlu0 %v842
  %v844 = vpop.xlane.xlu0 %843
  %v845 = vrcp.pop %v844
  %v846 = vmul.f32 %v841, %v845
  %v847 = vpack.c.bf16 %v846, %v846
  %848 = vrot.lane.b32.xlu0 %v782, 64
  %v849 = vpop.permute.xlu0 %848
  %v851 = vsel %vm789, %v847, 0
  %vm853 = vcmask 1043456
  %v855 = vsel %vm853, %v849, 0
  %857 = vmatprep.subr.bf16.mxu0 0
  %858 = vmatpush1.bf16.msra.mxu0 %v855
  %859 = vmatprep.subr.bf16.mxu0 0
  %860 = vmatpush1.bf16.msra.mxu0 0
  %861 = vmatprep.subr.bf16.mxu0 0
  %862 = vmatpush1.bf16.msra.mxu0 0
  %863 = vmatprep.subr.bf16.mxu0 0
  %864 = vmatpush1.bf16.msra.mxu0 0
  %865 = vmatprep.subr.bf16.mxu0 0
  %866 = vmatpush1.bf16.msra.mxu0 0
  %867 = vmatprep.subr.bf16.mxu0 0
  %868 = vmatpush1.bf16.msra.mxu0 0
  %869 = vmatprep.subr.bf16.mxu0 0
  %870 = vmatpush1.bf16.msra.mxu0 0
  %871 = vmatprep.subr.bf16.mxu0 0
  %872 = vmatpush1.bf16.msra.mxu0 0
  %873 = vmatprep.subr.bf16.mxu0 0
  %874 = vmatpush1.bf16.msra.mxu0 0
  %875 = vmatprep.subr.bf16.mxu0 0
  %876 = vmatpush1.bf16.msra.mxu0 0
  %877 = vmatprep.subr.bf16.mxu0 0
  %878 = vmatpush1.bf16.msra.mxu0 0
  %879 = vmatprep.subr.bf16.mxu0 0
  %880 = vmatpush1.bf16.msra.mxu0 0
  %881 = vmatprep.subr.bf16.mxu0 0
  %882 = vmatpush1.bf16.msra.mxu0 0
  %883 = vmatprep.subr.bf16.mxu0 0
  %884 = vmatpush1.bf16.msra.mxu0 0
  %885 = vmatprep.subr.bf16.mxu0 0
  %886 = vmatpush1.bf16.msra.mxu0 0
  %887 = vmatprep.subr.bf16.mxu0 0
  %888 = vmatpush1.bf16.msra.mxu0 0
  %889 = vmatprep.mubr.bf16.mxu0 0
  %890 = vmatmul.mubr.bf16.gmra.mrb[0].mxu0 %v851
  %v891 = vpop.f32.mrb[0].mxu0
  %v892 = vadd.f32 0.0, %v891
  %v893 = vpop.f32.mrb[0].mxu0
  %v894 = vpop.f32.mrb[0].mxu0
  %v895 = vpop.f32.mrb[0].mxu0
  %896 = vdwg.mxu0
  %v897 = vpack.c.bf16 %v892, %v892
  %v898 = vmul.f32 %v706, 0.0625
  %v899 = vadd.f32 %v898, %v700
  %901 = vrot.lane.b32.xlu0 %v783, 120
  %v902 = vpop.permute.xlu0 %901
  %903 = vrot.lane.b32.xlu0 %v782, 88
  %v904 = vpop.permute.xlu0 %903
  %v906 = vsel %vm789, %v902, 0
  %v909 = vsel %vm789, %v904, 0
  %911 = vmatprep.subr.bf16.mxu0 0
  %912 = vmatpush1.bf16.xpose.msra.mxu0 %v909
  %913 = vmatprep.subr.bf16.mxu0 0
  %914 = vmatpush1.bf16.xpose.msra.mxu0 0
  %915 = vmatprep.subr.bf16.mxu0 0
  %916 = vmatpush1.bf16.xpose.msra.mxu0 0
  %917 = vmatprep.subr.bf16.mxu0 0
  %918 = vmatpush1.bf16.xpose.msra.mxu0 0
  %919 = vmatprep.subr.bf16.mxu0 0
  %920 = vmatpush1.bf16.xpose.msra.mxu0 0
  %921 = vmatprep.subr.bf16.mxu0 0
  %922 = vmatpush1.bf16.xpose.msra.mxu0 0
  %923 = vmatprep.subr.bf16.mxu0 0
  %924 = vmatpush1.bf16.xpose.msra.mxu0 0
  %925 = vmatprep.subr.bf16.mxu0 0
  %926 = vmatpush1.bf16.xpose.msra.mxu0 0
  %927 = vmatprep.subr.bf16.mxu0 0
  %928 = vmatpush1.bf16.xpose.msra.mxu0 0
  %929 = vmatprep.subr.bf16.mxu0 0
  %930 = vmatpush1.bf16.xpose.msra.mxu0 0
  %931 = vmatprep.subr.bf16.mxu0 0
  %932 = vmatpush1.bf16.xpose.msra.mxu0 0
  %933 = vmatprep.subr.bf16.mxu0 0
  %934 = vmatpush1.bf16.xpose.msra.mxu0 0
  %935 = vmatprep.subr.bf16.mxu0 0
  %936 = vmatpush1.bf16.xpose.msra.mxu0 0
  %937 = vmatprep.subr.bf16.mxu0 0
  %938 = vmatpush1.bf16.xpose.msra.mxu0 0
  %939 = vmatprep.subr.bf16.mxu0 0
  %940 = vmatpush1.bf16.xpose.msra.mxu0 0
  %941 = vmatprep.subr.bf16.mxu0 0
  %942 = vmatpush1.bf16.xpose.msra.mxu0 0
  %943 = vmatprep.mubr.bf16.mxu0 0
  %944 = vmatmul.mubr.bf16.gmra.mrb[0].mxu0 %v906
  %v945 = vpop.f32.mrb[0].mxu0
  %v946 = vadd.f32 %v899, %v945
  %v947 = vpop.f32.mrb[0].mxu0
  %v948 = vpop.f32.mrb[0].mxu0
  %v949 = vpop.f32.mrb[0].mxu0
  %950 = vdwg.mxu0
  %v951 = vsel %vm789, %v946, -inf
  %952 = vmax.xlane.f32.xlu0 %v951
  %v953 = vpop.xlane.xlu0 %952
  %v954 = vsub.f32 %v946, %v953
  %v955 = vmul.f32 %v954, 1.442695
  %v956 = vpow.pop %v955
  %v957 = vsel %vm789, %v956, 0.0
  %958 = vadd.xlane.f32.xlu0 %v957
  %v959 = vpop.xlane.xlu0 %958
  %v960 = vrcp.pop %v959
  %v961 = vmul.f32 %v956, %v960
  %v962 = vpack.c.bf16 %v961, %v961
  %963 = vrot.lane.b32.xlu0 %v782, 56
  %v964 = vpop.permute.xlu0 %963
  %v966 = vsel %vm789, %v962, 0
  %v969 = vsel %vm853, %v964, 0
  %971 = vmatprep.subr.bf16.mxu0 0
  %972 = vmatpush1.bf16.msra.mxu0 %v969
  %973 = vmatprep.subr.bf16.mxu0 0
  %974 = vmatpush1.bf16.msra.mxu0 0
  %975 = vmatprep.subr.bf16.mxu0 0
  %976 = vmatpush1.bf16.msra.mxu0 0
  %977 = vmatprep.subr.bf16.mxu0 0
  %978 = vmatpush1.bf16.msra.mxu0 0
  %979 = vmatprep.subr.bf16.mxu0 0
  %980 = vmatpush1.bf16.msra.mxu0 0
  %981 = vmatprep.subr.bf16.mxu0 0
  %982 = vmatpush1.bf16.msra.mxu0 0
  %983 = vmatprep.subr.bf16.mxu0 0
  %984 = vmatpush1.bf16.msra.mxu0 0
  %985 = vmatprep.subr.bf16.mxu0 0
  %986 = vmatpush1.bf16.msra.mxu0 0
  %987 = vmatprep.subr.bf16.mxu0 0
  %988 = vmatpush1.bf16.msra.mxu0 0
  %989 = vmatprep.subr.bf16.mxu0 0
  %990 = vmatpush1.bf16.msra.mxu0 0
  %991 = vmatprep.subr.bf16.mxu0 0
  %992 = vmatpush1.bf16.msra.mxu0 0
  %993 = vmatprep.subr.bf16.mxu0 0
  %994 = vmatpush1.bf16.msra.mxu0 0
  %995 = vmatprep.subr.bf16.mxu0 0
  %996 = vmatpush1.bf16.msra.mxu0 0
  %997 = vmatprep.subr.bf16.mxu0 0
  %998 = vmatpush1.bf16.msra.mxu0 0
  %999 = vmatprep.subr.bf16.mxu0 0
  %1000 = vmatpush1.bf16.msra.mxu0 0
  %1001 = vmatprep.subr.bf16.mxu0 0
  %1002 = vmatpush1.bf16.msra.mxu0 0
  %1003 = vmatprep.mubr.bf16.mxu0 0
  %1004 = vmatmul.mubr.bf16.gmra.mrb[0].mxu0 %v966
  %v1005 = vpop.f32.mrb[0].mxu0
  %v1006 = vadd.f32 0.0, %v1005
  %v1007 = vpop.f32.mrb[0].mxu0
  %v1008 = vpop.f32.mrb[0].mxu0
  %v1009 = vpop.f32.mrb[0].mxu0
  %1010 = vdwg.mxu0
  %v1011 = vpack.c.bf16 %v1006, %v1006
  %v1013 = vsel %vm789, %v1011, 0
  %v1016 = vsel %vm853, %v779, 0
  %1018 = vmatprep.subr.bf16.mxu0 0
  %1019 = vmatpush1.bf16.msra.mxu0 %v1016
  %1020 = vmatprep.subr.bf16.mxu0 0
  %1021 = vmatpush1.bf16.msra.mxu0 0
  %1022 = vmatprep.subr.bf16.mxu0 0
  %1023 = vmatpush1.bf16.msra.mxu0 0
  %1024 = vmatprep.subr.bf16.mxu0 0
  %1025 = vmatpush1.bf16.msra.mxu0 0
  %1026 = vmatprep.subr.bf16.mxu0 0
  %1027 = vmatpush1.bf16.msra.mxu0 0
  %1028 = vmatprep.subr.bf16.mxu0 0
  %1029 = vmatpush1.bf16.msra.mxu0 0
  %1030 = vmatprep.subr.bf16.mxu0 0
  %1031 = vmatpush1.bf16.msra.mxu0 0
  %1032 = vmatprep.subr.bf16.mxu0 0
  %1033 = vmatpush1.bf16.msra.mxu0 0
  %1034 = vmatprep.subr.bf16.mxu0 0
  %1035 = vmatpush1.bf16.msra.mxu0 0
  %1036 = vmatprep.subr.bf16.mxu0 0
  %1037 = vmatpush1.bf16.msra.mxu0 0
  %1038 = vmatprep.subr.bf16.mxu0 0
  %1039 = vmatpush1.bf16.msra.mxu0 0
  %1040 = vmatprep.subr.bf16.mxu0 0
  %1041 = vmatpush1.bf16.msra.mxu0 0
  %1042 = vmatprep.subr.bf16.mxu0 0
  %1043 = vmatpush1.bf16.msra.mxu0 0
  %1044 = vmatprep.subr.bf16.mxu0 0
  %1045 = vmatpush1.bf16.msra.mxu0 0
  %1046 = vmatprep.subr.bf16.mxu0 0
  %1047 = vmatpush1.bf16.msra.mxu0 0
  %1048 = vmatprep.subr.bf16.mxu0 0
  %1049 = vmatpush1.bf16.msra.mxu0 0
  %1050 = vmatprep.mubr.bf16.mxu0 0
  %1051 = vmatmul.mubr.bf16.gmra.mrb[0].mxu0 %v1013
  %v1052 = vpop.f32.mrb[0].mxu0
  %v1053 = vadd.f32 0.0, %v1052
  %v1054 = vpop.f32.mrb[0].mxu0
  %v1055 = vpop.f32.mrb[0].mxu0
  %v1056 = vpop.f32.mrb[0].mxu0
  %1057 = vdwg.mxu0
  %v1059 = vsel %vm789, %v897, 0
  %v1062 = vsel %vm853, %v778, 0
  %1064 = vmatprep.subr.bf16.mxu0 0
  %1065 = vmatpush1.bf16.msra.mxu0 %v1062
  %1066 = vmatprep.subr.bf16.mxu0 0
  %1067 = vmatpush1.bf16.msra.mxu0 0
  %1068 = vmatprep.subr.bf16.mxu0 0
  %1069 = vmatpush1.bf16.msra.mxu0 0
  %1070 = vmatprep.subr.bf16.mxu0 0
  %1071 = vmatpush1.bf16.msra.mxu0 0
  %1072 = vmatprep.subr.bf16.mxu0 0
  %1073 = vmatpush1.bf16.msra.mxu0 0
  %1074 = vmatprep.subr.bf16.mxu0 0
  %1075 = vmatpush1.bf16.msra.mxu0 0
  %1076 = vmatprep.subr.bf16.mxu0 0
  %1077 = vmatpush1.bf16.msra.mxu0 0
  %1078 = vmatprep.subr.bf16.mxu0 0
  %1079 = vmatpush1.bf16.msra.mxu0 0
  %1080 = vmatprep.subr.bf16.mxu0 0
  %1081 = vmatpush1.bf16.msra.mxu0 0
  %1082 = vmatprep.subr.bf16.mxu0 0
  %1083 = vmatpush1.bf16.msra.mxu0 0
  %1084 = vmatprep.subr.bf16.mxu0 0
  %1085 = vmatpush1.bf16.msra.mxu0 0
  %1086 = vmatprep.subr.bf16.mxu0 0
  %1087 = vmatpush1.bf16.msra.mxu0 0
  %1088 = vmatprep.subr.bf16.mxu0 0
  %1089 = vmatpush1.bf16.msra.mxu0 0
  %1090 = vmatprep.subr.bf16.mxu0 0
  %1091 = vmatpush1.bf16.msra.mxu0 0
  %1092 = vmatprep.subr.bf16.mxu0 0
  %1093 = vmatpush1.bf16.msra.mxu0 0
  %1094 = vmatprep.subr.bf16.mxu0 0
  %1095 = vmatpush1.bf16.msra.mxu0 0
  %1096 = vmatprep.mubr.bf16.mxu0 0
  %1097 = vmatmul.mubr.bf16.gmra.mrb[0].mxu0 %v1059
  %v1098 = vpop.f32.mrb[0].mxu0
  %v1099 = vadd.f32 %v1053, %v1098
  %v1100 = vpop.f32.mrb[0].mxu0
  %v1101 = vpop.f32.mrb[0].mxu0
  %v1102 = vpop.f32.mrb[0].mxu0
  %1103 = vdwg.mxu0
  %v1104 = vmul.f32 %v706, 0.015625
  %v1105 = vadd.f32 %v1104, %v700
  %1106 = vrot.lane.b32.xlu0 %v783, 112
  %v1107 = vpop.permute.xlu0 %1106
  %1108 = vrot.lane.b32.xlu0 %v782, 80
  %v1109 = vpop.permute.xlu0 %1108
  %v1111 = vsel %vm789, %v1107, 0
  %v1114 = vsel %vm789, %v1109, 0
  %1116 = vmatprep.subr.bf16.mxu0 0
  %1117 = vmatpush1.bf16.xpose.msra.mxu0 %v1114
  %1118 = vmatprep.subr.bf16.mxu0 0
  %1119 = vmatpush1.bf16.xpose.msra.mxu0 0
  %1120 = vmatprep.subr.bf16.mxu0 0
  %1121 = vmatpush1.bf16.xpose.msra.mxu0 0
  %1122 = vmatprep.subr.bf16.mxu0 0
  %1123 = vmatpush1.bf16.xpose.msra.mxu0 0
  %1124 = vmatprep.subr.bf16.mxu0 0
  %1125 = vmatpush1.bf16.xpose.msra.mxu0 0
  %1126 = vmatprep.subr.bf16.mxu0 0
  %1127 = vmatpush1.bf16.xpose.msra.mxu0 0
  %1128 = vmatprep.subr.bf16.mxu0 0
  %1129 = vmatpush1.bf16.xpose.msra.mxu0 0
  %1130 = vmatprep.subr.bf16.mxu0 0
  %1131 = vmatpush1.bf16.xpose.msra.mxu0 0
  %1132 = vmatprep.subr.bf16.mxu0 0
  %1133 = vmatpush1.bf16.xpose.msra.mxu0 0
  %1134 = vmatprep.subr.bf16.mxu0 0
  %1135 = vmatpush1.bf16.xpose.msra.mxu0 0
  %1136 = vmatprep.subr.bf16.mxu0 0
  %1137 = vmatpush1.bf16.xpose.msra.mxu0 0
  %1138 = vmatprep.subr.bf16.mxu0 0
  %1139 = vmatpush1.bf16.xpose.msra.mxu0 0
  %1140 = vmatprep.subr.bf16.mxu0 0
  %1141 = vmatpush1.bf16.xpose.msra.mxu0 0
  %1142 = vmatprep.subr.bf16.mxu0 0
  %1143 = vmatpush1.bf16.xpose.msra.mxu0 0
  %1144 = vmatprep.subr.bf16.mxu0 0
  %1145 = vmatpush1.bf16.xpose.msra.mxu0 0
  %1146 = vmatprep.subr.bf16.mxu0 0
  %1147 = vmatpush1.bf16.xpose.msra.mxu0 0
  %1148 = vmatprep.mubr.bf16.mxu0 0
  %1149 = vmatmul.mubr.bf16.gmra.mrb[0].mxu0 %v1111
  %v1150 = vpop.f32.mrb[0].mxu0
  %v1151 = vadd.f32 %v1105, %v1150
  %v1152 = vpop.f32.mrb[0].mxu0
  %v1153 = vpop.f32.mrb[0].mxu0
  %v1154 = vpop.f32.mrb[0].mxu0
  %1155 = vdwg.mxu0
  %v1156 = vsel %vm789, %v1151, -inf
  %1157 = vmax.xlane.f32.xlu0 %v1156
  %v1158 = vpop.xlane.xlu0 %1157
  %v1159 = vsub.f32 %v1151, %v1158
  %v1160 = vmul.f32 %v1159, 1.442695
  %v1161 = vpow.pop %v1160
  %v1162 = vsel %vm789, %v1161, 0.0
  %1163 = vadd.xlane.f32.xlu0 %v1162
  %v1164 = vpop.xlane.xlu0 %1163
  %v1165 = vrcp.pop %v1164
  %v1166 = vmul.f32 %v1161, %v1165
  %v1167 = vpack.c.bf16 %v1166, %v1166
  %1168 = vrot.lane.b32.xlu0 %v782, 48
  %v1169 = vpop.permute.xlu0 %1168
  %v1171 = vsel %vm789, %v1167, 0
  %v1174 = vsel %vm853, %v1169, 0
  %1176 = vmatprep.subr.bf16.mxu0 0
  %1177 = vmatpush1.bf16.msra.mxu0 %v1174
  %1178 = vmatprep.subr.bf16.mxu0 0
  %1179 = vmatpush1.bf16.msra.mxu0 0
  %1180 = vmatprep.subr.bf16.mxu0 0
  %1181 = vmatpush1.bf16.msra.mxu0 0
  %1182 = vmatprep.subr.bf16.mxu0 0
  %1183 = vmatpush1.bf16.msra.mxu0 0
  %1184 = vmatprep.subr.bf16.mxu0 0
  %1185 = vmatpush1.bf16.msra.mxu0 0
  %1186 = vmatprep.subr.bf16.mxu0 0
  %1187 = vmatpush1.bf16.msra.mxu0 0
  %1188 = vmatprep.subr.bf16.mxu0 0
  %1189 = vmatpush1.bf16.msra.mxu0 0
  %1190 = vmatprep.subr.bf16.mxu0 0
  %1191 = vmatpush1.bf16.msra.mxu0 0
  %1192 = vmatprep.subr.bf16.mxu0 0
  %1193 = vmatpush1.bf16.msra.mxu0 0
  %1194 = vmatprep.subr.bf16.mxu0 0
  %1195 = vmatpush1.bf16.msra.mxu0 0
  %1196 = vmatprep.subr.bf16.mxu0 0
  %1197 = vmatpush1.bf16.msra.mxu0 0
  %1198 = vmatprep.subr.bf16.mxu0 0
  %1199 = vmatpush1.bf16.msra.mxu0 0
  %1200 = vmatprep.subr.bf16.mxu0 0
  %1201 = vmatpush1.bf16.msra.mxu0 0
  %1202 = vmatprep.subr.bf16.mxu0 0
  %1203 = vmatpush1.bf16.msra.mxu0 0
  %1204 = vmatprep.subr.bf16.mxu0 0
  %1205 = vmatpush1.bf16.msra.mxu0 0
  %1206 = vmatprep.subr.bf16.mxu0 0
  %1207 = vmatpush1.bf16.msra.mxu0 0
  %1208 = vmatprep.mubr.bf16.mxu0 0
  %1209 = vmatmul.mubr.bf16.gmra.mrb[0].mxu0 %v1171
  %v1210 = vpop.f32.mrb[0].mxu0
  %v1211 = vadd.f32 0.0, %v1210
  %v1212 = vpop.f32.mrb[0].mxu0
  %v1213 = vpop.f32.mrb[0].mxu0
  %v1214 = vpop.f32.mrb[0].mxu0
  %1215 = vdwg.mxu0
  %v1216 = vpack.c.bf16 %v1211, %v1211
  %v1218 = vsel %vm789, %v1216, 0
  %v1221 = vsel %vm853, %v780, 0
  %1223 = vmatprep.subr.bf16.mxu0 0
  %1224 = vmatpush1.bf16.msra.mxu0 %v1221
  %1225 = vmatprep.subr.bf16.mxu0 0
  %1226 = vmatpush1.bf16.msra.mxu0 0
  %1227 = vmatprep.subr.bf16.mxu0 0
  %1228 = vmatpush1.bf16.msra.mxu0 0
  %1229 = vmatprep.subr.bf16.mxu0 0
  %1230 = vmatpush1.bf16.msra.mxu0 0
  %1231 = vmatprep.subr.bf16.mxu0 0
  %1232 = vmatpush1.bf16.msra.mxu0 0
  %1233 = vmatprep.subr.bf16.mxu0 0
  %1234 = vmatpush1.bf16.msra.mxu0 0
  %1235 = vmatprep.subr.bf16.mxu0 0
  %1236 = vmatpush1.bf16.msra.mxu0 0
  %1237 = vmatprep.subr.bf16.mxu0 0
  %1238 = vmatpush1.bf16.msra.mxu0 0
  %1239 = vmatprep.subr.bf16.mxu0 0
  %1240 = vmatpush1.bf16.msra.mxu0 0
  %1241 = vmatprep.subr.bf16.mxu0 0
  %1242 = vmatpush1.bf16.msra.mxu0 0
  %1243 = vmatprep.subr.bf16.mxu0 0
  %1244 = vmatpush1.bf16.msra.mxu0 0
  %1245 = vmatprep.subr.bf16.mxu0 0
  %1246 = vmatpush1.bf16.msra.mxu0 0
  %1247 = vmatprep.subr.bf16.mxu0 0
  %1248 = vmatpush1.bf16.msra.mxu0 0
  %1249 = vmatprep.subr.bf16.mxu0 0
  %1250 = vmatpush1.bf16.msra.mxu0 0
  %1251 = vmatprep.subr.bf16.mxu0 0
  %1252 = vmatpush1.bf16.msra.mxu0 0
  %1253 = vmatprep.subr.bf16.mxu0 0
  %1254 = vmatpush1.bf16.msra.mxu0 0
  %1255 = vmatprep.mubr.bf16.mxu0 0
  %1256 = vmatmul.mubr.bf16.gmra.mrb[0].mxu0 %v1218
  %v1257 = vpop.f32.mrb[0].mxu0
  %v1258 = vadd.f32 0.0, %v1257
  %v1259 = vpop.f32.mrb[0].mxu0
  %v1260 = vpop.f32.mrb[0].mxu0
  %v1261 = vpop.f32.mrb[0].mxu0
  %1262 = vdwg.mxu0
  %v1263 = vadd.f32 %v1099, %v1258
  %v1264 = vmul.f32 %v706, 0.00390625
  %v1265 = vadd.f32 %v1264, %v700
  %1266 = vrot.lane.b32.xlu0 %v783, 104
  %v1267 = vpop.permute.xlu0 %1266
  %1268 = vrot.lane.b32.xlu0 %v782, 72
  %v1269 = vpop.permute.xlu0 %1268
  %v1271 = vsel %vm789, %v1267, 0
  %v1274 = vsel %vm789, %v1269, 0
  %1276 = vmatprep.subr.bf16.mxu0 0
  %1277 = vmatpush1.bf16.xpose.msra.mxu0 %v1274
  %1278 = vmatprep.subr.bf16.mxu0 0
  %1279 = vmatpush1.bf16.xpose.msra.mxu0 0
  %1280 = vmatprep.subr.bf16.mxu0 0
  %1281 = vmatpush1.bf16.xpose.msra.mxu0 0
  %1282 = vmatprep.subr.bf16.mxu0 0
  %1283 = vmatpush1.bf16.xpose.msra.mxu0 0
  %1284 = vmatprep.subr.bf16.mxu0 0
  %1285 = vmatpush1.bf16.xpose.msra.mxu0 0
  %1286 = vmatprep.subr.bf16.mxu0 0
  %1287 = vmatpush1.bf16.xpose.msra.mxu0 0
  %1288 = vmatprep.subr.bf16.mxu0 0
  %1289 = vmatpush1.bf16.xpose.msra.mxu0 0
  %1290 = vmatprep.subr.bf16.mxu0 0
  %1291 = vmatpush1.bf16.xpose.msra.mxu0 0
  %1292 = vmatprep.subr.bf16.mxu0 0
  %1293 = vmatpush1.bf16.xpose.msra.mxu0 0
  %1294 = vmatprep.subr.bf16.mxu0 0
  %1295 = vmatpush1.bf16.xpose.msra.mxu0 0
  %1296 = vmatprep.subr.bf16.mxu0 0
  %1297 = vmatpush1.bf16.xpose.msra.mxu0 0
  %1298 = vmatprep.subr.bf16.mxu0 0
  %1299 = vmatpush1.bf16.xpose.msra.mxu0 0
  %1300 = vmatprep.subr.bf16.mxu0 0
  %1301 = vmatpush1.bf16.xpose.msra.mxu0 0
  %1302 = vmatprep.subr.bf16.mxu0 0
  %1303 = vmatpush1.bf16.xpose.msra.mxu0 0
  %1304 = vmatprep.subr.bf16.mxu0 0
  %1305 = vmatpush1.bf16.xpose.msra.mxu0 0
  %1306 = vmatprep.subr.bf16.mxu0 0
  %1307 = vmatpush1.bf16.xpose.msra.mxu0 0
  %1308 = vmatprep.mubr.bf16.mxu0 0
  %1309 = vmatmul.mubr.bf16.gmra.mrb[0].mxu0 %v1271
  %v1310 = vpop.f32.mrb[0].mxu0
  %v1311 = vadd.f32 %v1265, %v1310
  %v1312 = vpop.f32.mrb[0].mxu0
  %v1313 = vpop.f32.mrb[0].mxu0
  %v1314 = vpop.f32.mrb[0].mxu0
  %1315 = vdwg.mxu0
  %v1316 = vsel %vm789, %v1311, -inf
  %1317 = vmax.xlane.f32.xlu0 %v1316
  %v1318 = vpop.xlane.xlu0 %1317
  %v1319 = vsub.f32 %v1311, %v1318
  %v1320 = vmul.f32 %v1319, 1.442695
  %v1321 = vpow.pop %v1320
  %v1322 = vsel %vm789, %v1321, 0.0
  %1323 = vadd.xlane.f32.xlu0 %v1322
  %v1324 = vpop.xlane.xlu0 %1323
  %v1325 = vrcp.pop %v1324
  %v1326 = vmul.f32 %v1321, %v1325
  %v1327 = vpack.c.bf16 %v1326, %v1326
  %1328 = vrot.lane.b32.xlu0 %v782, 40
  %v1329 = vpop.permute.xlu0 %1328
  %v1331 = vsel %vm789, %v1327, 0
  %v1334 = vsel %vm853, %v1329, 0
  %1336 = vmatprep.subr.bf16.mxu0 0
  %1337 = vmatpush1.bf16.msra.mxu0 %v1334
  %1338 = vmatprep.subr.bf16.mxu0 0
  %1339 = vmatpush1.bf16.msra.mxu0 0
  %1340 = vmatprep.subr.bf16.mxu0 0
  %1341 = vmatpush1.bf16.msra.mxu0 0
  %1342 = vmatprep.subr.bf16.mxu0 0
  %1343 = vmatpush1.bf16.msra.mxu0 0
  %1344 = vmatprep.subr.bf16.mxu0 0
  %1345 = vmatpush1.bf16.msra.mxu0 0
  %1346 = vmatprep.subr.bf16.mxu0 0
  %1347 = vmatpush1.bf16.msra.mxu0 0
  %1348 = vmatprep.subr.bf16.mxu0 0
  %1349 = vmatpush1.bf16.msra.mxu0 0
  %1350 = vmatprep.subr.bf16.mxu0 0
  %1351 = vmatpush1.bf16.msra.mxu0 0
  %1352 = vmatprep.subr.bf16.mxu0 0
  %1353 = vmatpush1.bf16.msra.mxu0 0
  %1354 = vmatprep.subr.bf16.mxu0 0
  %1355 = vmatpush1.bf16.msra.mxu0 0
  %1356 = vmatprep.subr.bf16.mxu0 0
  %1357 = vmatpush1.bf16.msra.mxu0 0
  %1358 = vmatprep.subr.bf16.mxu0 0
  %1359 = vmatpush1.bf16.msra.mxu0 0
  %1360 = vmatprep.subr.bf16.mxu0 0
  %1361 = vmatpush1.bf16.msra.mxu0 0
  %1362 = vmatprep.subr.bf16.mxu0 0
  %1363 = vmatpush1.bf16.msra.mxu0 0
  %1364 = vmatprep.subr.bf16.mxu0 0
  %1365 = vmatpush1.bf16.msra.mxu0 0
  %1366 = vmatprep.subr.bf16.mxu0 0
  %1367 = vmatpush1.bf16.msra.mxu0 0
  %1368 = vmatprep.mubr.bf16.mxu0 0
  %1369 = vmatmul.mubr.bf16.gmra.mrb[0].mxu0 %v1331
  %v1370 = vpop.f32.mrb[0].mxu0
  %v1371 = vadd.f32 0.0, %v1370
  %v1372 = vpop.f32.mrb[0].mxu0
  %v1373 = vpop.f32.mrb[0].mxu0
  %v1374 = vpop.f32.mrb[0].mxu0
  %1375 = vdwg.mxu0
  %v1376 = vpack.c.bf16 %v1371, %v1371
  %v1378 = vsel %vm789, %v1376, 0
  %v1381 = vsel %vm853, %v781, 0
  %1383 = vmatprep.subr.bf16.mxu0 0
  %1384 = vmatpush1.bf16.msra.mxu0 %v1381
  %1385 = vmatprep.subr.bf16.mxu0 0
  %1386 = vmatpush1.bf16.msra.mxu0 0
  %1387 = vmatprep.subr.bf16.mxu0 0
  %1388 = vmatpush1.bf16.msra.mxu0 0
  %1389 = vmatprep.subr.bf16.mxu0 0
  %1390 = vmatpush1.bf16.msra.mxu0 0
  %1391 = vmatprep.subr.bf16.mxu0 0
  %1392 = vmatpush1.bf16.msra.mxu0 0
  %1393 = vmatprep.subr.bf16.mxu0 0
  %1394 = vmatpush1.bf16.msra.mxu0 0
  %1395 = vmatprep.subr.bf16.mxu0 0
  %1396 = vmatpush1.bf16.msra.mxu0 0
  %1397 = vmatprep.subr.bf16.mxu0 0
  %1398 = vmatpush1.bf16.msra.mxu0 0
  %1399 = vmatprep.subr.bf16.mxu0 0
  %1400 = vmatpush1.bf16.msra.mxu0 0
  %1401 = vmatprep.subr.bf16.mxu0 0
  %1402 = vmatpush1.bf16.msra.mxu0 0
  %1403 = vmatprep.subr.bf16.mxu0 0
  %1404 = vmatpush1.bf16.msra.mxu0 0
  %1405 = vmatprep.subr.bf16.mxu0 0
  %1406 = vmatpush1.bf16.msra.mxu0 0
  %1407 = vmatprep.subr.bf16.mxu0 0
  %1408 = vmatpush1.bf16.msra.mxu0 0
  %1409 = vmatprep.subr.bf16.mxu0 0
  %1410 = vmatpush1.bf16.msra.mxu0 0
  %1411 = vmatprep.subr.bf16.mxu0 0
  %1412 = vmatpush1.bf16.msra.mxu0 0
  %1413 = vmatprep.subr.bf16.mxu0 0
  %1414 = vmatpush1.bf16.msra.mxu0 0
  %1415 = vmatprep.mubr.bf16.mxu0 0
  %1416 = vmatmul.mubr.bf16.gmra.mrb[0].mxu0 %v1378
  %v1417 = vpop.f32.mrb[0].mxu0
  %v1418 = vadd.f32 0.0, %v1417
  %v1419 = vpop.f32.mrb[0].mxu0
  %v1420 = vpop.f32.mrb[0].mxu0
  %v1421 = vpop.f32.mrb[0].mxu0
  %1422 = vdwg.mxu0
  %v1423 = vadd.f32 %v1263, %v1418
  %v1424 = vld [vmem:[%s11] sm:$0x1]
  %v1426 = vlaneseq
  %v1427 = vshrl.u32 %v1426, 7
  %v1428 = vsub.s32 0, %v1427
  %v1429 = vrot.slane %v1424, %v1428
  %v1431 = vadd.f32 %v1423, %v1429
  %v1432 = vadd.f32 %v694, %v1431
  %v1433 = vsel %vm733, %v1432, 0.0
  %1434 = vadd.xlane.f32.xlu0 %v1433
  %v1435 = vpop.xlane.xlu0 %1434
  %v1436 = vrcp.pop 32.0
  %v1437 = vmul.f32 %v1435, %v1436
  %v1438 = vsub.f32 %v1432, %v1437
  %v1439 = vmul.f32 %v1438, %v1438
  %v1440 = vsel %vm733, %v1439, 0.0
  %1441 = vadd.xlane.f32.xlu0 %v1440
  %v1442 = vpop.xlane.xlu0 %1441
  %v1443 = vmul.f32 %v1442, %v1436
  %v1444 = vadd.f32 %v1443, 1e-05
  %v1445 = vrsqrt.pop %v1444
  %v1446 = vmul.f32 %v1438, %v1445
  %v1447 = vld [vmem:[%s22] sm:$0x1]
  %v1449 = vlaneseq
  %v1450 = vshrl.u32 %v1449, 7
  %v1451 = vsub.s32 0, %v1450
  %v1452 = vrot.slane %v1447, %v1451
  %v1454 = vmul.f32 %v1446, %v1452
  %v1455 = vld [vmem:[%s23] sm:$0x1]
  %v1457 = vlaneseq
  %v1458 = vshrl.u32 %v1457, 7
  %v1459 = vsub.s32 0, %v1458
  %v1460 = vrot.slane %v1455, %v1459
  %v1462 = vadd.f32 %v1454, %v1460
  %v1463 = vld [vmem:[%s12] sm:$0xf]
  %v1464 = vld [vmem:[%s12 + $0x4] sm:$0xf]
  %v1465 = vld [vmem:[%s12 + $0x8] sm:$0xf]
  %v1466 = vld [vmem:[%s12 + $0xc] sm:$0xf]
  %v1467 = vpack.c.bf16 %v1462, %v1462
  %v1468 = vld [vmem:[%s13] sm:$0x1]
  %v1470 = vlaneseq
  %v1471 = vshrl.u32 %v1470, 7
  %v1472 = vsub.s32 0, %v1471
  %v1473 = vrot.slane %v1468, %v1472
  %v1479 = vunpack.c.l.b16 %v1463
  %v1480 = vunpack.c.l.b16 %v1464
  %v1481 = vunpack.c.l.b16 %v1465
  %v1482 = vunpack.c.l.b16 %v1466
  %v1483 = vpack.c.b16 %v1480, %v1479
  %v1484 = vpack.c.b16 %v1482, %v1481
  %v1488 = vsel %vm733, %v1467, 0
  %1490 = vmatprep.subr.bf16.mxu0 0
  %1491 = vmatpush1.bf16.msra.mxu0 %v1483
  %1492 = vmatprep.subr.bf16.mxu0 0
  %1493 = vmatpush1.bf16.msra.mxu0 %v1484
  %1494 = vmatprep.subr.bf16.mxu0 0
  %1495 = vmatpush1.bf16.msra.mxu0 0
  %1496 = vmatprep.subr.bf16.mxu0 0
  %1497 = vmatpush1.bf16.msra.mxu0 0
  %1498 = vmatprep.subr.bf16.mxu0 0
  %1499 = vmatpush1.bf16.msra.mxu0 0
  %1500 = vmatprep.subr.bf16.mxu0 0
  %1501 = vmatpush1.bf16.msra.mxu0 0
  %1502 = vmatprep.subr.bf16.mxu0 0
  %1503 = vmatpush1.bf16.msra.mxu0 0
  %1504 = vmatprep.subr.bf16.mxu0 0
  %1505 = vmatpush1.bf16.msra.mxu0 0
  %1506 = vmatprep.subr.bf16.mxu0 0
  %1507 = vmatpush1.bf16.msra.mxu0 0
  %1508 = vmatprep.subr.bf16.mxu0 0
  %1509 = vmatpush1.bf16.msra.mxu0 0
  %1510 = vmatprep.subr.bf16.mxu0 0
  %1511 = vmatpush1.bf16.msra.mxu0 0
  %1512 = vmatprep.subr.bf16.mxu0 0
  %1513 = vmatpush1.bf16.msra.mxu0 0
  %1514 = vmatprep.subr.bf16.mxu0 0
  %1515 = vmatpush1.bf16.msra.mxu0 0
  %1516 = vmatprep.subr.bf16.mxu0 0
  %1517 = vmatpush1.bf16.msra.mxu0 0
  %1518 = vmatprep.subr.bf16.mxu0 0
  %1519 = vmatpush1.bf16.msra.mxu0 0
  %1520 = vmatprep.subr.bf16.mxu0 0
  %1521 = vmatpush1.bf16.msra.mxu0 0
  %1522 = vmatprep.mubr.bf16.mxu0 0
  %1523 = vmatmul.mubr.bf16.gmra.mrb[0].mxu0 %v1488
  %v1524 = vpop.f32.mrb[0].mxu0
  %v1525 = vadd.f32 %v1473, %v1524
  %v1526 = vpop.f32.mrb[0].mxu0
  %v1527 = vpop.f32.mrb[0].mxu0
  %v1528 = vpop.f32.mrb[0].mxu0
  %1529 = vdwg.mxu0
  %v1530 = vmul.f32 %v1525, 0.35355338
  %v1531 = vld [vmem:[%s14] sm:$0xf]
  %v1532 = vld [vmem:[%s14 + $0x4] sm:$0xf]
  %v1533 = vld [vmem:[%s14 + $0x8] sm:$0xf]
  %v1534 = vld [vmem:[%s14 + $0xc] sm:$0xf]
  %v1535 = vpack.c.bf16 %v674, %v674
  %v1536 = vld [vmem:[%s15] sm:$0x1]
  %v1538 = vlaneseq
  %v1539 = vshrl.u32 %v1538, 7
  %v1540 = vsub.s32 0, %v1539
  %v1541 = vrot.slane %v1536, %v1540
  %v1547 = vunpack.c.l.b16 %v1531
  %v1548 = vunpack.c.l.b16 %v1532
  %v1549 = vunpack.c.l.b16 %v1533
  %v1550 = vunpack.c.l.b16 %v1534
  %v1551 = vpack.c.b16 %v1548, %v1547
  %v1552 = vpack.c.b16 %v1550, %v1549
  %v1556 = vsel %vm733, %v1535, 0
  %1558 = vmatprep.subr.bf16.mxu0 0
  %1559 = vmatpush1.bf16.msra.mxu0 %v1551
  %1560 = vmatprep.subr.bf16.mxu0 0
  %1561 = vmatpush1.bf16.msra.mxu0 %v1552
  %1562 = vmatprep.subr.bf16.mxu0 0
  %1563 = vmatpush1.bf16.msra.mxu0 0
  %1564 = vmatprep.subr.bf16.mxu0 0
  %1565 = vmatpush1.bf16.msra.mxu0 0
  %1566 = vmatprep.subr.bf16.mxu0 0
  %1567 = vmatpush1.bf16.msra.mxu0 0
  %1568 = vmatprep.subr.bf16.mxu0 0
  %1569 = vmatpush1.bf16.msra.mxu0 0
  %1570 = vmatprep.subr.bf16.mxu0 0
  %1571 = vmatpush1.bf16.msra.mxu0 0
  %1572 = vmatprep.subr.bf16.mxu0 0
  %1573 = vmatpush1.bf16.msra.mxu0 0
  %1574 = vmatprep.subr.bf16.mxu0 0
  %1575 = vmatpush1.bf16.msra.mxu0 0
  %1576 = vmatprep.subr.bf16.mxu0 0
  %1577 = vmatpush1.bf16.msra.mxu0 0
  %1578 = vmatprep.subr.bf16.mxu0 0
  %1579 = vmatpush1.bf16.msra.mxu0 0
  %1580 = vmatprep.subr.bf16.mxu0 0
  %1581 = vmatpush1.bf16.msra.mxu0 0
  %1582 = vmatprep.subr.bf16.mxu0 0
  %1583 = vmatpush1.bf16.msra.mxu0 0
  %1584 = vmatprep.subr.bf16.mxu0 0
  %1585 = vmatpush1.bf16.msra.mxu0 0
  %1586 = vmatprep.subr.bf16.mxu0 0
  %1587 = vmatpush1.bf16.msra.mxu0 0
  %1588 = vmatprep.subr.bf16.mxu0 0
  %1589 = vmatpush1.bf16.msra.mxu0 0
  %1590 = vmatprep.mubr.bf16.mxu0 0
  %1591 = vmatmul.mubr.bf16.gmra.mrb[0].mxu0 %v1556
  %v1592 = vpop.f32.mrb[0].mxu0
  %v1593 = vadd.f32 %v1541, %v1592
  %v1594 = vpop.f32.mrb[0].mxu0
  %v1595 = vpop.f32.mrb[0].mxu0
  %v1596 = vpop.f32.mrb[0].mxu0
  %1597 = vdwg.mxu0
  %v1598 = vld [vmem:[%s16] sm:$0xf]
  %v1599 = vld [vmem:[%s16 + $0x4] sm:$0xf]
  %v1600 = vld [vmem:[%s16 + $0x8] sm:$0xf]
  %v1601 = vld [vmem:[%s16 + $0xc] sm:$0xf]
  %v1602 = vpack.c.bf16 %v1593, %v1593
  %v1603 = vpack.c.bf16 %v1530, %v1530
  %v1605 = vsel %vm789, %v1603, 0
  %v1608 = vsel %vm789, %v1602, 0
  %1610 = vmatprep.subr.bf16.mxu0 0
  %1611 = vmatpush1.bf16.xpose.msra.mxu0 %v1608
  %1612 = vmatprep.subr.bf16.mxu0 0
  %1613 = vmatpush1.bf16.xpose.msra.mxu0 0
  %1614 = vmatprep.subr.bf16.mxu0 0
  %1615 = vmatpush1.bf16.xpose.msra.mxu0 0
  %1616 = vmatprep.subr.bf16.mxu0 0
  %1617 = vmatpush1.bf16.xpose.msra.mxu0 0
  %1618 = vmatprep.subr.bf16.mxu0 0
  %1619 = vmatpush1.bf16.xpose.msra.mxu0 0
  %1620 = vmatprep.subr.bf16.mxu0 0
  %1621 = vmatpush1.bf16.xpose.msra.mxu0 0
  %1622 = vmatprep.subr.bf16.mxu0 0
  %1623 = vmatpush1.bf16.xpose.msra.mxu0 0
  %1624 = vmatprep.subr.bf16.mxu0 0
  %1625 = vmatpush1.bf16.xpose.msra.mxu0 0
  %1626 = vmatprep.subr.bf16.mxu0 0
  %1627 = vmatpush1.bf16.xpose.msra.mxu0 0
  %1628 = vmatprep.subr.bf16.mxu0 0
  %1629 = vmatpush1.bf16.xpose.msra.mxu0 0
  %1630 = vmatprep.subr.bf16.mxu0 0
  %1631 = vmatpush1.bf16.xpose.msra.mxu0 0
  %1632 = vmatprep.subr.bf16.mxu0 0
  %1633 = vmatpush1.bf16.xpose.msra.mxu0 0
  %1634 = vmatprep.subr.bf16.mxu0 0
  %1635 = vmatpush1.bf16.xpose.msra.mxu0 0
  %1636 = vmatprep.subr.bf16.mxu0 0
  %1637 = vmatpush1.bf16.xpose.msra.mxu0 0
  %1638 = vmatprep.subr.bf16.mxu0 0
  %1639 = vmatpush1.bf16.xpose.msra.mxu0 0
  %1640 = vmatprep.subr.bf16.mxu0 0
  %1641 = vmatpush1.bf16.xpose.msra.mxu0 0
  %1642 = vmatprep.mubr.bf16.mxu0 0
  %1643 = vmatmul.mubr.bf16.gmra.mrb[0].mxu0 %v1605
  %v1644 = vpop.f32.mrb[0].mxu0
  %v1645 = vadd.f32 %v708, %v1644
  %v1646 = vpop.f32.mrb[0].mxu0
  %v1647 = vpop.f32.mrb[0].mxu0
  %v1648 = vpop.f32.mrb[0].mxu0
  %1649 = vdwg.mxu0
  %v1650 = vsel %vm789, %v1645, -inf
  %1651 = vmax.xlane.f32.xlu0 %v1650
  %v1652 = vpop.xlane.xlu0 %1651
  %v1653 = vsub.f32 %v1645, %v1652
  %v1654 = vmul.f32 %v1653, 1.442695
  %v1655 = vpow.pop %v1654
  %v1656 = vsel %vm789, %v1655, 0.0
  %1657 = vadd.xlane.f32.xlu0 %v1656
  %v1658 = vpop.xlane.xlu0 %1657
  %v1659 = vrcp.pop %v1658
  %v1660 = vmul.f32 %v1655, %v1659
  %v1661 = vpack.c.bf16 %v1660, %v1660
  %1663 = vrot.lane.b32.xlu0 %v1602, 96
  %v1664 = vpop.permute.xlu0 %1663
  %v1666 = vsel %vm789, %v1661, 0
  %v1669 = vsel %vm853, %v1664, 0
  %1671 = vmatprep.subr.bf16.mxu0 0
  %1672 = vmatpush1.bf16.msra.mxu0 %v1669
  %1673 = vmatprep.subr.bf16.mxu0 0
  %1674 = vmatpush1.bf16.msra.mxu0 0
  %1675 = vmatprep.subr.bf16.mxu0 0
  %1676 = vmatpush1.bf16.msra.mxu0 0
  %1677 = vmatprep.subr.bf16.mxu0 0
  %1678 = vmatpush1.bf16.msra.mxu0 0
  %1679 = vmatprep.subr.bf16.mxu0 0
  %1680 = vmatpush1.bf16.msra.mxu0 0
  %1681 = vmatprep.subr.bf16.mxu0 0
  %1682 = vmatpush1.bf16.msra.mxu0 0
  %1683 = vmatprep.subr.bf16.mxu0 0
  %1684 = vmatpush1.bf16.msra.mxu0 0
  %1685 = vmatprep.subr.bf16.mxu0 0
  %1686 = vmatpush1.bf16.msra.mxu0 0
  %1687 = vmatprep.subr.bf16.mxu0 0
  %1688 = vmatpush1.bf16.msra.mxu0 0
  %1689 = vmatprep.subr.bf16.mxu0 0
  %1690 = vmatpush1.bf16.msra.mxu0 0
  %1691 = vmatprep.subr.bf16.mxu0 0
  %1692 = vmatpush1.bf16.msra.mxu0 0
  %1693 = vmatprep.subr.bf16.mxu0 0
  %1694 = vmatpush1.bf16.msra.mxu0 0
  %1695 = vmatprep.subr.bf16.mxu0 0
  %1696 = vmatpush1.bf16.msra.mxu0 0
  %1697 = vmatprep.subr.bf16.mxu0 0
  %1698 = vmatpush1.bf16.msra.mxu0 0
  %1699 = vmatprep.subr.bf16.mxu0 0
  %1700 = vmatpush1.bf16.msra.mxu0 0
  %1701 = vmatprep.subr.bf16.mxu0 0
  %1702 = vmatpush1.bf16.msra.mxu0 0
  %1703 = vmatprep.mubr.bf16.mxu0 0
  %1704 = vmatmul.mubr.bf16.gmra.mrb[0].mxu0 %v1666
  %v1705 = vpop.f32.mrb[0].mxu0
  %v1706 = vadd.f32 0.0, %v1705
  %v1707 = vpop.f32.mrb[0].mxu0
  %v1708 = vpop.f32.mrb[0].mxu0
  %v1709 = vpop.f32.mrb[0].mxu0
  %1710 = vdwg.mxu0
  %v1711 = vpack.c.bf16 %v1706, %v1706
  %1713 = vrot.lane.b32.xlu0 %v1603, 120
  %v1714 = vpop.permute.xlu0 %1713
  %1715 = vrot.lane.b32.xlu0 %v1602, 120
  %v1716 = vpop.permute.xlu0 %1715
  %v1718 = vsel %vm789, %v1714, 0
  %v1721 = vsel %vm789, %v1716, 0
  %1723 = vmatprep.subr.bf16.mxu0 0
  %1724 = vmatpush1.bf16.xpose.msra.mxu0 %v1721
  %1725 = vmatprep.subr.bf16.mxu0 0
  %1726 = vmatpush1.bf16.xpose.msra.mxu0 0
  %1727 = vmatprep.subr.bf16.mxu0 0
  %1728 = vmatpush1.bf16.xpose.msra.mxu0 0
  %1729 = vmatprep.subr.bf16.mxu0 0
  %1730 = vmatpush1.bf16.xpose.msra.mxu0 0
  %1731 = vmatprep.subr.bf16.mxu0 0
  %1732 = vmatpush1.bf16.xpose.msra.mxu0 0
  %1733 = vmatprep.subr.bf16.mxu0 0
  %1734 = vmatpush1.bf16.xpose.msra.mxu0 0
  %1735 = vmatprep.subr.bf16.mxu0 0
  %1736 = vmatpush1.bf16.xpose.msra.mxu0 0
  %1737 = vmatprep.subr.bf16.mxu0 0
  %1738 = vmatpush1.bf16.xpose.msra.mxu0 0
  %1739 = vmatprep.subr.bf16.mxu0 0
  %1740 = vmatpush1.bf16.xpose.msra.mxu0 0
  %1741 = vmatprep.subr.bf16.mxu0 0
  %1742 = vmatpush1.bf16.xpose.msra.mxu0 0
  %1743 = vmatprep.subr.bf16.mxu0 0
  %1744 = vmatpush1.bf16.xpose.msra.mxu0 0
  %1745 = vmatprep.subr.bf16.mxu0 0
  %1746 = vmatpush1.bf16.xpose.msra.mxu0 0
  %1747 = vmatprep.subr.bf16.mxu0 0
  %1748 = vmatpush1.bf16.xpose.msra.mxu0 0
  %1749 = vmatprep.subr.bf16.mxu0 0
  %1750 = vmatpush1.bf16.xpose.msra.mxu0 0
  %1751 = vmatprep.subr.bf16.mxu0 0
  %1752 = vmatpush1.bf16.xpose.msra.mxu0 0
  %1753 = vmatprep.subr.bf16.mxu0 0
  %1754 = vmatpush1.bf16.xpose.msra.mxu0 0
  %1755 = vmatprep.mubr.bf16.mxu0 0
  %1756 = vmatmul.mubr.bf16.gmra.mrb[0].mxu0 %v1718
  %v1757 = vpop.f32.mrb[0].mxu0
  %v1758 = vadd.f32 %v708, %v1757
  %v1759 = vpop.f32.mrb[0].mxu0
  %v1760 = vpop.f32.mrb[0].mxu0
  %v1761 = vpop.f32.mrb[0].mxu0
  %1762 = vdwg.mxu0
  %v1763 = vsel %vm789, %v1758, -inf
  %1764 = vmax.xlane.f32.xlu0 %v1763
  %v1765 = vpop.xlane.xlu0 %1764
  %v1766 = vsub.f32 %v1758, %v1765
  %v1767 = vmul.f32 %v1766, 1.442695
  %v1768 = vpow.pop %v1767
  %v1769 = vsel %vm789, %v1768, 0.0
  %1770 = vadd.xlane.f32.xlu0 %v1769
  %v1771 = vpop.xlane.xlu0 %1770
  %v1772 = vrcp.pop %v1771
  %v1773 = vmul.f32 %v1768, %v1772
  %v1774 = vpack.c.bf16 %v1773, %v1773
  %1775 = vrot.lane.b32.xlu0 %v1602, 88
  %v1776 = vpop.permute.xlu0 %1775
  %v1778 = vsel %vm789, %v1774, 0
  %v1781 = vsel %vm853, %v1776, 0
  %1783 = vmatprep.subr.bf16.mxu0 0
  %1784 = vmatpush1.bf16.msra.mxu0 %v1781
  %1785 = vmatprep.subr.bf16.mxu0 0
  %1786 = vmatpush1.bf16.msra.mxu0 0
  %1787 = vmatprep.subr.bf16.mxu0 0
  %1788 = vmatpush1.bf16.msra.mxu0 0
  %1789 = vmatprep.subr.bf16.mxu0 0
  %1790 = vmatpush1.bf16.msra.mxu0 0
  %1791 = vmatprep.subr.bf16.mxu0 0
  %1792 = vmatpush1.bf16.msra.mxu0 0
  %1793 = vmatprep.subr.bf16.mxu0 0
  %1794 = vmatpush1.bf16.msra.mxu0 0
  %1795 = vmatprep.subr.bf16.mxu0 0
  %1796 = vmatpush1.bf16.msra.mxu0 0
  %1797 = vmatprep.subr.bf16.mxu0 0
  %1798 = vmatpush1.bf16.msra.mxu0 0
  %1799 = vmatprep.subr.bf16.mxu0 0
  %1800 = vmatpush1.bf16.msra.mxu0 0
  %1801 = vmatprep.subr.bf16.mxu0 0
  %1802 = vmatpush1.bf16.msra.mxu0 0
  %1803 = vmatprep.subr.bf16.mxu0 0
  %1804 = vmatpush1.bf16.msra.mxu0 0
  %1805 = vmatprep.subr.bf16.mxu0 0
  %1806 = vmatpush1.bf16.msra.mxu0 0
  %1807 = vmatprep.subr.bf16.mxu0 0
  %1808 = vmatpush1.bf16.msra.mxu0 0
  %1809 = vmatprep.subr.bf16.mxu0 0
  %1810 = vmatpush1.bf16.msra.mxu0 0
  %1811 = vmatprep.subr.bf16.mxu0 0
  %1812 = vmatpush1.bf16.msra.mxu0 0
  %1813 = vmatprep.subr.bf16.mxu0 0
  %1814 = vmatpush1.bf16.msra.mxu0 0
  %1815 = vmatprep.mubr.bf16.mxu0 0
  %1816 = vmatmul.mubr.bf16.gmra.mrb[0].mxu0 %v1778
  %v1817 = vpop.f32.mrb[0].mxu0
  %v1818 = vadd.f32 0.0, %v1817
  %v1819 = vpop.f32.mrb[0].mxu0
  %v1820 = vpop.f32.mrb[0].mxu0
  %v1821 = vpop.f32.mrb[0].mxu0
  %1822 = vdwg.mxu0
  %v1823 = vpack.c.bf16 %v1818, %v1818
  %v1825 = vsel %vm789, %v1823, 0
  %v1828 = vsel %vm853, %v1599, 0
  %1830 = vmatprep.subr.bf16.mxu0 0
  %1831 = vmatpush1.bf16.msra.mxu0 %v1828
  %1832 = vmatprep.subr.bf16.mxu0 0
  %1833 = vmatpush1.bf16.msra.mxu0 0
  %1834 = vmatprep.subr.bf16.mxu0 0
  %1835 = vmatpush1.bf16.msra.mxu0 0
  %1836 = vmatprep.subr.bf16.mxu0 0
  %1837 = vmatpush1.bf16.msra.mxu0 0
  %1838 = vmatprep.subr.bf16.mxu0 0
  %1839 = vmatpush1.bf16.msra.mxu0 0
  %1840 = vmatprep.subr.bf16.mxu0 0
  %1841 = vmatpush1.bf16.msra.mxu0 0
  %1842 = vmatprep.subr.bf16.mxu0 0
  %1843 = vmatpush1.bf16.msra.mxu0 0
  %1844 = vmatprep.subr.bf16.mxu0 0
  %1845 = vmatpush1.bf16.msra.mxu0 0
  %1846 = vmatprep.subr.bf16.mxu0 0
  %1847 = vmatpush1.bf16.msra.mxu0 0
  %1848 = vmatprep.subr.bf16.mxu0 0
  %1849 = vmatpush1.bf16.msra.mxu0 0
  %1850 = vmatprep.subr.bf16.mxu0 0
  %1851 = vmatpush1.bf16.msra.mxu0 0
  %1852 = vmatprep.subr.bf16.mxu0 0
  %1853 = vmatpush1.bf16.msra.mxu0 0
  %1854 = vmatprep.subr.bf16.mxu0 0
  %1855 = vmatpush1.bf16.msra.mxu0 0
  %1856 = vmatprep.subr.bf16.mxu0 0
  %1857 = vmatpush1.bf16.msra.mxu0 0
  %1858 = vmatprep.subr.bf16.mxu0 0
  %1859 = vmatpush1.bf16.msra.mxu0 0
  %1860 = vmatprep.subr.bf16.mxu0 0
  %1861 = vmatpush1.bf16.msra.mxu0 0
  %1862 = vmatprep.mubr.bf16.mxu0 0
  %1863 = vmatmul.mubr.bf16.gmra.mrb[0].mxu0 %v1825
  %v1864 = vpop.f32.mrb[0].mxu0
  %v1865 = vadd.f32 0.0, %v1864
  %v1866 = vpop.f32.mrb[0].mxu0
  %v1867 = vpop.f32.mrb[0].mxu0
  %v1868 = vpop.f32.mrb[0].mxu0
  %1869 = vdwg.mxu0
  %v1871 = vsel %vm789, %v1711, 0
  %v1874 = vsel %vm853, %v1598, 0
  %1876 = vmatprep.subr.bf16.mxu0 0
  %1877 = vmatpush1.bf16.msra.mxu0 %v1874
  %1878 = vmatprep.subr.bf16.mxu0 0
  %1879 = vmatpush1.bf16.msra.mxu0 0
  %1880 = vmatprep.subr.bf16.mxu0 0
  %1881 = vmatpush1.bf16.msra.mxu0 0
  %1882 = vmatprep.subr.bf16.mxu0 0
  %1883 = vmatpush1.bf16.msra.mxu0 0
  %1884 = vmatprep.subr.bf16.mxu0 0
  %1885 = vmatpush1.bf16.msra.mxu0 0
  %1886 = vmatprep.subr.bf16.mxu0 0
  %1887 = vmatpush1.bf16.msra.mxu0 0
  %1888 = vmatprep.subr.bf16.mxu0 0
  %1889 = vmatpush1.bf16.msra.mxu0 0
  %1890 = vmatprep.subr.bf16.mxu0 0
  %1891 = vmatpush1.bf16.msra.mxu0 0
  %1892 = vmatprep.subr.bf16.mxu0 0
  %1893 = vmatpush1.bf16.msra.mxu0 0
  %1894 = vmatprep.subr.bf16.mxu0 0
  %1895 = vmatpush1.bf16.msra.mxu0 0
  %1896 = vmatprep.subr.bf16.mxu0 0
  %1897 = vmatpush1.bf16.msra.mxu0 0
  %1898 = vmatprep.subr.bf16.mxu0 0
  %1899 = vmatpush1.bf16.msra.mxu0 0
  %1900 = vmatprep.subr.bf16.mxu0 0
  %1901 = vmatpush1.bf16.msra.mxu0 0
  %1902 = vmatprep.subr.bf16.mxu0 0
  %1903 = vmatpush1.bf16.msra.mxu0 0
  %1904 = vmatprep.subr.bf16.mxu0 0
  %1905 = vmatpush1.bf16.msra.mxu0 0
  %1906 = vmatprep.subr.bf16.mxu0 0
  %1907 = vmatpush1.bf16.msra.mxu0 0
  %1908 = vmatprep.mubr.bf16.mxu0 0
  %1909 = vmatmul.mubr.bf16.gmra.mrb[0].mxu0 %v1871
  %v1910 = vpop.f32.mrb[0].mxu0
  %v1911 = vadd.f32 %v1865, %v1910
  %v1912 = vpop.f32.mrb[0].mxu0
  %v1913 = vpop.f32.mrb[0].mxu0
  %v1914 = vpop.f32.mrb[0].mxu0
  %1915 = vdwg.mxu0
  %1916 = vrot.lane.b32.xlu0 %v1603, 112
  %v1917 = vpop.permute.xlu0 %1916
  %1918 = vrot.lane.b32.xlu0 %v1602, 112
  %v1919 = vpop.permute.xlu0 %1918
  %v1921 = vsel %vm789, %v1917, 0
  %v1924 = vsel %vm789, %v1919, 0
  %1926 = vmatprep.subr.bf16.mxu0 0
  %1927 = vmatpush1.bf16.xpose.msra.mxu0 %v1924
  %1928 = vmatprep.subr.bf16.mxu0 0
  %1929 = vmatpush1.bf16.xpose.msra.mxu0 0
  %1930 = vmatprep.subr.bf16.mxu0 0
  %1931 = vmatpush1.bf16.xpose.msra.mxu0 0
  %1932 = vmatprep.subr.bf16.mxu0 0
  %1933 = vmatpush1.bf16.xpose.msra.mxu0 0
  %1934 = vmatprep.subr.bf16.mxu0 0
  %1935 = vmatpush1.bf16.xpose.msra.mxu0 0
  %1936 = vmatprep.subr.bf16.mxu0 0
  %1937 = vmatpush1.bf16.xpose.msra.mxu0 0
  %1938 = vmatprep.subr.bf16.mxu0 0
  %1939 = vmatpush1.bf16.xpose.msra.mxu0 0
  %1940 = vmatprep.subr.bf16.mxu0 0
  %1941 = vmatpush1.bf16.xpose.msra.mxu0 0
  %1942 = vmatprep.subr.bf16.mxu0 0
  %1943 = vmatpush1.bf16.xpose.msra.mxu0 0
  %1944 = vmatprep.subr.bf16.mxu0 0
  %1945 = vmatpush1.bf16.xpose.msra.mxu0 0
  %1946 = vmatprep.subr.bf16.mxu0 0
  %1947 = vmatpush1.bf16.xpose.msra.mxu0 0
  %1948 = vmatprep.subr.bf16.mxu0 0
  %1949 = vmatpush1.bf16.xpose.msra.mxu0 0
  %1950 = vmatprep.subr.bf16.mxu0 0
  %1951 = vmatpush1.bf16.xpose.msra.mxu0 0
  %1952 = vmatprep.subr.bf16.mxu0 0
  %1953 = vmatpush1.bf16.xpose.msra.mxu0 0
  %1954 = vmatprep.subr.bf16.mxu0 0
  %1955 = vmatpush1.bf16.xpose.msra.mxu0 0
  %1956 = vmatprep.subr.bf16.mxu0 0
  %1957 = vmatpush1.bf16.xpose.msra.mxu0 0
  %1958 = vmatprep.mubr.bf16.mxu0 0
  %1959 = vmatmul.mubr.bf16.gmra.mrb[0].mxu0 %v1921
  %v1960 = vpop.f32.mrb[0].mxu0
  %v1961 = vadd.f32 %v708, %v1960
  %v1962 = vpop.f32.mrb[0].mxu0
  %v1963 = vpop.f32.mrb[0].mxu0
  %v1964 = vpop.f32.mrb[0].mxu0
  %1965 = vdwg.mxu0
  %v1966 = vsel %vm789, %v1961, -inf
  %1967 = vmax.xlane.f32.xlu0 %v1966
  %v1968 = vpop.xlane.xlu0 %1967
  %v1969 = vsub.f32 %v1961, %v1968
  %v1970 = vmul.f32 %v1969, 1.442695
  %v1971 = vpow.pop %v1970
  %v1972 = vsel %vm789, %v1971, 0.0
  %1973 = vadd.xlane.f32.xlu0 %v1972
  %v1974 = vpop.xlane.xlu0 %1973
  %v1975 = vrcp.pop %v1974
  %v1976 = vmul.f32 %v1971, %v1975
  %v1977 = vpack.c.bf16 %v1976, %v1976
  %1978 = vrot.lane.b32.xlu0 %v1602, 80
  %v1979 = vpop.permute.xlu0 %1978
  %v1981 = vsel %vm789, %v1977, 0
  %v1984 = vsel %vm853, %v1979, 0
  %1986 = vmatprep.subr.bf16.mxu0 0
  %1987 = vmatpush1.bf16.msra.mxu0 %v1984
  %1988 = vmatprep.subr.bf16.mxu0 0
  %1989 = vmatpush1.bf16.msra.mxu0 0
  %1990 = vmatprep.subr.bf16.mxu0 0
  %1991 = vmatpush1.bf16.msra.mxu0 0
  %1992 = vmatprep.subr.bf16.mxu0 0
  %1993 = vmatpush1.bf16.msra.mxu0 0
  %1994 = vmatprep.subr.bf16.mxu0 0
  %1995 = vmatpush1.bf16.msra.mxu0 0
  %1996 = vmatprep.subr.bf16.mxu0 0
  %1997 = vmatpush1.bf16.msra.mxu0 0
  %1998 = vmatprep.subr.bf16.mxu0 0
  %1999 = vmatpush1.bf16.msra.mxu0 0
  %2000 = vmatprep.subr.bf16.mxu0 0
  %2001 = vmatpush1.bf16.msra.mxu0 0
  %2002 = vmatprep.subr.bf16.mxu0 0
  %2003 = vmatpush1.bf16.msra.mxu0 0
  %2004 = vmatprep.subr.bf16.mxu0 0
  %2005 = vmatpush1.bf16.msra.mxu0 0
  %2006 = vmatprep.subr.bf16.mxu0 0
  %2007 = vmatpush1.bf16.msra.mxu0 0
  %2008 = vmatprep.subr.bf16.mxu0 0
  %2009 = vmatpush1.bf16.msra.mxu0 0
  %2010 = vmatprep.subr.bf16.mxu0 0
  %2011 = vmatpush1.bf16.msra.mxu0 0
  %2012 = vmatprep.subr.bf16.mxu0 0
  %2013 = vmatpush1.bf16.msra.mxu0 0
  %2014 = vmatprep.subr.bf16.mxu0 0
  %2015 = vmatpush1.bf16.msra.mxu0 0
  %2016 = vmatprep.subr.bf16.mxu0 0
  %2017 = vmatpush1.bf16.msra.mxu0 0
  %2018 = vmatprep.mubr.bf16.mxu0 0
  %2019 = vmatmul.mubr.bf16.gmra.mrb[0].mxu0 %v1981
  %v2020 = vpop.f32.mrb[0].mxu0
  %v2021 = vadd.f32 0.0, %v2020
  %v2022 = vpop.f32.mrb[0].mxu0
  %v2023 = vpop.f32.mrb[0].mxu0
  %v2024 = vpop.f32.mrb[0].mxu0
  %2025 = vdwg.mxu0
  %v2026 = vpack.c.bf16 %v2021, %v2021
  %v2028 = vsel %vm789, %v2026, 0
  %v2031 = vsel %vm853, %v1600, 0
  %2033 = vmatprep.subr.bf16.mxu0 0
  %2034 = vmatpush1.bf16.msra.mxu0 %v2031
  %2035 = vmatprep.subr.bf16.mxu0 0
  %2036 = vmatpush1.bf16.msra.mxu0 0
  %2037 = vmatprep.subr.bf16.mxu0 0
  %2038 = vmatpush1.bf16.msra.mxu0 0
  %2039 = vmatprep.subr.bf16.mxu0 0
  %2040 = vmatpush1.bf16.msra.mxu0 0
  %2041 = vmatprep.subr.bf16.mxu0 0
  %2042 = vmatpush1.bf16.msra.mxu0 0
  %2043 = vmatprep.subr.bf16.mxu0 0
  %2044 = vmatpush1.bf16.msra.mxu0 0
  %2045 = vmatprep.subr.bf16.mxu0 0
  %2046 = vmatpush1.bf16.msra.mxu0 0
  %2047 = vmatprep.subr.bf16.mxu0 0
  %2048 = vmatpush1.bf16.msra.mxu0 0
  %2049 = vmatprep.subr.bf16.mxu0 0
  %2050 = vmatpush1.bf16.msra.mxu0 0
  %2051 = vmatprep.subr.bf16.mxu0 0
  %2052 = vmatpush1.bf16.msra.mxu0 0
  %2053 = vmatprep.subr.bf16.mxu0 0
  %2054 = vmatpush1.bf16.msra.mxu0 0
  %2055 = vmatprep.subr.bf16.mxu0 0
  %2056 = vmatpush1.bf16.msra.mxu0 0
  %2057 = vmatprep.subr.bf16.mxu0 0
  %2058 = vmatpush1.bf16.msra.mxu0 0
  %2059 = vmatprep.subr.bf16.mxu0 0
  %2060 = vmatpush1.bf16.msra.mxu0 0
  %2061 = vmatprep.subr.bf16.mxu0 0
  %2062 = vmatpush1.bf16.msra.mxu0 0
  %2063 = vmatprep.subr.bf16.mxu0 0
  %2064 = vmatpush1.bf16.msra.mxu0 0
  %2065 = vmatprep.mubr.bf16.mxu0 0
  %2066 = vmatmul.mubr.bf16.gmra.mrb[0].mxu0 %v2028
  %v2067 = vpop.f32.mrb[0].mxu0
  %v2068 = vadd.f32 0.0, %v2067
  %v2069 = vpop.f32.mrb[0].mxu0
  %v2070 = vpop.f32.mrb[0].mxu0
  %v2071 = vpop.f32.mrb[0].mxu0
  %2072 = vdwg.mxu0
  %v2073 = vadd.f32 %v1911, %v2068
  %2074 = vrot.lane.b32.xlu0 %v1603, 104
  %v2075 = vpop.permute.xlu0 %2074
  %2076 = vrot.lane.b32.xlu0 %v1602, 104
  %v2077 = vpop.permute.xlu0 %2076
  %v2079 = vsel %vm789, %v2075, 0
  %v2082 = vsel %vm789, %v2077, 0
  %2084 = vmatprep.subr.bf16.mxu0 0
  %2085 = vmatpush1.bf16.xpose.msra.mxu0 %v2082
  %2086 = vmatprep.subr.bf16.mxu0 0
  %2087 = vmatpush1.bf16.xpose.msra.mxu0 0
  %2088 = vmatprep.subr.bf16.mxu0 0
  %2089 = vmatpush1.bf16.xpose.msra.mxu0 0
  %2090 = vmatprep.subr.bf16.mxu0 0
  %2091 = vmatpush1.bf16.xpose.msra.mxu0 0
  %2092 = vmatprep.subr.bf16.mxu0 0
  %2093 = vmatpush1.bf16.xpose.msra.mxu0 0
  %2094 = vmatprep.subr.bf16.mxu0 0
  %2095 = vmatpush1.bf16.xpose.msra.mxu0 0
  %2096 = vmatprep.subr.bf16.mxu0 0
  %2097 = vmatpush1.bf16.xpose.msra.mxu0 0
  %2098 = vmatprep.subr.bf16.mxu0 0
  %2099 = vmatpush1.bf16.xpose.msra.mxu0 0
  %2100 = vmatprep.subr.bf16.mxu0 0
  %2101 = vmatpush1.bf16.xpose.msra.mxu0 0
  %2102 = vmatprep.subr.bf16.mxu0 0
  %2103 = vmatpush1.bf16.xpose.msra.mxu0 0
  %2104 = vmatprep.subr.bf16.mxu0 0
  %2105 = vmatpush1.bf16.xpose.msra.mxu0 0
  %2106 = vmatprep.subr.bf16.mxu0 0
  %2107 = vmatpush1.bf16.xpose.msra.mxu0 0
  %2108 = vmatprep.subr.bf16.mxu0 0
  %2109 = vmatpush1.bf16.xpose.msra.mxu0 0
  %2110 = vmatprep.subr.bf16.mxu0 0
  %2111 = vmatpush1.bf16.xpose.msra.mxu0 0
  %2112 = vmatprep.subr.bf16.mxu0 0
  %2113 = vmatpush1.bf16.xpose.msra.mxu0 0
  %2114 = vmatprep.subr.bf16.mxu0 0
  %2115 = vmatpush1.bf16.xpose.msra.mxu0 0
  %2116 = vmatprep.mubr.bf16.mxu0 0
  %2117 = vmatmul.mubr.bf16.gmra.mrb[0].mxu0 %v2079
  %v2118 = vpop.f32.mrb[0].mxu0
  %v2119 = vadd.f32 %v708, %v2118
  %v2120 = vpop.f32.mrb[0].mxu0
  %v2121 = vpop.f32.mrb[0].mxu0
  %v2122 = vpop.f32.mrb[0].mxu0
  %2123 = vdwg.mxu0
  %v2124 = vsel %vm789, %v2119, -inf
  %2125 = vmax.xlane.f32.xlu0 %v2124
  %v2126 = vpop.xlane.xlu0 %2125
  %v2127 = vsub.f32 %v2119, %v2126
  %v2128 = vmul.f32 %v2127, 1.442695
  %v2129 = vpow.pop %v2128
  %v2130 = vsel %vm789, %v2129, 0.0
  %2131 = vadd.xlane.f32.xlu0 %v2130
  %v2132 = vpop.xlane.xlu0 %2131
  %v2133 = vrcp.pop %v2132
  %v2134 = vmul.f32 %v2129, %v2133
  %v2135 = vpack.c.bf16 %v2134, %v2134
  %2136 = vrot.lane.b32.xlu0 %v1602, 72
  %v2137 = vpop.permute.xlu0 %2136
  %v2139 = vsel %vm789, %v2135, 0
  %v2142 = vsel %vm853, %v2137, 0
  %2144 = vmatprep.subr.bf16.mxu0 0
  %2145 = vmatpush1.bf16.msra.mxu0 %v2142
  %2146 = vmatprep.subr.bf16.mxu0 0
  %2147 = vmatpush1.bf16.msra.mxu0 0
  %2148 = vmatprep.subr.bf16.mxu0 0
  %2149 = vmatpush1.bf16.msra.mxu0 0
  %2150 = vmatprep.subr.bf16.mxu0 0
  %2151 = vmatpush1.bf16.msra.mxu0 0
  %2152 = vmatprep.subr.bf16.mxu0 0
  %2153 = vmatpush1.bf16.msra.mxu0 0
  %2154 = vmatprep.subr.bf16.mxu0 0
  %2155 = vmatpush1.bf16.msra.mxu0 0
  %2156 = vmatprep.subr.bf16.mxu0 0
  %2157 = vmatpush1.bf16.msra.mxu0 0
  %2158 = vmatprep.subr.bf16.mxu0 0
  %2159 = vmatpush1.bf16.msra.mxu0 0
  %2160 = vmatprep.subr.bf16.mxu0 0
  %2161 = vmatpush1.bf16.msra.mxu0 0
  %2162 = vmatprep.subr.bf16.mxu0 0
  %2163 = vmatpush1.bf16.msra.mxu0 0
  %2164 = vmatprep.subr.bf16.mxu0 0
  %2165 = vmatpush1.bf16.msra.mxu0 0
  %2166 = vmatprep.subr.bf16.mxu0 0
  %2167 = vmatpush1.bf16.msra.mxu0 0
  %2168 = vmatprep.subr.bf16.mxu0 0
  %2169 = vmatpush1.bf16.msra.mxu0 0
  %2170 = vmatprep.subr.bf16.mxu0 0
  %2171 = vmatpush1.bf16.msra.mxu0 0
  %2172 = vmatprep.subr.bf16.mxu0 0
  %2173 = vmatpush1.bf16.msra.mxu0 0
  %2174 = vmatprep.subr.bf16.mxu0 0
  %2175 = vmatpush1.bf16.msra.mxu0 0
  %2176 = vmatprep.mubr.bf16.mxu0 0
  %2177 = vmatmul.mubr.bf16.gmra.mrb[0].mxu0 %v2139
  %v2178 = vpop.f32.mrb[0].mxu0
  %v2179 = vadd.f32 0.0, %v2178
  %v2180 = vpop.f32.mrb[0].mxu0
  %v2181 = vpop.f32.mrb[0].mxu0
  %v2182 = vpop.f32.mrb[0].mxu0
  %2183 = vdwg.mxu0
  %v2184 = vpack.c.bf16 %v2179, %v2179
  %v2186 = vsel %vm789, %v2184, 0
  %v2189 = vsel %vm853, %v1601, 0
  %2191 = vmatprep.subr.bf16.mxu0 0
  %2192 = vmatpush1.bf16.msra.mxu0 %v2189
  %2193 = vmatprep.subr.bf16.mxu0 0
  %2194 = vmatpush1.bf16.msra.mxu0 0
  %2195 = vmatprep.subr.bf16.mxu0 0
  %2196 = vmatpush1.bf16.msra.mxu0 0
  %2197 = vmatprep.subr.bf16.mxu0 0
  %2198 = vmatpush1.bf16.msra.mxu0 0
  %2199 = vmatprep.subr.bf16.mxu0 0
  %2200 = vmatpush1.bf16.msra.mxu0 0
  %2201 = vmatprep.subr.bf16.mxu0 0
  %2202 = vmatpush1.bf16.msra.mxu0 0
  %2203 = vmatprep.subr.bf16.mxu0 0
  %2204 = vmatpush1.bf16.msra.mxu0 0
  %2205 = vmatprep.subr.bf16.mxu0 0
  %2206 = vmatpush1.bf16.msra.mxu0 0
  %2207 = vmatprep.subr.bf16.mxu0 0
  %2208 = vmatpush1.bf16.msra.mxu0 0
  %2209 = vmatprep.subr.bf16.mxu0 0
  %2210 = vmatpush1.bf16.msra.mxu0 0
  %2211 = vmatprep.subr.bf16.mxu0 0
  %2212 = vmatpush1.bf16.msra.mxu0 0
  %2213 = vmatprep.subr.bf16.mxu0 0
  %2214 = vmatpush1.bf16.msra.mxu0 0
  %2215 = vmatprep.subr.bf16.mxu0 0
  %2216 = vmatpush1.bf16.msra.mxu0 0
  %2217 = vmatprep.subr.bf16.mxu0 0
  %2218 = vmatpush1.bf16.msra.mxu0 0
  %2219 = vmatprep.subr.bf16.mxu0 0
  %2220 = vmatpush1.bf16.msra.mxu0 0
  %2221 = vmatprep.subr.bf16.mxu0 0
  %2222 = vmatpush1.bf16.msra.mxu0 0
  %2223 = vmatprep.mubr.bf16.mxu0 0
  %2224 = vmatmul.mubr.bf16.gmra.mrb[0].mxu0 %v2186
  %v2225 = vpop.f32.mrb[0].mxu0
  %v2226 = vadd.f32 0.0, %v2225
  %v2227 = vpop.f32.mrb[0].mxu0
  %v2228 = vpop.f32.mrb[0].mxu0
  %v2229 = vpop.f32.mrb[0].mxu0
  %2230 = vdwg.mxu0
  %v2231 = vadd.f32 %v2073, %v2226
  %v2232 = vld [vmem:[%s17] sm:$0x1]
  %v2234 = vlaneseq
  %v2235 = vshrl.u32 %v2234, 7
  %v2236 = vsub.s32 0, %v2235
  %v2237 = vrot.slane %v2232, %v2236
  %v2239 = vadd.f32 %v2231, %v2237
  %v2240 = vadd.f32 %v1462, %v2239
  %v2241 = vsel %vm733, %v2240, 0.0
  %2242 = vadd.xlane.f32.xlu0 %v2241
  %v2243 = vpop.xlane.xlu0 %2242
  %v2244 = vmul.f32 %v2243, %v1436
  %v2245 = vsub.f32 %v2240, %v2244
  %v2246 = vmul.f32 %v2245, %v2245
  %v2247 = vsel %vm733, %v2246, 0.0
  %2248 = vadd.xlane.f32.xlu0 %v2247
  %v2249 = vpop.xlane.xlu0 %2248
  %v2250 = vmul.f32 %v2249, %v1436
  %v2251 = vadd.f32 %v2250, 1e-05
  %v2252 = vrsqrt.pop %v2251
  %v2253 = vmul.f32 %v2245, %v2252
  %v2254 = vld [vmem:[%s24] sm:$0x1]
  %v2256 = vlaneseq
  %v2257 = vshrl.u32 %v2256, 7
  %v2258 = vsub.s32 0, %v2257
  %v2259 = vrot.slane %v2254, %v2258
  %v2261 = vmul.f32 %v2253, %v2259
  %v2262 = vld [vmem:[%s25] sm:$0x1]
  %v2264 = vlaneseq
  %v2265 = vshrl.u32 %v2264, 7
  %v2266 = vsub.s32 0, %v2265
  %v2267 = vrot.slane %v2262, %v2266
  %v2269 = vadd.f32 %v2261, %v2267
  %v2270 = vld [vmem:[%s18] sm:$0xf]
  %v2271 = vld [vmem:[%s18 + $0x4] sm:$0xf]
  %v2272 = vld [vmem:[%s18 + $0x8] sm:$0xf]
  %v2273 = vld [vmem:[%s18 + $0xc] sm:$0xf]
  %v2274 = vpack.c.bf16 %v2269, %v2269
  %v2275 = vld [vmem:[%s19] sm:$0x1]
  %v2277 = vlaneseq
  %v2278 = vshrl.u32 %v2277, 7
  %v2279 = vsub.s32 0, %v2278
  %v2280 = vrot.slane %v2275, %v2279
  %v2286 = vunpack.c.l.b16 %v2270
  %v2287 = vunpack.c.l.b16 %v2271
  %v2288 = vunpack.c.l.b16 %v2272
  %v2289 = vunpack.c.l.b16 %v2273
  %v2290 = vpack.c.b16 %v2287, %v2286
  %v2291 = vpack.c.b16 %v2289, %v2288
  %v2295 = vsel %vm733, %v2274, 0
  %2297 = vmatprep.subr.bf16.mxu0 0
  %2298 = vmatpush1.bf16.msra.mxu0 %v2290
  %2299 = vmatprep.subr.bf16.mxu0 0
  %2300 = vmatpush1.bf16.msra.mxu0 %v2291
  %2301 = vmatprep.subr.bf16.mxu0 0
  %2302 = vmatpush1.bf16.msra.mxu0 0
  %2303 = vmatprep.subr.bf16.mxu0 0
  %2304 = vmatpush1.bf16.msra.mxu0 0
  %2305 = vmatprep.subr.bf16.mxu0 0
  %2306 = vmatpush1.bf16.msra.mxu0 0
  %2307 = vmatprep.subr.bf16.mxu0 0
  %2308 = vmatpush1.bf16.msra.mxu0 0
  %2309 = vmatprep.subr.bf16.mxu0 0
  %2310 = vmatpush1.bf16.msra.mxu0 0
  %2311 = vmatprep.subr.bf16.mxu0 0
  %2312 = vmatpush1.bf16.msra.mxu0 0
  %2313 = vmatprep.subr.bf16.mxu0 0
  %2314 = vmatpush1.bf16.msra.mxu0 0
  %2315 = vmatprep.subr.bf16.mxu0 0
  %2316 = vmatpush1.bf16.msra.mxu0 0
  %2317 = vmatprep.subr.bf16.mxu0 0
  %2318 = vmatpush1.bf16.msra.mxu0 0
  %2319 = vmatprep.subr.bf16.mxu0 0
  %2320 = vmatpush1.bf16.msra.mxu0 0
  %2321 = vmatprep.subr.bf16.mxu0 0
  %2322 = vmatpush1.bf16.msra.mxu0 0
  %2323 = vmatprep.subr.bf16.mxu0 0
  %2324 = vmatpush1.bf16.msra.mxu0 0
  %2325 = vmatprep.subr.bf16.mxu0 0
  %2326 = vmatpush1.bf16.msra.mxu0 0
  %2327 = vmatprep.subr.bf16.mxu0 0
  %2328 = vmatpush1.bf16.msra.mxu0 0
  %2329 = vmatprep.mubr.bf16.mxu0 0
  %2330 = vmatmul.mubr.bf16.gmra.mrb[0].mxu0 %v2295
  %v2331 = vpop.f32.mrb[0].mxu0
  %v2332 = vadd.f32 %v2280, %v2331
  %v2333 = vpop.f32.mrb[0].mxu0
  %v2334 = vpop.f32.mrb[0].mxu0
  %v2335 = vpop.f32.mrb[0].mxu0
  %2336 = vdwg.mxu0
  %v2337 = vmax.f32 %v2332, 0.0
  %v2338 = vld [vmem:[%s20] sm:$0xf]
  %v2339 = vld [vmem:[%s20 + $0x4] sm:$0xf]
  %v2340 = vld [vmem:[%s20 + $0x8] sm:$0xf]
  %v2341 = vld [vmem:[%s20 + $0xc] sm:$0xf]
  %v2342 = vld [vmem:[%s20 + $0x10] sm:$0xf]
  %v2343 = vld [vmem:[%s20 + $0x14] sm:$0xf]
  %v2344 = vld [vmem:[%s20 + $0x18] sm:$0xf]
  %v2345 = vld [vmem:[%s20 + $0x1c] sm:$0xf]
  %v2346 = vpack.c.bf16 %v2337, %v2337
  %v2347 = vld [vmem:[%s21] sm:$0x1]
  %v2349 = vlaneseq
  %v2350 = vshrl.u32 %v2349, 7
  %v2351 = vsub.s32 0, %v2350
  %v2352 = vrot.slane %v2347, %v2351
  %v2362 = vunpack.c.l.b16 %v2338
  %v2363 = vunpack.c.l.b16 %v2339
  %v2364 = vunpack.c.l.b16 %v2340
  %v2365 = vunpack.c.l.b16 %v2341
  %v2366 = vunpack.c.l.b16 %v2342
  %v2367 = vunpack.c.l.b16 %v2343
  %v2368 = vunpack.c.l.b16 %v2344
  %v2369 = vunpack.c.l.b16 %v2345
  %v2370 = vpack.c.b16 %v2363, %v2362
  %v2371 = vpack.c.b16 %v2365, %v2364
  %v2372 = vpack.c.b16 %v2367, %v2366
  %v2373 = vpack.c.b16 %v2369, %v2368
  %vm2378 = vcmask 523264
  %v2380 = vsel %vm2378, %v2346, 0
  %2382 = vmatprep.subr.bf16.mxu0 0
  %2383 = vmatpush1.bf16.msra.mxu0 %v2370
  %2384 = vmatprep.subr.bf16.mxu0 0
  %2385 = vmatpush1.bf16.msra.mxu0 %v2371
  %2386 = vmatprep.subr.bf16.mxu0 0
  %2387 = vmatpush1.bf16.msra.mxu0 %v2372
  %2388 = vmatprep.subr.bf16.mxu0 0
  %2389 = vmatpush1.bf16.msra.mxu0 %v2373
  %2390 = vmatprep.subr.bf16.mxu0 0
  %2391 = vmatpush1.bf16.msra.mxu0 0
  %2392 = vmatprep.subr.bf16.mxu0 0
  %2393 = vmatpush1.bf16.msra.mxu0 0
  %2394 = vmatprep.subr.bf16.mxu0 0
  %2395 = vmatpush1.bf16.msra.mxu0 0
  %2396 = vmatprep.subr.bf16.mxu0 0
  %2397 = vmatpush1.bf16.msra.mxu0 0
  %2398 = vmatprep.subr.bf16.mxu0 0
  %2399 = vmatpush1.bf16.msra.mxu0 0
  %2400 = vmatprep.subr.bf16.mxu0 0
  %2401 = vmatpush1.bf16.msra.mxu0 0
  %2402 = vmatprep.subr.bf16.mxu0 0
  %2403 = vmatpush1.bf16.msra.mxu0 0
  %2404 = vmatprep.subr.bf16.mxu0 0
  %2405 = vmatpush1.bf16.msra.mxu0 0
  %2406 = vmatprep.subr.bf16.mxu0 0
  %2407 = vmatpush1.bf16.msra.mxu0 0
  %2408 = vmatprep.subr.bf16.mxu0 0
  %2409 = vmatpush1.bf16.msra.mxu0 0
  %2410 = vmatprep.subr.bf16.mxu0 0
  %2411 = vmatpush1.bf16.msra.mxu0 0
  %2412 = vmatprep.subr.bf16.mxu0 0
  %2413 = vmatpush1.bf16.msra.mxu0 0
  %2414 = vmatprep.mubr.bf16.mxu0 0
  %2415 = vmatmul.mubr.bf16.gmra.mrb[0].mxu0 %v2380
  %v2416 = vpop.f32.mrb[0].mxu0
  %v2417 = vadd.f32 %v2352, %v2416
  %v2418 = vpop.f32.mrb[0].mxu0
  %v2419 = vpop.f32.mrb[0].mxu0
  %v2420 = vpop.f32.mrb[0].mxu0
  %2421 = vdwg.mxu0
  %v2422 = vadd.f32 %v2269, %v2417
  %v2423 = vsel %vm733, %v2422, 0.0
  %2424 = vadd.xlane.f32.xlu0 %v2423
  %v2425 = vpop.xlane.xlu0 %2424
  %v2426 = vmul.f32 %v2425, %v1436
  %v2427 = vsub.f32 %v2422, %v2426
  %v2428 = vmul.f32 %v2427, %v2427
  %v2429 = vsel %vm733, %v2428, 0.0
  %2430 = vadd.xlane.f32.xlu0 %v2429
  %v2431 = vpop.xlane.xlu0 %2430
  %v2432 = vmul.f32 %v2431, %v1436
  %v2433 = vadd.f32 %v2432, 1e-05
  %v2434 = vrsqrt.pop %v2433
  %v2435 = vmul.f32 %v2427, %v2434
  %v2436 = vld [vmem:[%s26] sm:$0x1]
  %v2438 = vlaneseq
  %v2439 = vshrl.u32 %v2438, 7
  %v2440 = vsub.s32 0, %v2439
  %v2441 = vrot.slane %v2436, %v2440
  %v2443 = vmul.f32 %v2435, %v2441
  %v2444 = vld [vmem:[%s27] sm:$0x1]
  %v2446 = vlaneseq
  %v2447 = vshrl.u32 %v2446, 7
  %v2448 = vsub.s32 0, %v2447
  %v2449 = vrot.slane %v2444, %v2448
  %v2451 = vadd.f32 %v2443, %v2449
  %v2452 = vpack.c.bf16 %v2451, %v2451
  %vm2453 = vcmask 257024
  %2454 = vst.msk [vmem:[%s28] sm:$0xf] %vm2453, %v2452
  // Predicated region
  $region114: #{_forward_impl.4} parent=0 // pred_check
    _
  $region115: #{_forward_impl.4} parent=0 // pred_check_branch
    %2456 = sbr.rel (0) target = $region117
  $region116: #{_forward_impl.4} parent=0 // pred_region
    _
  $region117: #{_forward_impl.4} parent=0 // pred_fallthru
    _
  // Predicated region
  $region118: #{_forward_impl.4} parent=0 // pred_check
    _
  $region119: #{_forward_impl.4} parent=0 // pred_check_branch
    %2458 = sbr.rel (0) target = $region121
  $region120: #{_forward_impl.4} parent=0 // pred_region
    _
  $region121: #{_forward_impl.4} parent=0 // pred_fallthru
    _

</llo_original>
